<compile_context>
chip_gen: v7x
topology: tpu7x:2x2x1
jax: 0.10.0
libtpu: 0.0.40
codegen_flags: <defaults>
</compile_context>

<pallas_src>
import jax
import jax.numpy as jnp
from jax.experimental import pallas as pl
from jax.experimental.pallas import tpu as pltpu

# ----------------------------------------------------------------------------
# Fixed demo geometry
# ----------------------------------------------------------------------------
_N = 2                     # batch
_CIN = 2                   # input channels
_H = _W = 10               # input spatial
_STRIDE = 104              # per-image row stride (>= H*W, multiple of 8 -> aligned fc slabs)
_R0 = 224                  # padded input rows (>= N*_STRIDE and >= _R[0] + 22)
_R = (200, 176, 152, 128)  # row counts carried through conv layers 1..4

# row-space shifts for a 3x3 valid conv and for the 2x2 "fc1 window"
_CONV_TAPS = tuple(dy * _W + dx for dy in range(3) for dx in range(3))   # 0,1,2,10,...,22
_FC_TAPS = tuple(y * _W + x for y in range(2) for x in range(2))         # 0,1,10,11

_BF16_KEYS = ("conv2_w", "fc1_w", "fc2_w")   # weights the kernel stores in bf16


# ----------------------------------------------------------------------------
# The fused kernel
# ----------------------------------------------------------------------------
def _lenet_kernel(x_ref, w1c_ref, b1_ref, w2c_ref, b2_ref, b1f_ref, b2f_ref,
                  w1f_hbm, w2f_hbm,                      # fc weights, still in HBM
                  o_ref,                                  # (16, 128) output tile
                  acta_ref, actb_ref, slab_ref,           # activation ping-pong + im2col slab
                  w1f_ref, w2f_ref, dma_sem):             # fc-weight landing buffers + sems
    f32 = jnp.float32

    # Kick off the fc-weight DMAs so they overlap the four conv layers.
    fc1_cp = pltpu.make_async_copy(w1f_hbm, w1f_ref, dma_sem.at[0])
    fc2_cp = pltpu.make_async_copy(w2f_hbm, w2f_ref, dma_sem.at[1])
    fc1_cp.start()
    fc2_cp.start()

    # conv1 (+relu): single K=18 matmul over the wrapper-built im2col slab.
    a1 = jnp.dot(x_ref[...], w1c_ref[...], preferred_element_type=f32) + b1_ref[...]
    acta_ref[...] = jnp.maximum(a1, 0.0)                       # (200, 64)

    # conv2 weights: loaded/up-cast once, reused three times (weight tying).
    w2 = w2c_ref[...].astype(f32)                              # (576, 64)
    b2 = b2_ref[...]

    def conv2_relu(src_ref, dst_ref, rows):
        # One copy pass builds the (rows, 9*64) im2col slab, then a single
        # K=576 MXU matmul replaces 9 shallow K=64 pushes + 8 VPU adds.
        for t, s in enumerate(_CONV_TAPS):
            slab_ref[0:rows, t * 64:(t + 1) * 64] = src_ref[s:s + rows, :]
        acc = jnp.dot(slab_ref[0:rows, :], w2, preferred_element_type=f32)
        dst_ref[0:rows, :] = jnp.maximum(acc + b2, 0.0)

    conv2_relu(acta_ref, actb_ref, _R[1])    # layer 2: 176 rows
    conv2_relu(actb_ref, acta_ref, _R[2])    # layer 3: 152 rows
    conv2_relu(acta_ref, actb_ref, _R[3])    # layer 4: 128 rows

    # fc weights must be resident from here on.
    fc1_cp.wait()
    fc2_cp.wait()

    # fc1 (+relu) restricted to the rows that hold real images.  With a per-image
    # stride of 104, image 0's 2x2 window rows are {0,1,10,11} and image 1's are
    # {104,105,114,115}; each tap window below puts image 0 at row 0 and image 1
    # at row 8, so only a 16-row tile ever hits the MXU (M: 112 -> 16).
    a4 = actb_ref
    wins = []
    for s in _FC_TAPS:
        wins.append(jnp.concatenate([a4[s:s + 8, :], a4[_STRIDE + s:_STRIDE + s + 8, :]],
                                    axis=0))                   # (16, 64)
    zfc = jnp.concatenate(wins, axis=1)                        # (16, 256)  K-fused fc1 input
    h = jnp.dot(zfc, w1f_ref[...].astype(f32), preferred_element_type=f32) + b1f_ref[...]
    h = jnp.maximum(h, 0.0)                                    # (16, 128); rows 0 & 8 valid

    # fc2 (+tanh) on the lane-dense tile; single dense (16, 128) store.
    out = jnp.dot(h, w2f_ref[...].astype(f32), preferred_element_type=f32) + b2f_ref[...]
    o_ref[...] = jnp.tanh(out)


def _lenet_pallas_call(x_im2col, p):
    def full2(shape):
        return pl.BlockSpec(shape, lambda i: (0, 0))

    return pl.pallas_call(
        _lenet_kernel,
        out_shape=jax.ShapeDtypeStruct((16, 128), jnp.float32),
        grid=(1,),
        in_specs=[
            full2((_R[0], 18)),                   # conv1 im2col input (f32)
            full2((18, 64)),                      # conv1 weight (f32, tiny)
            full2((1, 64)),                       # conv1 bias
            full2((576, 64)),                     # conv2 weight (bf16, reused 3x)
            full2((1, 64)),                       # conv2 bias
            full2((1, 128)),                      # fc1 bias
            full2((1, 128)),                      # fc2 bias
            pl.BlockSpec(memory_space=pl.ANY),    # fc1 weight (bf16) stays in HBM
            pl.BlockSpec(memory_space=pl.ANY),    # fc2 weight (bf16) stays in HBM
        ],
        out_specs=full2((16, 128)),
        scratch_shapes=[
            pltpu.VMEM((_R[0], 64), jnp.float32),    # activation ping (200, 64)
            pltpu.VMEM((_R[1], 64), jnp.float32),    # activation pong (176, 64)
            pltpu.VMEM((_R[1], 576), jnp.float32),   # im2col slab, reused by layers 2-4
            pltpu.VMEM((256, 128), jnp.bfloat16),    # fc1 weight landing buffer
            pltpu.VMEM((128, 128), jnp.bfloat16),    # fc2 weight landing buffer
            pltpu.SemaphoreType.DMA((2,)),
        ],
        compiler_params=pltpu.CompilerParams(
            dimension_semantics=("arbitrary",)),
        cost_estimate=pl.CostEstimate(
            flops=36_000_000, transcendentals=2048, bytes_accessed=201_000),
    )(x_im2col, p["w1c"], p["b1"], p["w2c"], p["b2"],
      p["b1f"], p["b2f"], p["w1f"], p["w2f"])


# ----------------------------------------------------------------------------
# One-time parameter re-layout (outside the hot path)
# ----------------------------------------------------------------------------
def prepare_params(params):
    f32, bf16 = jnp.float32, jnp.bfloat16

    # conv1: torch (64, 2, 3, 3) (O,I,kh,kw) -> K-fused (9*2=18, 64), K idx = tap*2 + cin
    w1 = jnp.transpose(params["conv1_w"].astype(f32), (2, 3, 1, 0)).reshape(18, 64)
    b1 = params["conv1_b"].astype(f32).reshape(1, 64)

    # conv2: torch (64, 64, 3, 3) -> K-fused (9*64=576, 64), K idx = tap*64 + cin
    w2 = jnp.transpose(params["conv2_w"].astype(f32), (2, 3, 1, 0)).reshape(576, 64)
    b2 = params["conv2_b"].astype(f32).reshape(1, 64)

    # fc1: torch (100, 256) with input idx = c*4 + y*2 + x -> (256, 128), K idx = tap*64 + c
    wf1 = params["fc1_w"].astype(f32).reshape(100, 64, 2, 2)
    wf1 = jnp.transpose(wf1, (2, 3, 1, 0)).reshape(256, 100)
    wf1 = jnp.pad(wf1, ((0, 0), (0, 28)))
    bf1 = jnp.pad(params["fc1_b"].astype(f32), (0, 28)).reshape(1, 128)

    # fc2: torch (1, 100) -> (128, 128), only column 0 populated
    wf2 = jnp.zeros((128, 128), f32).at[:100, 0].set(params["fc2_w"][0].astype(f32))
    bf2 = jnp.zeros((1, 128), f32).at[0, 0].set(params["fc2_b"][0].astype(f32))

    return {"w1c": w1, "b1": b1,
            "w2c": w2.astype(bf16), "b2": b2,
            "w1f": wf1.astype(bf16), "b1f": bf1,
            "w2f": wf2.astype(bf16), "b2f": bf2}


def lenet_forward(prepared, x_nchw):
    n, c, h, w = x_nchw.shape
    assert (n, c, h, w) == (_N, _CIN, _H, _W)
    # NCHW -> flattened rows at per-image stride 104: row = n*104 + y*W + x.
    rows = jnp.transpose(x_nchw, (0, 2, 3, 1)).reshape(n, h * w, c).astype(jnp.float32)
    rows = jnp.pad(rows, ((0, 0), (0, _STRIDE - h * w), (0, 0))).reshape(n * _STRIDE, c)
    rows = jnp.pad(rows, ((0, _R0 - n * _STRIDE), (0, 0)))               # (224, 2)
    # conv1 im2col built once outside the kernel: (200 rows, 9 taps x 2 channels).
    x_im2col = jnp.concatenate([rows[s:s + _R[0], :] for s in _CONV_TAPS], axis=1)
    out16 = _lenet_pallas_call(x_im2col, prepared)
    # image 0 -> output row 0; image 1 -> output row 8; logits live in lane 0.
    return jnp.concatenate([out16[0:1, 0:1], out16[8:9, 0:1]], axis=0)    # (N, 1)


# ----------------------------------------------------------------------------
# Parameters (torch layout, deterministic) and pure-JAX references
# ----------------------------------------------------------------------------
def init_params(key):
    ks = jax.random.split(key, 8)
    s = 0.1
    return {
        "conv1_w": s * jax.random.normal(ks[0], (64, 2, 3, 3), jnp.float32),
        "conv1_b": s * jax.random.normal(ks[1], (64,), jnp.float32),
        "conv2_w": s * jax.random.normal(ks[2], (64, 64, 3, 3), jnp.float32),
        "conv2_b": s * jax.random.normal(ks[3], (64,), jnp.float32),
        "fc1_w":   s * jax.random.normal(ks[4], (100, 64 * 2 * 2), jnp.float32),
        "fc1_b":   s * jax.random.normal(ks[5], (100,), jnp.float32),
        "fc2_w":   s * jax.random.normal(ks[6], (1, 100), jnp.float32),
        "fc2_b":   s * jax.random.normal(ks[7], (1,), jnp.float32),
    }


def quantize_like_kernel(params):
    """Round the large weight matrices to bf16, exactly as the kernel stores them."""
    q = dict(params)
    for k in _BF16_KEYS:
        q[k] = params[k].astype(jnp.bfloat16).astype(jnp.float32)
    return q


def _conv2d_relu_ref(x, w, b):
    out = jax.lax.conv_general_dilated(
        x, w, window_strides=(1, 1), padding="VALID",
        dimension_numbers=("NCHW", "OIHW", "NCHW"))
    return jnp.maximum(out + b[None, :, None, None], 0.0)


def lenet_reference(params, x):
    x = _conv2d_relu_ref(x, params["conv1_w"], params["conv1_b"])
    x = _conv2d_relu_ref(x, params["conv2_w"], params["conv2_b"])
    x = _conv2d_relu_ref(x, params["conv2_w"], params["conv2_b"])
    x = _conv2d_relu_ref(x, params["conv2_w"], params["conv2_b"])
    x = x.reshape(x.shape[0], -1)                                  # NCHW flatten
    x = jnp.maximum(x @ params["fc1_w"].T + params["fc1_b"], 0.0)
    return jnp.tanh(x @ params["fc2_w"].T + params["fc2_b"])


if __name__ == "__main__":
    key = jax.random.PRNGKey(0)
    k_param, k_x = jax.random.split(key)
    params = init_params(k_param)
    prepared = prepare_params(params)

    x = jax.random.normal(k_x, (_N, _CIN, _H, _W), jnp.float32)

    fwd = jax.jit(lenet_forward)
    out = jax.block_until_ready(fwd(prepared, x))
    assert out.shape == (_N, 1), out.shape

    # Primary check: reference evaluated with the same bf16-rounded weights the
    # kernel consumes (activations / accumulation are f32 in both).
    ref_q = jax.block_until_ready(lenet_reference(quantize_like_kernel(params), x))
    err_q = float(jnp.max(jnp.abs(out - ref_q)))
    assert err_q < 5e-3, f"max abs err vs bf16-weight reference: {err_q}"

    # Sanity check vs the full-f32 reference (difference = bf16 weight rounding only).
    ref = jax.block_until_ready(lenet_reference(params, x))
    err = float(jnp.max(jnp.abs(out - ref)))
    assert err < 5e-2, f"max abs err vs f32 reference: {err}"

    print("KERNEL_OK")
</pallas_src>

<mosaic_0001>
module attributes {stable_mosaic.version = 11 : i64} {
  func.func @_lenet_kernel(%arg0: i32, %arg1: memref<200x18xf32, #tpu.memory_space<vmem>>, %arg2: memref<18x64xf32, #tpu.memory_space<vmem>>, %arg3: memref<1x64xf32, #tpu.memory_space<vmem>>, %arg4: memref<576x64xbf16, #tpu.memory_space<vmem>>, %arg5: memref<1x64xf32, #tpu.memory_space<vmem>>, %arg6: memref<1x128xf32, #tpu.memory_space<vmem>>, %arg7: memref<1x128xf32, #tpu.memory_space<vmem>>, %arg8: memref<256x128xbf16, #tpu.memory_space<any>>, %arg9: memref<128x128xbf16, #tpu.memory_space<any>>, %arg10: memref<16x128xf32, #tpu.memory_space<vmem>>, %arg11: memref<200x64xf32, #tpu.memory_space<vmem>>, %arg12: memref<176x64xf32, #tpu.memory_space<vmem>>, %arg13: memref<176x576xf32, #tpu.memory_space<vmem>>, %arg14: memref<256x128xbf16, #tpu.memory_space<vmem>>, %arg15: memref<128x128xbf16, #tpu.memory_space<vmem>>, %arg16: memref<2x!tpu.dma_semaphore, #tpu.memory_space<semaphore_mem>>) attributes {dimension_semantics = [#tpu.dimension_semantics<arbitrary>], iteration_bounds = array<i64: 1>, scalar_prefetch = 0 : i64, scratch_operands = 6 : i64, tpu.core_type = #tpu.core_type<tc>, window_params = [{pipeline_mode = #tpu.pipeline_mode<synchronous>, transform_indices = @transform_0, window_bounds = array<i64: 200, 18>}, {pipeline_mode = #tpu.pipeline_mode<synchronous>, transform_indices = @transform_1, window_bounds = array<i64: 18, 64>}, {pipeline_mode = #tpu.pipeline_mode<synchronous>, transform_indices = @transform_2, window_bounds = array<i64: 1, 64>}, {pipeline_mode = #tpu.pipeline_mode<synchronous>, transform_indices = @transform_3, window_bounds = array<i64: 576, 64>}, {pipeline_mode = #tpu.pipeline_mode<synchronous>, transform_indices = @transform_4, window_bounds = array<i64: 1, 64>}, {pipeline_mode = #tpu.pipeline_mode<synchronous>, transform_indices = @transform_5, window_bounds = array<i64: 1, 128>}, {pipeline_mode = #tpu.pipeline_mode<synchronous>, transform_indices = @transform_6, window_bounds = array<i64: 1, 128>}, {}, {}, {pipeline_mode = #tpu.pipeline_mode<synchronous>, transform_indices = @transform_9, window_bounds = array<i64: 16, 128>}]} {
    %c0_i32 = arith.constant 0 : i32
    %0 = tpu.memref_slice %arg16[%c0_i32] : memref<2x!tpu.dma_semaphore, #tpu.memory_space<semaphore_mem>> -> memref<1x!tpu.dma_semaphore, #tpu.memory_space<semaphore_mem>>
    %1 = tpu.memref_squeeze %0 : memref<1x!tpu.dma_semaphore, #tpu.memory_space<semaphore_mem>> -> memref<!tpu.dma_semaphore, #tpu.memory_space<semaphore_mem>>
    tpu.enqueue_dma source(%arg8 : memref<256x128xbf16, #tpu.memory_space<any>>) target(%arg14 : memref<256x128xbf16, #tpu.memory_space<vmem>>) target_semaphore(%1 : memref<!tpu.dma_semaphore, #tpu.memory_space<semaphore_mem>>)
    %c1_i32 = arith.constant 1 : i32
    %2 = tpu.memref_slice %arg16[%c1_i32] : memref<2x!tpu.dma_semaphore, #tpu.memory_space<semaphore_mem>> -> memref<1x!tpu.dma_semaphore, #tpu.memory_space<semaphore_mem>>
    %3 = tpu.memref_squeeze %2 : memref<1x!tpu.dma_semaphore, #tpu.memory_space<semaphore_mem>> -> memref<!tpu.dma_semaphore, #tpu.memory_space<semaphore_mem>>
    tpu.enqueue_dma source(%arg9 : memref<128x128xbf16, #tpu.memory_space<any>>) target(%arg15 : memref<128x128xbf16, #tpu.memory_space<vmem>>) target_semaphore(%3 : memref<!tpu.dma_semaphore, #tpu.memory_space<semaphore_mem>>)
    %c0 = arith.constant 0 : index
    %c0_0 = arith.constant 0 : index
    %4 = vector.load %arg1[%c0, %c0_0] : memref<200x18xf32, #tpu.memory_space<vmem>>, vector<200x18xf32>
    %c0_1 = arith.constant 0 : index
    %c0_2 = arith.constant 0 : index
    %5 = vector.load %arg2[%c0_1, %c0_2] : memref<18x64xf32, #tpu.memory_space<vmem>>, vector<18x64xf32>
    %cst = arith.constant dense<0.000000e+00> : vector<200x64xf32>
    %6 = tpu.matmul %4, %5, %cst {dimension_numbers = #tpu.dot_dimension_numbers<[1], [0], [0], [1], [0, 0, 1, 1], [], []>} : vector<200x18xf32>, vector<18x64xf32>, vector<200x64xf32> -> vector<200x64xf32>
    %c0_3 = arith.constant 0 : index
    %c0_4 = arith.constant 0 : index
    %7 = vector.load %arg3[%c0_3, %c0_4] : memref<1x64xf32, #tpu.memory_space<vmem>>, vector<1x64xf32>
    %8 = vector.broadcast %7 : vector<1x64xf32> to vector<200x64xf32>
    %9 = arith.addf %6, %8 : vector<200x64xf32>
    %cst_5 = arith.constant 0.000000e+00 : f32
    %10 = vector.broadcast %cst_5 : f32 to vector<200x64xf32>
    %11 = arith.maximumf %9, %10 : vector<200x64xf32>
    %c0_6 = arith.constant 0 : index
    %c0_7 = arith.constant 0 : index
    %12 = vector.load %arg11[%c0_6, %c0_7] : memref<200x64xf32, #tpu.memory_space<vmem>>, vector<200x64xf32>
    tpu.vector_store %arg11[%c0_6, %c0_7], %11 {strides = array<i32>} : memref<200x64xf32, #tpu.memory_space<vmem>>, vector<200x64xf32>,
    %c0_8 = arith.constant 0 : index
    %c0_9 = arith.constant 0 : index
    %13 = vector.load %arg4[%c0_8, %c0_9] : memref<576x64xbf16, #tpu.memory_space<vmem>>, vector<576x64xbf16>
    %14 = arith.extf %13 : vector<576x64xbf16> to vector<576x64xf32>
    %c0_10 = arith.constant 0 : index
    %c0_11 = arith.constant 0 : index
    %15 = vector.load %arg5[%c0_10, %c0_11] : memref<1x64xf32, #tpu.memory_space<vmem>>, vector<1x64xf32>
    %c0_12 = arith.constant 0 : index
    %c0_13 = arith.constant 0 : index
    %16 = vector.load %arg11[%c0_12, %c0_13] : memref<200x64xf32, #tpu.memory_space<vmem>>, vector<176x64xf32>
    %c0_14 = arith.constant 0 : index
    %c0_15 = arith.constant 0 : index
    %17 = vector.load %arg13[%c0_14, %c0_15] : memref<176x576xf32, #tpu.memory_space<vmem>>, vector<176x64xf32>
    tpu.vector_store %arg13[%c0_14, %c0_15], %16 {strides = array<i32>} : memref<176x576xf32, #tpu.memory_space<vmem>>, vector<176x64xf32>,
    %c1 = arith.constant 1 : index
    %c0_16 = arith.constant 0 : index
    %18 = vector.load %arg11[%c1, %c0_16] : memref<200x64xf32, #tpu.memory_space<vmem>>, vector<176x64xf32>
    %c0_17 = arith.constant 0 : index
    %c64 = arith.constant 64 : index
    %19 = vector.load %arg13[%c0_17, %c64] : memref<176x576xf32, #tpu.memory_space<vmem>>, vector<176x64xf32>
    tpu.vector_store %arg13[%c0_17, %c64], %18 {strides = array<i32>} : memref<176x576xf32, #tpu.memory_space<vmem>>, vector<176x64xf32>,
    %c2 = arith.constant 2 : index
    %c0_18 = arith.constant 0 : index
    %20 = vector.load %arg11[%c2, %c0_18] : memref<200x64xf32, #tpu.memory_space<vmem>>, vector<176x64xf32>
    %c0_19 = arith.constant 0 : index
    %c128 = arith.constant 128 : index
    %21 = vector.load %arg13[%c0_19, %c128] : memref<176x576xf32, #tpu.memory_space<vmem>>, vector<176x64xf32>
    tpu.vector_store %arg13[%c0_19, %c128], %20 {strides = array<i32>} : memref<176x576xf32, #tpu.memory_space<vmem>>, vector<176x64xf32>,
    %c10 = arith.constant 10 : index
    %c0_20 = arith.constant 0 : index
    %22 = vector.load %arg11[%c10, %c0_20] : memref<200x64xf32, #tpu.memory_space<vmem>>, vector<176x64xf32>
    %c0_21 = arith.constant 0 : index
    %c192 = arith.constant 192 : index
    %23 = vector.load %arg13[%c0_21, %c192] : memref<176x576xf32, #tpu.memory_space<vmem>>, vector<176x64xf32>
    tpu.vector_store %arg13[%c0_21, %c192], %22 {strides = array<i32>} : memref<176x576xf32, #tpu.memory_space<vmem>>, vector<176x64xf32>,
    %c11 = arith.constant 11 : index
    %c0_22 = arith.constant 0 : index
    %24 = vector.load %arg11[%c11, %c0_22] : memref<200x64xf32, #tpu.memory_space<vmem>>, vector<176x64xf32>
    %c0_23 = arith.constant 0 : index
    %c256 = arith.constant 256 : index
    %25 = vector.load %arg13[%c0_23, %c256] : memref<176x576xf32, #tpu.memory_space<vmem>>, vector<176x64xf32>
    tpu.vector_store %arg13[%c0_23, %c256], %24 {strides = array<i32>} : memref<176x576xf32, #tpu.memory_space<vmem>>, vector<176x64xf32>,
    %c12 = arith.constant 12 : index
    %c0_24 = arith.constant 0 : index
    %26 = vector.load %arg11[%c12, %c0_24] : memref<200x64xf32, #tpu.memory_space<vmem>>, vector<176x64xf32>
    %c0_25 = arith.constant 0 : index
    %c320 = arith.constant 320 : index
    %27 = vector.load %arg13[%c0_25, %c320] : memref<176x576xf32, #tpu.memory_space<vmem>>, vector<176x64xf32>
    tpu.vector_store %arg13[%c0_25, %c320], %26 {strides = array<i32>} : memref<176x576xf32, #tpu.memory_space<vmem>>, vector<176x64xf32>,
    %c20 = arith.constant 20 : index
    %c0_26 = arith.constant 0 : index
    %28 = vector.load %arg11[%c20, %c0_26] : memref<200x64xf32, #tpu.memory_space<vmem>>, vector<176x64xf32>
    %c0_27 = arith.constant 0 : index
    %c384 = arith.constant 384 : index
    %29 = vector.load %arg13[%c0_27, %c384] : memref<176x576xf32, #tpu.memory_space<vmem>>, vector<176x64xf32>
    tpu.vector_store %arg13[%c0_27, %c384], %28 {strides = array<i32>} : memref<176x576xf32, #tpu.memory_space<vmem>>, vector<176x64xf32>,
    %c21 = arith.constant 21 : index
    %c0_28 = arith.constant 0 : index
    %30 = vector.load %arg11[%c21, %c0_28] : memref<200x64xf32, #tpu.memory_space<vmem>>, vector<176x64xf32>
    %c0_29 = arith.constant 0 : index
    %c448 = arith.constant 448 : index
    %31 = vector.load %arg13[%c0_29, %c448] : memref<176x576xf32, #tpu.memory_space<vmem>>, vector<176x64xf32>
    tpu.vector_store %arg13[%c0_29, %c448], %30 {strides = array<i32>} : memref<176x576xf32, #tpu.memory_space<vmem>>, vector<176x64xf32>,
    %c22 = arith.constant 22 : index
    %c0_30 = arith.constant 0 : index
    %32 = vector.load %arg11[%c22, %c0_30] : memref<200x64xf32, #tpu.memory_space<vmem>>, vector<176x64xf32>
    %c0_31 = arith.constant 0 : index
    %c512 = arith.constant 512 : index
    %33 = vector.load %arg13[%c0_31, %c512] : memref<176x576xf32, #tpu.memory_space<vmem>>, vector<176x64xf32>
    tpu.vector_store %arg13[%c0_31, %c512], %32 {strides = array<i32>} : memref<176x576xf32, #tpu.memory_space<vmem>>, vector<176x64xf32>,
    %c0_32 = arith.constant 0 : index
    %c0_33 = arith.constant 0 : index
    %34 = vector.load %arg13[%c0_32, %c0_33] : memref<176x576xf32, #tpu.memory_space<vmem>>, vector<176x576xf32>
    %cst_34 = arith.constant dense<0.000000e+00> : vector<176x64xf32>
    %35 = tpu.matmul %34, %14, %cst_34 {dimension_numbers = #tpu.dot_dimension_numbers<[1], [0], [0], [1], [0, 0, 1, 1], [], []>} : vector<176x576xf32>, vector<576x64xf32>, vector<176x64xf32> -> vector<176x64xf32>
    %36 = vector.broadcast %15 : vector<1x64xf32> to vector<176x64xf32>
    %37 = arith.addf %35, %36 : vector<176x64xf32>
    %cst_35 = arith.constant 0.000000e+00 : f32
    %38 = vector.broadcast %cst_35 : f32 to vector<176x64xf32>
    %39 = arith.maximumf %37, %38 : vector<176x64xf32>
    %c0_36 = arith.constant 0 : index
    %c0_37 = arith.constant 0 : index
    %40 = vector.load %arg12[%c0_36, %c0_37] : memref<176x64xf32, #tpu.memory_space<vmem>>, vector<176x64xf32>
    tpu.vector_store %arg12[%c0_36, %c0_37], %39 {strides = array<i32>} : memref<176x64xf32, #tpu.memory_space<vmem>>, vector<176x64xf32>,
    %c0_38 = arith.constant 0 : index
    %c0_39 = arith.constant 0 : index
    %41 = vector.load %arg12[%c0_38, %c0_39] : memref<176x64xf32, #tpu.memory_space<vmem>>, vector<152x64xf32>
    %c0_40 = arith.constant 0 : index
    %c0_41 = arith.constant 0 : index
    %42 = vector.load %arg13[%c0_40, %c0_41] : memref<176x576xf32, #tpu.memory_space<vmem>>, vector<152x64xf32>
    tpu.vector_store %arg13[%c0_40, %c0_41], %41 {strides = array<i32>} : memref<176x576xf32, #tpu.memory_space<vmem>>, vector<152x64xf32>,
    %c1_42 = arith.constant 1 : index
    %c0_43 = arith.constant 0 : index
    %43 = vector.load %arg12[%c1_42, %c0_43] : memref<176x64xf32, #tpu.memory_space<vmem>>, vector<152x64xf32>
    %c0_44 = arith.constant 0 : index
    %c64_45 = arith.constant 64 : index
    %44 = vector.load %arg13[%c0_44, %c64_45] : memref<176x576xf32, #tpu.memory_space<vmem>>, vector<152x64xf32>
    tpu.vector_store %arg13[%c0_44, %c64_45], %43 {strides = array<i32>} : memref<176x576xf32, #tpu.memory_space<vmem>>, vector<152x64xf32>,
    %c2_46 = arith.constant 2 : index
    %c0_47 = arith.constant 0 : index
    %45 = vector.load %arg12[%c2_46, %c0_47] : memref<176x64xf32, #tpu.memory_space<vmem>>, vector<152x64xf32>
    %c0_48 = arith.constant 0 : index
    %c128_49 = arith.constant 128 : index
    %46 = vector.load %arg13[%c0_48, %c128_49] : memref<176x576xf32, #tpu.memory_space<vmem>>, vector<152x64xf32>
    tpu.vector_store %arg13[%c0_48, %c128_49], %45 {strides = array<i32>} : memref<176x576xf32, #tpu.memory_space<vmem>>, vector<152x64xf32>,
    %c10_50 = arith.constant 10 : index
    %c0_51 = arith.constant 0 : index
    %47 = vector.load %arg12[%c10_50, %c0_51] : memref<176x64xf32, #tpu.memory_space<vmem>>, vector<152x64xf32>
    %c0_52 = arith.constant 0 : index
    %c192_53 = arith.constant 192 : index
    %48 = vector.load %arg13[%c0_52, %c192_53] : memref<176x576xf32, #tpu.memory_space<vmem>>, vector<152x64xf32>
    tpu.vector_store %arg13[%c0_52, %c192_53], %47 {strides = array<i32>} : memref<176x576xf32, #tpu.memory_space<vmem>>, vector<152x64xf32>,
    %c11_54 = arith.constant 11 : index
    %c0_55 = arith.constant 0 : index
    %49 = vector.load %arg12[%c11_54, %c0_55] : memref<176x64xf32, #tpu.memory_space<vmem>>, vector<152x64xf32>
    %c0_56 = arith.constant 0 : index
    %c256_57 = arith.constant 256 : index
    %50 = vector.load %arg13[%c0_56, %c256_57] : memref<176x576xf32, #tpu.memory_space<vmem>>, vector<152x64xf32>
    tpu.vector_store %arg13[%c0_56, %c256_57], %49 {strides = array<i32>} : memref<176x576xf32, #tpu.memory_space<vmem>>, vector<152x64xf32>,
    %c12_58 = arith.constant 12 : index
    %c0_59 = arith.constant 0 : index
    %51 = vector.load %arg12[%c12_58, %c0_59] : memref<176x64xf32, #tpu.memory_space<vmem>>, vector<152x64xf32>
    %c0_60 = arith.constant 0 : index
    %c320_61 = arith.constant 320 : index
    %52 = vector.load %arg13[%c0_60, %c320_61] : memref<176x576xf32, #tpu.memory_space<vmem>>, vector<152x64xf32>
    tpu.vector_store %arg13[%c0_60, %c320_61], %51 {strides = array<i32>} : memref<176x576xf32, #tpu.memory_space<vmem>>, vector<152x64xf32>,
    %c20_62 = arith.constant 20 : index
    %c0_63 = arith.constant 0 : index
    %53 = vector.load %arg12[%c20_62, %c0_63] : memref<176x64xf32, #tpu.memory_space<vmem>>, vector<152x64xf32>
    %c0_64 = arith.constant 0 : index
    %c384_65 = arith.constant 384 : index
    %54 = vector.load %arg13[%c0_64, %c384_65] : memref<176x576xf32, #tpu.memory_space<vmem>>, vector<152x64xf32>
    tpu.vector_store %arg13[%c0_64, %c384_65], %53 {strides = array<i32>} : memref<176x576xf32, #tpu.memory_space<vmem>>, vector<152x64xf32>,
    %c21_66 = arith.constant 21 : index
    %c0_67 = arith.constant 0 : index
    %55 = vector.load %arg12[%c21_66, %c0_67] : memref<176x64xf32, #tpu.memory_space<vmem>>, vector<152x64xf32>
    %c0_68 = arith.constant 0 : index
    %c448_69 = arith.constant 448 : index
    %56 = vector.load %arg13[%c0_68, %c448_69] : memref<176x576xf32, #tpu.memory_space<vmem>>, vector<152x64xf32>
    tpu.vector_store %arg13[%c0_68, %c448_69], %55 {strides = array<i32>} : memref<176x576xf32, #tpu.memory_space<vmem>>, vector<152x64xf32>,
    %c22_70 = arith.constant 22 : index
    %c0_71 = arith.constant 0 : index
    %57 = vector.load %arg12[%c22_70, %c0_71] : memref<176x64xf32, #tpu.memory_space<vmem>>, vector<152x64xf32>
    %c0_72 = arith.constant 0 : index
    %c512_73 = arith.constant 512 : index
    %58 = vector.load %arg13[%c0_72, %c512_73] : memref<176x576xf32, #tpu.memory_space<vmem>>, vector<152x64xf32>
    tpu.vector_store %arg13[%c0_72, %c512_73], %57 {strides = array<i32>} : memref<176x576xf32, #tpu.memory_space<vmem>>, vector<152x64xf32>,
    %c0_74 = arith.constant 0 : index
    %c0_75 = arith.constant 0 : index
    %59 = vector.load %arg13[%c0_74, %c0_75] : memref<176x576xf32, #tpu.memory_space<vmem>>, vector<152x576xf32>
    %cst_76 = arith.constant dense<0.000000e+00> : vector<152x64xf32>
    %60 = tpu.matmul %59, %14, %cst_76 {dimension_numbers = #tpu.dot_dimension_numbers<[1], [0], [0], [1], [0, 0, 1, 1], [], []>} : vector<152x576xf32>, vector<576x64xf32>, vector<152x64xf32> -> vector<152x64xf32>
    %61 = vector.broadcast %15 : vector<1x64xf32> to vector<152x64xf32>
    %62 = arith.addf %60, %61 : vector<152x64xf32>
    %cst_77 = arith.constant 0.000000e+00 : f32
    %63 = vector.broadcast %cst_77 : f32 to vector<152x64xf32>
    %64 = arith.maximumf %62, %63 : vector<152x64xf32>
    %c0_78 = arith.constant 0 : index
    %c0_79 = arith.constant 0 : index
    %65 = vector.load %arg11[%c0_78, %c0_79] : memref<200x64xf32, #tpu.memory_space<vmem>>, vector<152x64xf32>
    tpu.vector_store %arg11[%c0_78, %c0_79], %64 {strides = array<i32>} : memref<200x64xf32, #tpu.memory_space<vmem>>, vector<152x64xf32>,
    %c0_80 = arith.constant 0 : index
    %c0_81 = arith.constant 0 : index
    %66 = vector.load %arg11[%c0_80, %c0_81] : memref<200x64xf32, #tpu.memory_space<vmem>>, vector<128x64xf32>
    %c0_82 = arith.constant 0 : index
    %c0_83 = arith.constant 0 : index
    %67 = vector.load %arg13[%c0_82, %c0_83] : memref<176x576xf32, #tpu.memory_space<vmem>>, vector<128x64xf32>
    tpu.vector_store %arg13[%c0_82, %c0_83], %66 {strides = array<i32>} : memref<176x576xf32, #tpu.memory_space<vmem>>, vector<128x64xf32>,
    %c1_84 = arith.constant 1 : index
    %c0_85 = arith.constant 0 : index
    %68 = vector.load %arg11[%c1_84, %c0_85] : memref<200x64xf32, #tpu.memory_space<vmem>>, vector<128x64xf32>
    %c0_86 = arith.constant 0 : index
    %c64_87 = arith.constant 64 : index
    %69 = vector.load %arg13[%c0_86, %c64_87] : memref<176x576xf32, #tpu.memory_space<vmem>>, vector<128x64xf32>
    tpu.vector_store %arg13[%c0_86, %c64_87], %68 {strides = array<i32>} : memref<176x576xf32, #tpu.memory_space<vmem>>, vector<128x64xf32>,
    %c2_88 = arith.constant 2 : index
    %c0_89 = arith.constant 0 : index
    %70 = vector.load %arg11[%c2_88, %c0_89] : memref<200x64xf32, #tpu.memory_space<vmem>>, vector<128x64xf32>
    %c0_90 = arith.constant 0 : index
    %c128_91 = arith.constant 128 : index
    %71 = vector.load %arg13[%c0_90, %c128_91] : memref<176x576xf32, #tpu.memory_space<vmem>>, vector<128x64xf32>
    tpu.vector_store %arg13[%c0_90, %c128_91], %70 {strides = array<i32>} : memref<176x576xf32, #tpu.memory_space<vmem>>, vector<128x64xf32>,
    %c10_92 = arith.constant 10 : index
    %c0_93 = arith.constant 0 : index
    %72 = vector.load %arg11[%c10_92, %c0_93] : memref<200x64xf32, #tpu.memory_space<vmem>>, vector<128x64xf32>
    %c0_94 = arith.constant 0 : index
    %c192_95 = arith.constant 192 : index
    %73 = vector.load %arg13[%c0_94, %c192_95] : memref<176x576xf32, #tpu.memory_space<vmem>>, vector<128x64xf32>
    tpu.vector_store %arg13[%c0_94, %c192_95], %72 {strides = array<i32>} : memref<176x576xf32, #tpu.memory_space<vmem>>, vector<128x64xf32>,
    %c11_96 = arith.constant 11 : index
    %c0_97 = arith.constant 0 : index
    %74 = vector.load %arg11[%c11_96, %c0_97] : memref<200x64xf32, #tpu.memory_space<vmem>>, vector<128x64xf32>
    %c0_98 = arith.constant 0 : index
    %c256_99 = arith.constant 256 : index
    %75 = vector.load %arg13[%c0_98, %c256_99] : memref<176x576xf32, #tpu.memory_space<vmem>>, vector<128x64xf32>
    tpu.vector_store %arg13[%c0_98, %c256_99], %74 {strides = array<i32>} : memref<176x576xf32, #tpu.memory_space<vmem>>, vector<128x64xf32>,
    %c12_100 = arith.constant 12 : index
    %c0_101 = arith.constant 0 : index
    %76 = vector.load %arg11[%c12_100, %c0_101] : memref<200x64xf32, #tpu.memory_space<vmem>>, vector<128x64xf32>
    %c0_102 = arith.constant 0 : index
    %c320_103 = arith.constant 320 : index
    %77 = vector.load %arg13[%c0_102, %c320_103] : memref<176x576xf32, #tpu.memory_space<vmem>>, vector<128x64xf32>
    tpu.vector_store %arg13[%c0_102, %c320_103], %76 {strides = array<i32>} : memref<176x576xf32, #tpu.memory_space<vmem>>, vector<128x64xf32>,
    %c20_104 = arith.constant 20 : index
    %c0_105 = arith.constant 0 : index
    %78 = vector.load %arg11[%c20_104, %c0_105] : memref<200x64xf32, #tpu.memory_space<vmem>>, vector<128x64xf32>
    %c0_106 = arith.constant 0 : index
    %c384_107 = arith.constant 384 : index
    %79 = vector.load %arg13[%c0_106, %c384_107] : memref<176x576xf32, #tpu.memory_space<vmem>>, vector<128x64xf32>
    tpu.vector_store %arg13[%c0_106, %c384_107], %78 {strides = array<i32>} : memref<176x576xf32, #tpu.memory_space<vmem>>, vector<128x64xf32>,
    %c21_108 = arith.constant 21 : index
    %c0_109 = arith.constant 0 : index
    %80 = vector.load %arg11[%c21_108, %c0_109] : memref<200x64xf32, #tpu.memory_space<vmem>>, vector<128x64xf32>
    %c0_110 = arith.constant 0 : index
    %c448_111 = arith.constant 448 : index
    %81 = vector.load %arg13[%c0_110, %c448_111] : memref<176x576xf32, #tpu.memory_space<vmem>>, vector<128x64xf32>
    tpu.vector_store %arg13[%c0_110, %c448_111], %80 {strides = array<i32>} : memref<176x576xf32, #tpu.memory_space<vmem>>, vector<128x64xf32>,
    %c22_112 = arith.constant 22 : index
    %c0_113 = arith.constant 0 : index
    %82 = vector.load %arg11[%c22_112, %c0_113] : memref<200x64xf32, #tpu.memory_space<vmem>>, vector<128x64xf32>
    %c0_114 = arith.constant 0 : index
    %c512_115 = arith.constant 512 : index
    %83 = vector.load %arg13[%c0_114, %c512_115] : memref<176x576xf32, #tpu.memory_space<vmem>>, vector<128x64xf32>
    tpu.vector_store %arg13[%c0_114, %c512_115], %82 {strides = array<i32>} : memref<176x576xf32, #tpu.memory_space<vmem>>, vector<128x64xf32>,
    %c0_116 = arith.constant 0 : index
    %c0_117 = arith.constant 0 : index
    %84 = vector.load %arg13[%c0_116, %c0_117] : memref<176x576xf32, #tpu.memory_space<vmem>>, vector<128x576xf32>
    %cst_118 = arith.constant dense<0.000000e+00> : vector<128x64xf32>
    %85 = tpu.matmul %84, %14, %cst_118 {dimension_numbers = #tpu.dot_dimension_numbers<[1], [0], [0], [1], [0, 0, 1, 1], [], []>} : vector<128x576xf32>, vector<576x64xf32>, vector<128x64xf32> -> vector<128x64xf32>
    %86 = vector.broadcast %15 : vector<1x64xf32> to vector<128x64xf32>
    %87 = arith.addf %85, %86 : vector<128x64xf32>
    %cst_119 = arith.constant 0.000000e+00 : f32
    %88 = vector.broadcast %cst_119 : f32 to vector<128x64xf32>
    %89 = arith.maximumf %87, %88 : vector<128x64xf32>
    %c0_120 = arith.constant 0 : index
    %c0_121 = arith.constant 0 : index
    %90 = vector.load %arg12[%c0_120, %c0_121] : memref<176x64xf32, #tpu.memory_space<vmem>>, vector<128x64xf32>
    tpu.vector_store %arg12[%c0_120, %c0_121], %89 {strides = array<i32>} : memref<176x64xf32, #tpu.memory_space<vmem>>, vector<128x64xf32>,
    %c0_i32_122 = arith.constant 0 : i32
    %91 = tpu.memref_slice %arg16[%c0_i32_122] : memref<2x!tpu.dma_semaphore, #tpu.memory_space<semaphore_mem>> -> memref<1x!tpu.dma_semaphore, #tpu.memory_space<semaphore_mem>>
    %92 = tpu.memref_squeeze %91 : memref<1x!tpu.dma_semaphore, #tpu.memory_space<semaphore_mem>> -> memref<!tpu.dma_semaphore, #tpu.memory_space<semaphore_mem>>
    tpu.wait_dma2 semaphore(%92 : memref<!tpu.dma_semaphore, #tpu.memory_space<semaphore_mem>>) src(%arg8 : memref<256x128xbf16, #tpu.memory_space<any>>) dst(%arg14 : memref<256x128xbf16, #tpu.memory_space<vmem>>)
    %c1_i32_123 = arith.constant 1 : i32
    %93 = tpu.memref_slice %arg16[%c1_i32_123] : memref<2x!tpu.dma_semaphore, #tpu.memory_space<semaphore_mem>> -> memref<1x!tpu.dma_semaphore, #tpu.memory_space<semaphore_mem>>
    %94 = tpu.memref_squeeze %93 : memref<1x!tpu.dma_semaphore, #tpu.memory_space<semaphore_mem>> -> memref<!tpu.dma_semaphore, #tpu.memory_space<semaphore_mem>>
    tpu.wait_dma2 semaphore(%94 : memref<!tpu.dma_semaphore, #tpu.memory_space<semaphore_mem>>) src(%arg9 : memref<128x128xbf16, #tpu.memory_space<any>>) dst(%arg15 : memref<128x128xbf16, #tpu.memory_space<vmem>>)
    %c0_124 = arith.constant 0 : index
    %c0_125 = arith.constant 0 : index
    %95 = vector.load %arg12[%c0_124, %c0_125] : memref<176x64xf32, #tpu.memory_space<vmem>>, vector<8x64xf32>
    %c104 = arith.constant 104 : index
    %c0_126 = arith.constant 0 : index
    %96 = vector.load %arg12[%c104, %c0_126] : memref<176x64xf32, #tpu.memory_space<vmem>>, vector<8x64xf32>
    %97 = tpu.concatenate %95, %96 in 0 : vector<8x64xf32>, vector<8x64xf32> -> vector<16x64xf32>
    %c1_127 = arith.constant 1 : index
    %c0_128 = arith.constant 0 : index
    %98 = vector.load %arg12[%c1_127, %c0_128] : memref<176x64xf32, #tpu.memory_space<vmem>>, vector<8x64xf32>
    %c105 = arith.constant 105 : index
    %c0_129 = arith.constant 0 : index
    %99 = vector.load %arg12[%c105, %c0_129] : memref<176x64xf32, #tpu.memory_space<vmem>>, vector<8x64xf32>
    %100 = tpu.concatenate %98, %99 in 0 : vector<8x64xf32>, vector<8x64xf32> -> vector<16x64xf32>
    %c10_130 = arith.constant 10 : index
    %c0_131 = arith.constant 0 : index
    %101 = vector.load %arg12[%c10_130, %c0_131] : memref<176x64xf32, #tpu.memory_space<vmem>>, vector<8x64xf32>
    %c114 = arith.constant 114 : index
    %c0_132 = arith.constant 0 : index
    %102 = vector.load %arg12[%c114, %c0_132] : memref<176x64xf32, #tpu.memory_space<vmem>>, vector<8x64xf32>
    %103 = tpu.concatenate %101, %102 in 0 : vector<8x64xf32>, vector<8x64xf32> -> vector<16x64xf32>
    %c11_133 = arith.constant 11 : index
    %c0_134 = arith.constant 0 : index
    %104 = vector.load %arg12[%c11_133, %c0_134] : memref<176x64xf32, #tpu.memory_space<vmem>>, vector<8x64xf32>
    %c115 = arith.constant 115 : index
    %c0_135 = arith.constant 0 : index
    %105 = vector.load %arg12[%c115, %c0_135] : memref<176x64xf32, #tpu.memory_space<vmem>>, vector<8x64xf32>
    %106 = tpu.concatenate %104, %105 in 0 : vector<8x64xf32>, vector<8x64xf32> -> vector<16x64xf32>
    %107 = tpu.concatenate %97, %100, %103, %106 in 1 : vector<16x64xf32>, vector<16x64xf32>, vector<16x64xf32>, vector<16x64xf32> -> vector<16x256xf32>
    %c0_136 = arith.constant 0 : index
    %c0_137 = arith.constant 0 : index
    %108 = vector.load %arg14[%c0_136, %c0_137] : memref<256x128xbf16, #tpu.memory_space<vmem>>, vector<256x128xbf16>
    %109 = arith.extf %108 : vector<256x128xbf16> to vector<256x128xf32>
    %cst_138 = arith.constant dense<0.000000e+00> : vector<16x128xf32>
    %110 = tpu.matmul %107, %109, %cst_138 {dimension_numbers = #tpu.dot_dimension_numbers<[1], [0], [0], [1], [0, 0, 1, 1], [], []>} : vector<16x256xf32>, vector<256x128xf32>, vector<16x128xf32> -> vector<16x128xf32>
    %c0_139 = arith.constant 0 : index
    %c0_140 = arith.constant 0 : index
    %111 = vector.load %arg6[%c0_139, %c0_140] : memref<1x128xf32, #tpu.memory_space<vmem>>, vector<1x128xf32>
    %112 = vector.broadcast %111 : vector<1x128xf32> to vector<16x128xf32>
    %113 = arith.addf %110, %112 : vector<16x128xf32>
    %cst_141 = arith.constant 0.000000e+00 : f32
    %114 = vector.broadcast %cst_141 : f32 to vector<16x128xf32>
    %115 = arith.maximumf %113, %114 : vector<16x128xf32>
    %c0_142 = arith.constant 0 : index
    %c0_143 = arith.constant 0 : index
    %116 = vector.load %arg15[%c0_142, %c0_143] : memref<128x128xbf16, #tpu.memory_space<vmem>>, vector<128x128xbf16>
    %117 = arith.extf %116 : vector<128x128xbf16> to vector<128x128xf32>
    %cst_144 = arith.constant dense<0.000000e+00> : vector<16x128xf32>
    %118 = tpu.matmul %115, %117, %cst_144 {dimension_numbers = #tpu.dot_dimension_numbers<[1], [0], [0], [1], [0, 0, 1, 1], [], []>} : vector<16x128xf32>, vector<128x128xf32>, vector<16x128xf32> -> vector<16x128xf32>
    %c0_145 = arith.constant 0 : index
    %c0_146 = arith.constant 0 : index
    %119 = vector.load %arg7[%c0_145, %c0_146] : memref<1x128xf32, #tpu.memory_space<vmem>>, vector<1x128xf32>
    %120 = vector.broadcast %119 : vector<1x128xf32> to vector<16x128xf32>
    %121 = arith.addf %118, %120 : vector<16x128xf32>
    %122 = math.tanh %121 : vector<16x128xf32>
    %c0_147 = arith.constant 0 : index
    %c0_148 = arith.constant 0 : index
    %123 = vector.load %arg10[%c0_147, %c0_148] : memref<16x128xf32, #tpu.memory_space<vmem>>, vector<16x128xf32>
    tpu.vector_store %arg10[%c0_147, %c0_148], %122 {strides = array<i32>} : memref<16x128xf32, #tpu.memory_space<vmem>>, vector<16x128xf32>,
    return
  }
  func.func @transform_0(%arg0: i32) -> (i32, i32) {
    %c0_i32 = arith.constant 0 : i32
    %c0_i32_0 = arith.constant 0 : i32
    %c0_i32_1 = arith.constant 0 : i32
    return %c0_i32, %c0_i32_0 : i32, i32
  }
  func.func @transform_1(%arg0: i32) -> (i32, i32) {
    %c0_i32 = arith.constant 0 : i32
    %c0_i32_0 = arith.constant 0 : i32
    %c0_i32_1 = arith.constant 0 : i32
    return %c0_i32, %c0_i32_0 : i32, i32
  }
  func.func @transform_2(%arg0: i32) -> (i32, i32) {
    %c0_i32 = arith.constant 0 : i32
    %c0_i32_0 = arith.constant 0 : i32
    %c0_i32_1 = arith.constant 0 : i32
    return %c0_i32, %c0_i32_0 : i32, i32
  }
  func.func @transform_3(%arg0: i32) -> (i32, i32) {
    %c0_i32 = arith.constant 0 : i32
    %c0_i32_0 = arith.constant 0 : i32
    %c0_i32_1 = arith.constant 0 : i32
    return %c0_i32, %c0_i32_0 : i32, i32
  }
  func.func @transform_4(%arg0: i32) -> (i32, i32) {
    %c0_i32 = arith.constant 0 : i32
    %c0_i32_0 = arith.constant 0 : i32
    %c0_i32_1 = arith.constant 0 : i32
    return %c0_i32, %c0_i32_0 : i32, i32
  }
  func.func @transform_5(%arg0: i32) -> (i32, i32) {
    %c0_i32 = arith.constant 0 : i32
    %c0_i32_0 = arith.constant 0 : i32
    %c0_i32_1 = arith.constant 0 : i32
    return %c0_i32, %c0_i32_0 : i32, i32
  }
  func.func @transform_6(%arg0: i32) -> (i32, i32) {
    %c0_i32 = arith.constant 0 : i32
    %c0_i32_0 = arith.constant 0 : i32
    %c0_i32_1 = arith.constant 0 : i32
    return %c0_i32, %c0_i32_0 : i32, i32
  }
  func.func @transform_9(%arg0: i32) -> (i32, i32) {
    %c0_i32 = arith.constant 0 : i32
    %c0_i32_0 = arith.constant 0 : i32
    %c0_i32_1 = arith.constant 0 : i32
    return %c0_i32, %c0_i32_0 : i32, i32
  }
}

</mosaic_0001>

<llo_original>
// kernel: lenet_forward.1
$region0: #{lenet_forward.1}
  #allocation0 [shape = 'u32[]', space=smem, size = 0x4, offset = 0x4, fixed_abs, tag = 'smem constant byte address 0x4 - core index']
  #allocation1 [shape = 'u32[144,128]{1,0:T(1,128)}', space=vmem, size = 0x12000, scoped, tag = 'internal scratch']
  #allocation2 [shape = 'f32[200,64]{1,0:T(8,128)}', space=vmem, size = 0x19000, scoped, tag = 'scratch operand']
  #allocation3 [shape = 'f32[176,64]{1,0:T(8,128)}', space=vmem, size = 0x16000, scoped, tag = 'scratch operand']
  #allocation4 [shape = 'f32[176,576]{1,0:T(8,128)}', space=vmem, size = 0x6e000, scoped, tag = 'scratch operand']
  #allocation5 [shape = 'bf16[256,128]{1,0:T(16,128)(2,1)}', space=vmem, size = 0x10000, scoped, tag = 'scratch operand']
  #allocation6 [shape = 'bf16[128,128]{1,0:T(16,128)(2,1)}', space=vmem, size = 0x8000, scoped, tag = 'scratch operand']
  #allocation7 [shape = 's32[2]{0}', space=sflag, size = 0x8, scoped, tag = 'scratch operand']
  #allocation8 [shape = 's32[]', space=sflag, size = 0x4, offset = 0, fixed_abs, tag = 'sflag constant byte address 0x0 - dummy sync flag']
  #allocation9 [shape = 's32[]', space=sflag, size = 0x4, offset = 0, fixed_abs, tag = 'sflag constant byte address 0x0 - dummy sync flag']
  %s0 = inlined_call_operand.vmem [shape: f32[200,18], index: 0, kind: input, shape index: {}]
  %s1 = inlined_call_operand.vmem [shape: f32[18,64], index: 1, kind: input, shape index: {}]
  %s2 = inlined_call_operand.vmem [shape: f32[1,64], index: 2, kind: input, shape index: {}]
  %s3 = inlined_call_operand.vmem [shape: bf16[576,64], index: 3, kind: input, shape index: {}]
  %s4 = inlined_call_operand.vmem [shape: f32[1,64], index: 4, kind: input, shape index: {}]
  %s5 = inlined_call_operand.vmem [shape: f32[1,128], index: 5, kind: input, shape index: {}]
  %s6 = inlined_call_operand.vmem [shape: f32[1,128], index: 6, kind: input, shape index: {}]
  %s7 = inlined_call_operand.vmem [shape: bf16[256,128], index: 7, kind: input, shape index: {}]
  %s8 = inlined_call_operand.vmem [shape: bf16[128,128], index: 8, kind: input, shape index: {}]
  %s9 = inlined_call_operand.vmem [shape: f32[16,128], index: 9, kind: output, shape index: {}]
  %s10 = sld [smem:[#allocation0]]
  $region106: #{lenet_forward.1} parent=0
    _
  %s12 = ssub.s32 1, %s10
  %s13 = scalar_select 0, %s12, %s10
  // Predicated region
  $region2: #{lenet_forward.1} parent=0 // pred_check
    _
  $region3: #{lenet_forward.1} parent=0 // pred_check_branch
    %15 = sbr.rel (0) target = $region5
  $region4: #{lenet_forward.1} parent=0 // pred_region
    _
  $region5: #{lenet_forward.1} parent=0 // pred_fallthru
    _
  // Predicated region
  $region6: #{lenet_forward.1} parent=0 // pred_check
    _
  $region7: #{lenet_forward.1} parent=0 // pred_check_branch
    %17 = sbr.rel (0) target = $region9
  $region8: #{lenet_forward.1} parent=0 // pred_region
    _
  $region9: #{lenet_forward.1} parent=0 // pred_fallthru
    _
  // Predicated region
  $region10: #{lenet_forward.1} parent=0 // pred_check
    _
  $region11: #{lenet_forward.1} parent=0 // pred_check_branch
    %19 = sbr.rel (0) target = $region13
  $region12: #{lenet_forward.1} parent=0 // pred_region
    _
  $region13: #{lenet_forward.1} parent=0 // pred_fallthru
    _
  // Predicated region
  $region14: #{lenet_forward.1} parent=0 // pred_check
    _
  $region15: #{lenet_forward.1} parent=0 // pred_check_branch
    %21 = sbr.rel (0) target = $region17
  $region16: #{lenet_forward.1} parent=0 // pred_region
    _
  $region17: #{lenet_forward.1} parent=0 // pred_fallthru
    _
  // Predicated region
  $region18: #{lenet_forward.1} parent=0 // pred_check
    _
  $region19: #{lenet_forward.1} parent=0 // pred_check_branch
    %23 = sbr.rel (0) target = $region21
  $region20: #{lenet_forward.1} parent=0 // pred_region
    _
  $region21: #{lenet_forward.1} parent=0 // pred_fallthru
    _
  // Predicated region
  $region22: #{lenet_forward.1} parent=0 // pred_check
    _
  $region23: #{lenet_forward.1} parent=0 // pred_check_branch
    %25 = sbr.rel (0) target = $region25
  $region24: #{lenet_forward.1} parent=0 // pred_region
    _
  $region25: #{lenet_forward.1} parent=0 // pred_fallthru
    _
  // Predicated region
  $region26: #{lenet_forward.1} parent=0 // pred_check
    _
  $region27: #{lenet_forward.1} parent=0 // pred_check_branch
    %27 = sbr.rel (0) target = $region29
  $region28: #{lenet_forward.1} parent=0 // pred_region
    _
  $region29: #{lenet_forward.1} parent=0 // pred_fallthru
    _
  %p29 = scmp.lt.u32.totalorder 128, 8
  %p30 = pneg %p29
  // Predicated region
  $region30: #{lenet_forward.1} parent=0 // pred_check
    _
  $region31: #{lenet_forward.1} parent=0 // pred_check_branch
    %32 = sbr.rel (%p29) target = $region33
  $region32: #{lenet_forward.1} parent=0 // pred_region
    %s47 = sand.u32 128, 7
    %p48 = scmp.eq.s32.totalorder %s47, 0
    // Predicated region
    $region45: #{lenet_forward.1} parent=32 // pred_check
      %p49 = pneg %p48
    $region46: #{lenet_forward.1} parent=32 // pred_check_branch
      %51 = sbr.rel (%p49) target = $region48
    $region47: #{lenet_forward.1} parent=32 // pred_region
      loop: start=0, step=1, limit=1
      $region49: #{lenet_forward.1} parent=47 // loop_pre_header
        _
      $region50: #{lenet_forward.1} parent=47 // loop_header
        %s53 = sphi 0, %s57
        %p54 = scmp.ge.s32.totalorder %s53, 1
        %s58 = sphi %s7, %s7
        %s59 = sphi [#allocation5], [#allocation5]
      $region51: #{lenet_forward.1} parent=47 // loop_header_branch
        %56 = sbr.rel (%p54) target = $region55
      $region52: #{lenet_forward.1} parent=47 // loop_body
        %v60 = vld [vmem:[%s58] sm:$0xff]
        %61 = vst [vmem:[%s59] sm:$0xff] %v60
        %v62 = vld [vmem:[%s58 + $0x8] sm:$0xff]
        %63 = vst [vmem:[%s59 + $0x8] sm:$0xff] %v62
        %v64 = vld [vmem:[%s58 + $0x10] sm:$0xff]
        %65 = vst [vmem:[%s59 + $0x10] sm:$0xff] %v64
        %v66 = vld [vmem:[%s58 + $0x18] sm:$0xff]
        %67 = vst [vmem:[%s59 + $0x18] sm:$0xff] %v66
        %v68 = vld [vmem:[%s58 + $0x20] sm:$0xff]
        %69 = vst [vmem:[%s59 + $0x20] sm:$0xff] %v68
        %v70 = vld [vmem:[%s58 + $0x28] sm:$0xff]
        %71 = vst [vmem:[%s59 + $0x28] sm:$0xff] %v70
        %v72 = vld [vmem:[%s58 + $0x30] sm:$0xff]
        %73 = vst [vmem:[%s59 + $0x30] sm:$0xff] %v72
        %v74 = vld [vmem:[%s58 + $0x38] sm:$0xff]
        %75 = vst [vmem:[%s59 + $0x38] sm:$0xff] %v74
        %v76 = vld [vmem:[%s58 + $0x40] sm:$0xff]
        %77 = vst [vmem:[%s59 + $0x40] sm:$0xff] %v76
        %v78 = vld [vmem:[%s58 + $0x48] sm:$0xff]
        %79 = vst [vmem:[%s59 + $0x48] sm:$0xff] %v78
        %v80 = vld [vmem:[%s58 + $0x50] sm:$0xff]
        %81 = vst [vmem:[%s59 + $0x50] sm:$0xff] %v80
        %v82 = vld [vmem:[%s58 + $0x58] sm:$0xff]
        %83 = vst [vmem:[%s59 + $0x58] sm:$0xff] %v82
        %v84 = vld [vmem:[%s58 + $0x60] sm:$0xff]
        %85 = vst [vmem:[%s59 + $0x60] sm:$0xff] %v84
        %v86 = vld [vmem:[%s58 + $0x68] sm:$0xff]
        %87 = vst [vmem:[%s59 + $0x68] sm:$0xff] %v86
        %v88 = vld [vmem:[%s58 + $0x70] sm:$0xff]
        %89 = vst [vmem:[%s59 + $0x70] sm:$0xff] %v88
        %v90 = vld [vmem:[%s58 + $0x78] sm:$0xff]
        %91 = vst [vmem:[%s59 + $0x78] sm:$0xff] %v90
      $region53: #{lenet_forward.1} parent=47 // loop_footer
        %s57 = sadd.s32 1, %s53
      $region54: #{lenet_forward.1} parent=47 // loop_footer_branch
        %52 = sbr.rel target = $region50
      $region55: #{lenet_forward.1} parent=47 // loop_exit
        _
    $region48: #{lenet_forward.1} parent=32 // pred_fallthru
      _
    %p92 = pneg %p48
    // Predicated region
    $region56: #{lenet_forward.1} parent=32 // pred_check
      _
    $region57: #{lenet_forward.1} parent=32 // pred_check_branch
      %94 = sbr.rel (%p48) target = $region59
    $region58: #{lenet_forward.1} parent=32 // pred_region
      %s95 = sand.u32 128, 7
    $region59: #{lenet_forward.1} parent=32 // pred_fallthru
      _
  $region33: #{lenet_forward.1} parent=0 // pred_fallthru
    _
  // Predicated region
  $region34: #{lenet_forward.1} parent=0 // pred_check
    %p33 = pneg %p29
  $region35: #{lenet_forward.1} parent=0 // pred_check_branch
    %35 = sbr.rel (%p33) target = $region37
  $region36: #{lenet_forward.1} parent=0 // pred_region
    %s36 = sshllo.u32 0, 128
    loop: start=0, step=1, limit=1
    $region38: #{lenet_forward.1} parent=36 // loop_pre_header
      _
    $region39: #{lenet_forward.1} parent=36 // loop_header
      %s38 = sphi 0, %s42
      %p39 = scmp.ge.s32.totalorder %s38, 1
      %s43 = sphi %s7, %s7
      %s44 = sphi [#allocation5], [#allocation5]
    $region40: #{lenet_forward.1} parent=36 // loop_header_branch
      %41 = sbr.rel (%p39) target = $region44
    $region41: #{lenet_forward.1} parent=36 // loop_body
      %v45 = vld [vmem:[%s43] sm:%s36]
      %46 = vst [vmem:[%s44] sm:%s36] %v45
    $region42: #{lenet_forward.1} parent=36 // loop_footer
      %s42 = sadd.s32 1, %s38
    $region43: #{lenet_forward.1} parent=36 // loop_footer_branch
      %37 = sbr.rel target = $region39
    $region44: #{lenet_forward.1} parent=36 // loop_exit
      _
  $region37: #{lenet_forward.1} parent=0 // pred_fallthru
    _
  // Predicated region
  $region60: #{lenet_forward.1} parent=0 // pred_check
    _
  $region61: #{lenet_forward.1} parent=0 // pred_check_branch
    %98 = sbr.rel (0) target = $region63
  $region62: #{lenet_forward.1} parent=0 // pred_region
    %99 = vsyncadd [#allocation7], 2048
  $region63: #{lenet_forward.1} parent=0 // pred_fallthru
    _
  %s100 = scalar_lea.sflag [#allocation7], 1
  %p102 = scmp.lt.u32.totalorder 64, 8
  %p103 = pneg %p102
  // Predicated region
  $region64: #{lenet_forward.1} parent=0 // pred_check
    _
  $region65: #{lenet_forward.1} parent=0 // pred_check_branch
    %105 = sbr.rel (%p102) target = $region67
  $region66: #{lenet_forward.1} parent=0 // pred_region
    %s120 = sand.u32 64, 7
    %p121 = scmp.eq.s32.totalorder %s120, 0
    // Predicated region
    $region79: #{lenet_forward.1} parent=66 // pred_check
      %p122 = pneg %p121
    $region80: #{lenet_forward.1} parent=66 // pred_check_branch
      %124 = sbr.rel (%p122) target = $region82
    $region81: #{lenet_forward.1} parent=66 // pred_region
      loop: start=0, step=1, limit=1
      $region83: #{lenet_forward.1} parent=81 // loop_pre_header
        _
      $region84: #{lenet_forward.1} parent=81 // loop_header
        %s126 = sphi 0, %s130
        %p127 = scmp.ge.s32.totalorder %s126, 1
        %s131 = sphi %s8, %s8
        %s132 = sphi [#allocation6], [#allocation6]
      $region85: #{lenet_forward.1} parent=81 // loop_header_branch
        %129 = sbr.rel (%p127) target = $region89
      $region86: #{lenet_forward.1} parent=81 // loop_body
        %v133 = vld [vmem:[%s131] sm:$0xff]
        %134 = vst [vmem:[%s132] sm:$0xff] %v133
        %v135 = vld [vmem:[%s131 + $0x8] sm:$0xff]
        %136 = vst [vmem:[%s132 + $0x8] sm:$0xff] %v135
        %v137 = vld [vmem:[%s131 + $0x10] sm:$0xff]
        %138 = vst [vmem:[%s132 + $0x10] sm:$0xff] %v137
        %v139 = vld [vmem:[%s131 + $0x18] sm:$0xff]
        %140 = vst [vmem:[%s132 + $0x18] sm:$0xff] %v139
        %v141 = vld [vmem:[%s131 + $0x20] sm:$0xff]
        %142 = vst [vmem:[%s132 + $0x20] sm:$0xff] %v141
        %v143 = vld [vmem:[%s131 + $0x28] sm:$0xff]
        %144 = vst [vmem:[%s132 + $0x28] sm:$0xff] %v143
        %v145 = vld [vmem:[%s131 + $0x30] sm:$0xff]
        %146 = vst [vmem:[%s132 + $0x30] sm:$0xff] %v145
        %v147 = vld [vmem:[%s131 + $0x38] sm:$0xff]
        %148 = vst [vmem:[%s132 + $0x38] sm:$0xff] %v147
      $region87: #{lenet_forward.1} parent=81 // loop_footer
        %s130 = sadd.s32 1, %s126
      $region88: #{lenet_forward.1} parent=81 // loop_footer_branch
        %125 = sbr.rel target = $region84
      $region89: #{lenet_forward.1} parent=81 // loop_exit
        _
    $region82: #{lenet_forward.1} parent=66 // pred_fallthru
      _
    %p149 = pneg %p121
    // Predicated region
    $region90: #{lenet_forward.1} parent=66 // pred_check
      _
    $region91: #{lenet_forward.1} parent=66 // pred_check_branch
      %151 = sbr.rel (%p121) target = $region93
    $region92: #{lenet_forward.1} parent=66 // pred_region
      %s152 = sand.u32 64, 7
    $region93: #{lenet_forward.1} parent=66 // pred_fallthru
      _
  $region67: #{lenet_forward.1} parent=0 // pred_fallthru
    _
  // Predicated region
  $region68: #{lenet_forward.1} parent=0 // pred_check
    %p106 = pneg %p102
  $region69: #{lenet_forward.1} parent=0 // pred_check_branch
    %108 = sbr.rel (%p106) target = $region71
  $region70: #{lenet_forward.1} parent=0 // pred_region
    %s109 = sshllo.u32 0, 64
    loop: start=0, step=1, limit=1
    $region72: #{lenet_forward.1} parent=70 // loop_pre_header
      _
    $region73: #{lenet_forward.1} parent=70 // loop_header
      %s111 = sphi 0, %s115
      %p112 = scmp.ge.s32.totalorder %s111, 1
      %s116 = sphi %s8, %s8
      %s117 = sphi [#allocation6], [#allocation6]
    $region74: #{lenet_forward.1} parent=70 // loop_header_branch
      %114 = sbr.rel (%p112) target = $region78
    $region75: #{lenet_forward.1} parent=70 // loop_body
      %v118 = vld [vmem:[%s116] sm:%s109]
      %119 = vst [vmem:[%s117] sm:%s109] %v118
    $region76: #{lenet_forward.1} parent=70 // loop_footer
      %s115 = sadd.s32 1, %s111
    $region77: #{lenet_forward.1} parent=70 // loop_footer_branch
      %110 = sbr.rel target = $region73
    $region78: #{lenet_forward.1} parent=70 // loop_exit
      _
  $region71: #{lenet_forward.1} parent=0 // pred_fallthru
    _
  // Predicated region
  $region94: #{lenet_forward.1} parent=0 // pred_check
    _
  $region95: #{lenet_forward.1} parent=0 // pred_check_branch
    %155 = sbr.rel (0) target = $region97
  $region96: #{lenet_forward.1} parent=0 // pred_region
    %156 = vsyncadd %s100, 1024
  $region97: #{lenet_forward.1} parent=0 // pred_fallthru
    _
  %v157 = vld [vmem:[%s0] sm:$0xff]
  %v158 = vld [vmem:[%s0 + $0x8] sm:$0xff]
  %v159 = vld [vmem:[%s0 + $0x10] sm:$0xff]
  %v160 = vld [vmem:[%s0 + $0x18] sm:$0xff]
  %v161 = vld [vmem:[%s0 + $0x20] sm:$0xff]
  %v162 = vld [vmem:[%s0 + $0x28] sm:$0xff]
  %v163 = vld [vmem:[%s0 + $0x30] sm:$0xff]
  %v164 = vld [vmem:[%s0 + $0x38] sm:$0xff]
  %v165 = vld [vmem:[%s0 + $0x40] sm:$0xff]
  %v166 = vld [vmem:[%s0 + $0x48] sm:$0xff]
  %v167 = vld [vmem:[%s0 + $0x50] sm:$0xff]
  %v168 = vld [vmem:[%s0 + $0x58] sm:$0xff]
  %v169 = vld [vmem:[%s0 + $0x60] sm:$0xff]
  %v170 = vld [vmem:[%s0 + $0x68] sm:$0xff]
  %v171 = vld [vmem:[%s0 + $0x70] sm:$0xff]
  %v172 = vld [vmem:[%s0 + $0x78] sm:$0xff]
  %v173 = vld [vmem:[%s0 + $0x80] sm:$0xff]
  %v174 = vld [vmem:[%s0 + $0x88] sm:$0xff]
  %v175 = vld [vmem:[%s0 + $0x90] sm:$0xff]
  %v176 = vld [vmem:[%s0 + $0x98] sm:$0xff]
  %v177 = vld [vmem:[%s0 + $0xa0] sm:$0xff]
  %v178 = vld [vmem:[%s0 + $0xa8] sm:$0xff]
  %v179 = vld [vmem:[%s0 + $0xb0] sm:$0xff]
  %v180 = vld [vmem:[%s0 + $0xb8] sm:$0xff]
  %v181 = vld [vmem:[%s0 + $0xc0] sm:$0xff]
  %v182 = vld [vmem:[%s1] sm:$0xff]
  %v183 = vld [vmem:[%s1 + $0x8] sm:$0xff]
  %v184 = vld [vmem:[%s1 + $0x10] sm:$0x3]
  %v185 = vld [vmem:[%s2] sm:$0x1]
  %v187 = vlaneseq
  %v188 = vshrl.u32 %v187, 7
  %v189 = vsub.s32 0, %v188
  %v190 = vrot.slane %v185, %v189
  %vm192 = vcmask 146432
  %v194 = vsel %vm192, %v157, 0
  %v197 = vsel %vm192, %v158, 0
  %v200 = vsel %vm192, %v159, 0
  %v203 = vsel %vm192, %v160, 0
  %v206 = vsel %vm192, %v161, 0
  %v209 = vsel %vm192, %v162, 0
  %v212 = vsel %vm192, %v163, 0
  %v215 = vsel %vm192, %v164, 0
  %v218 = vsel %vm192, %v165, 0
  %v221 = vsel %vm192, %v166, 0
  %v224 = vsel %vm192, %v167, 0
  %v227 = vsel %vm192, %v168, 0
  %v230 = vsel %vm192, %v169, 0
  %v233 = vsel %vm192, %v170, 0
  %v236 = vsel %vm192, %v171, 0
  %v239 = vsel %vm192, %v172, 0
  %v242 = vsel %vm192, %v173, 0
  %v245 = vsel %vm192, %v174, 0
  %v248 = vsel %vm192, %v175, 0
  %v251 = vsel %vm192, %v176, 0
  %v254 = vsel %vm192, %v177, 0
  %v257 = vsel %vm192, %v178, 0
  %v260 = vsel %vm192, %v179, 0
  %v263 = vsel %vm192, %v180, 0
  %v266 = vsel %vm192, %v181, 0
  %vm268 = vcmask 1041408
  %v270 = vsel %vm268, %v184, 0
  %272 = vmatprep.subr.mxu0 0.0
  %273 = vmatpush1.msra.mxu0 %v182
  %274 = vmatprep.subr.mxu0 0.0
  %275 = vmatpush1.msra.mxu0 %v183
  %276 = vmatprep.subr.mxu0 0.0
  %277 = vmatpush1.msra.mxu0 %v270
  %278 = vmatprep.subr.mxu0 0.0
  %279 = vmatpush1.msra.mxu0 0.0
  %280 = vmatprep.subr.mxu0 0.0
  %281 = vmatpush1.msra.mxu0 0.0
  %282 = vmatprep.subr.mxu0 0.0
  %283 = vmatpush1.msra.mxu0 0.0
  %284 = vmatprep.subr.mxu0 0.0
  %285 = vmatpush1.msra.mxu0 0.0
  %286 = vmatprep.subr.mxu0 0.0
  %287 = vmatpush1.msra.mxu0 0.0
  %288 = vmatprep.subr.mxu0 0.0
  %289 = vmatpush1.msra.mxu0 0.0
  %290 = vmatprep.subr.mxu0 0.0
  %291 = vmatpush1.msra.mxu0 0.0
  %292 = vmatprep.subr.mxu0 0.0
  %293 = vmatpush1.msra.mxu0 0.0
  %294 = vmatprep.subr.mxu0 0.0
  %295 = vmatpush1.msra.mxu0 0.0
  %296 = vmatprep.subr.mxu0 0.0
  %297 = vmatpush1.msra.mxu0 0.0
  %298 = vmatprep.subr.mxu0 0.0
  %299 = vmatpush1.msra.mxu0 0.0
  %300 = vmatprep.subr.mxu0 0.0
  %301 = vmatpush1.msra.mxu0 0.0
  %302 = vmatprep.subr.mxu0 0.0
  %303 = vmatpush1.msra.mxu0 0.0
  %304 = vmatprep.subr.mxu0 0.0
  %305 = vmatpush1.msra.mxu0 0.0
  %306 = vmatprep.subr.mxu0 0.0
  %307 = vmatpush1.msra.mxu0 0.0
  %308 = vmatprep.subr.mxu0 0.0
  %309 = vmatpush1.msra.mxu0 0.0
  %310 = vmatprep.subr.mxu0 0.0
  %311 = vmatpush1.msra.mxu0 0.0
  %312 = vmatprep.subr.mxu0 0.0
  %313 = vmatpush1.msra.mxu0 0.0
  %314 = vmatprep.subr.mxu0 0.0
  %315 = vmatpush1.msra.mxu0 0.0
  %316 = vmatprep.subr.mxu0 0.0
  %317 = vmatpush1.msra.mxu0 0.0
  %318 = vmatprep.subr.mxu0 0.0
  %319 = vmatpush1.msra.mxu0 0.0
  %320 = vmatprep.subr.mxu0 0.0
  %321 = vmatpush1.msra.mxu0 0.0
  %322 = vmatprep.subr.mxu0 0.0
  %323 = vmatpush1.msra.mxu0 0.0
  %324 = vmatprep.subr.mxu0 0.0
  %325 = vmatpush1.msra.mxu0 0.0
  %326 = vmatprep.subr.mxu0 0.0
  %327 = vmatpush1.msra.mxu0 0.0
  %328 = vmatprep.subr.mxu0 0.0
  %329 = vmatpush1.msra.mxu0 0.0
  %330 = vmatprep.subr.mxu0 0.0
  %331 = vmatpush1.msra.mxu0 0.0
  %332 = vmatprep.subr.mxu0 0.0
  %333 = vmatpush1.msra.mxu0 0.0
  %334 = vmatprep.subr.mxu0 0.0
  %335 = vmatpush1.msra.mxu0 0.0
  %336 = vmatprep.mubr.f32.mxu0 0.0
  %337 = vmatmul.mubr.f32.gmra.mrb[0].mxu0 %v194
  %v338 = vpop.f32.mrb[0].mxu0
  %v339 = vadd.f32 %v190, %v338
  %v340 = vpop.f32.mrb[0].mxu0
  %341 = vmatprep.mubr.f32.mxu0 0.0
  %342 = vmatmul.mubr.f32.gmra.mrb[0].mxu0 %v197
  %v343 = vpop.f32.mrb[0].mxu0
  %v344 = vadd.f32 %v190, %v343
  %v345 = vpop.f32.mrb[0].mxu0
  %346 = vmatprep.mubr.f32.mxu0 0.0
  %347 = vmatmul.mubr.f32.gmra.mrb[0].mxu0 %v200
  %v348 = vpop.f32.mrb[0].mxu0
  %v349 = vadd.f32 %v190, %v348
  %v350 = vpop.f32.mrb[0].mxu0
  %351 = vmatprep.mubr.f32.mxu0 0.0
  %352 = vmatmul.mubr.f32.gmra.mrb[0].mxu0 %v203
  %v353 = vpop.f32.mrb[0].mxu0
  %v354 = vadd.f32 %v190, %v353
  %v355 = vpop.f32.mrb[0].mxu0
  %356 = vmatprep.mubr.f32.mxu0 0.0
  %357 = vmatmul.mubr.f32.gmra.mrb[0].mxu0 %v206
  %v358 = vpop.f32.mrb[0].mxu0
  %v359 = vadd.f32 %v190, %v358
  %v360 = vpop.f32.mrb[0].mxu0
  %361 = vmatprep.mubr.f32.mxu0 0.0
  %362 = vmatmul.mubr.f32.gmra.mrb[0].mxu0 %v209
  %v363 = vpop.f32.mrb[0].mxu0
  %v364 = vadd.f32 %v190, %v363
  %v365 = vpop.f32.mrb[0].mxu0
  %366 = vmatprep.mubr.f32.mxu0 0.0
  %367 = vmatmul.mubr.f32.gmra.mrb[0].mxu0 %v212
  %v368 = vpop.f32.mrb[0].mxu0
  %v369 = vadd.f32 %v190, %v368
  %v370 = vpop.f32.mrb[0].mxu0
  %371 = vmatprep.mubr.f32.mxu0 0.0
  %372 = vmatmul.mubr.f32.gmra.mrb[0].mxu0 %v215
  %v373 = vpop.f32.mrb[0].mxu0
  %v374 = vadd.f32 %v190, %v373
  %v375 = vpop.f32.mrb[0].mxu0
  %376 = vmatprep.mubr.f32.mxu0 0.0
  %377 = vmatmul.mubr.f32.gmra.mrb[0].mxu0 %v218
  %v378 = vpop.f32.mrb[0].mxu0
  %v379 = vadd.f32 %v190, %v378
  %v380 = vpop.f32.mrb[0].mxu0
  %381 = vmatprep.mubr.f32.mxu0 0.0
  %382 = vmatmul.mubr.f32.gmra.mrb[0].mxu0 %v221
  %v383 = vpop.f32.mrb[0].mxu0
  %v384 = vadd.f32 %v190, %v383
  %v385 = vpop.f32.mrb[0].mxu0
  %386 = vmatprep.mubr.f32.mxu0 0.0
  %387 = vmatmul.mubr.f32.gmra.mrb[0].mxu0 %v224
  %v388 = vpop.f32.mrb[0].mxu0
  %v389 = vadd.f32 %v190, %v388
  %v390 = vpop.f32.mrb[0].mxu0
  %391 = vmatprep.mubr.f32.mxu0 0.0
  %392 = vmatmul.mubr.f32.gmra.mrb[0].mxu0 %v227
  %v393 = vpop.f32.mrb[0].mxu0
  %v394 = vadd.f32 %v190, %v393
  %v395 = vpop.f32.mrb[0].mxu0
  %396 = vmatprep.mubr.f32.mxu0 0.0
  %397 = vmatmul.mubr.f32.gmra.mrb[0].mxu0 %v230
  %v398 = vpop.f32.mrb[0].mxu0
  %v399 = vadd.f32 %v190, %v398
  %v400 = vpop.f32.mrb[0].mxu0
  %401 = vmatprep.mubr.f32.mxu0 0.0
  %402 = vmatmul.mubr.f32.gmra.mrb[0].mxu0 %v233
  %v403 = vpop.f32.mrb[0].mxu0
  %v404 = vadd.f32 %v190, %v403
  %v405 = vpop.f32.mrb[0].mxu0
  %406 = vmatprep.mubr.f32.mxu0 0.0
  %407 = vmatmul.mubr.f32.gmra.mrb[0].mxu0 %v236
  %v408 = vpop.f32.mrb[0].mxu0
  %v409 = vadd.f32 %v190, %v408
  %v410 = vpop.f32.mrb[0].mxu0
  %411 = vmatprep.mubr.f32.mxu0 0.0
  %412 = vmatmul.mubr.f32.gmra.mrb[0].mxu0 %v239
  %v413 = vpop.f32.mrb[0].mxu0
  %v414 = vadd.f32 %v190, %v413
  %v415 = vpop.f32.mrb[0].mxu0
  %416 = vmatprep.mubr.f32.mxu0 0.0
  %417 = vmatmul.mubr.f32.gmra.mrb[0].mxu0 %v242
  %v418 = vpop.f32.mrb[0].mxu0
  %v419 = vadd.f32 %v190, %v418
  %v420 = vpop.f32.mrb[0].mxu0
  %421 = vmatprep.mubr.f32.mxu0 0.0
  %422 = vmatmul.mubr.f32.gmra.mrb[0].mxu0 %v245
  %v423 = vpop.f32.mrb[0].mxu0
  %v424 = vadd.f32 %v190, %v423
  %v425 = vpop.f32.mrb[0].mxu0
  %426 = vmatprep.mubr.f32.mxu0 0.0
  %427 = vmatmul.mubr.f32.gmra.mrb[0].mxu0 %v248
  %v428 = vpop.f32.mrb[0].mxu0
  %v429 = vadd.f32 %v190, %v428
  %v430 = vpop.f32.mrb[0].mxu0
  %431 = vmatprep.mubr.f32.mxu0 0.0
  %432 = vmatmul.mubr.f32.gmra.mrb[0].mxu0 %v251
  %v433 = vpop.f32.mrb[0].mxu0
  %v434 = vadd.f32 %v190, %v433
  %v435 = vpop.f32.mrb[0].mxu0
  %436 = vmatprep.mubr.f32.mxu0 0.0
  %437 = vmatmul.mubr.f32.gmra.mrb[0].mxu0 %v254
  %v438 = vpop.f32.mrb[0].mxu0
  %v439 = vadd.f32 %v190, %v438
  %v440 = vpop.f32.mrb[0].mxu0
  %441 = vmatprep.mubr.f32.mxu0 0.0
  %442 = vmatmul.mubr.f32.gmra.mrb[0].mxu0 %v257
  %v443 = vpop.f32.mrb[0].mxu0
  %v444 = vadd.f32 %v190, %v443
  %v445 = vpop.f32.mrb[0].mxu0
  %446 = vmatprep.mubr.f32.mxu0 0.0
  %447 = vmatmul.mubr.f32.gmra.mrb[0].mxu0 %v260
  %v448 = vpop.f32.mrb[0].mxu0
  %v449 = vadd.f32 %v190, %v448
  %v450 = vpop.f32.mrb[0].mxu0
  %451 = vmatprep.mubr.f32.mxu0 0.0
  %452 = vmatmul.mubr.f32.gmra.mrb[0].mxu0 %v263
  %v453 = vpop.f32.mrb[0].mxu0
  %v454 = vadd.f32 %v190, %v453
  %v455 = vpop.f32.mrb[0].mxu0
  %456 = vmatprep.mubr.f32.mxu0 0.0
  %457 = vmatmul.mubr.f32.gmra.mrb[0].mxu0 %v266
  %v458 = vpop.f32.mrb[0].mxu0
  %v459 = vadd.f32 %v190, %v458
  %v460 = vpop.f32.mrb[0].mxu0
  %461 = vdwg.mxu0
  %v462 = vmax.f32 %v339, 0.0
  %v463 = vmax.f32 %v344, 0.0
  %v464 = vmax.f32 %v349, 0.0
  %v465 = vmax.f32 %v354, 0.0
  %v466 = vmax.f32 %v359, 0.0
  %v467 = vmax.f32 %v364, 0.0
  %v468 = vmax.f32 %v369, 0.0
  %v469 = vmax.f32 %v374, 0.0
  %v470 = vmax.f32 %v379, 0.0
  %v471 = vmax.f32 %v384, 0.0
  %v472 = vmax.f32 %v389, 0.0
  %v473 = vmax.f32 %v394, 0.0
  %v474 = vmax.f32 %v399, 0.0
  %v475 = vmax.f32 %v404, 0.0
  %v476 = vmax.f32 %v409, 0.0
  %v477 = vmax.f32 %v414, 0.0
  %v478 = vmax.f32 %v419, 0.0
  %v479 = vmax.f32 %v424, 0.0
  %v480 = vmax.f32 %v429, 0.0
  %v481 = vmax.f32 %v434, 0.0
  %v482 = vmax.f32 %v439, 0.0
  %v483 = vmax.f32 %v444, 0.0
  %v484 = vmax.f32 %v449, 0.0
  %v485 = vmax.f32 %v454, 0.0
  %v486 = vmax.f32 %v459, 0.0
  %vm487 = vcmask 523264
  %488 = vst.msk [vmem:[#allocation2] sm:$0xff] %vm487, %v462
  %489 = vst.msk [vmem:[#allocation2 + $0x8] sm:$0xff] %vm487, %v463
  %490 = vst.msk [vmem:[#allocation2 + $0x10] sm:$0xff] %vm487, %v464
  %491 = vst.msk [vmem:[#allocation2 + $0x18] sm:$0xff] %vm487, %v465
  %492 = vst.msk [vmem:[#allocation2 + $0x20] sm:$0xff] %vm487, %v466
  %493 = vst.msk [vmem:[#allocation2 + $0x28] sm:$0xff] %vm487, %v467
  %494 = vst.msk [vmem:[#allocation2 + $0x30] sm:$0xff] %vm487, %v468
  %495 = vst.msk [vmem:[#allocation2 + $0x38] sm:$0xff] %vm487, %v469
  %496 = vst.msk [vmem:[#allocation2 + $0x40] sm:$0xff] %vm487, %v470
  %497 = vst.msk [vmem:[#allocation2 + $0x48] sm:$0xff] %vm487, %v471
  %498 = vst.msk [vmem:[#allocation2 + $0x50] sm:$0xff] %vm487, %v472
  %499 = vst.msk [vmem:[#allocation2 + $0x58] sm:$0xff] %vm487, %v473
  %500 = vst.msk [vmem:[#allocation2 + $0x60] sm:$0xff] %vm487, %v474
  %501 = vst.msk [vmem:[#allocation2 + $0x68] sm:$0xff] %vm487, %v475
  %502 = vst.msk [vmem:[#allocation2 + $0x70] sm:$0xff] %vm487, %v476
  %503 = vst.msk [vmem:[#allocation2 + $0x78] sm:$0xff] %vm487, %v477
  %504 = vst.msk [vmem:[#allocation2 + $0x80] sm:$0xff] %vm487, %v478
  %505 = vst.msk [vmem:[#allocation2 + $0x88] sm:$0xff] %vm487, %v479
  %506 = vst.msk [vmem:[#allocation2 + $0x90] sm:$0xff] %vm487, %v480
  %507 = vst.msk [vmem:[#allocation2 + $0x98] sm:$0xff] %vm487, %v481
  %508 = vst.msk [vmem:[#allocation2 + $0xa0] sm:$0xff] %vm487, %v482
  %509 = vst.msk [vmem:[#allocation2 + $0xa8] sm:$0xff] %vm487, %v483
  %510 = vst.msk [vmem:[#allocation2 + $0xb0] sm:$0xff] %vm487, %v484
  %511 = vst.msk [vmem:[#allocation2 + $0xb8] sm:$0xff] %vm487, %v485
  %512 = vst.msk [vmem:[#allocation2 + $0xc0] sm:$0xff] %vm487, %v486
  %v513 = vld [vmem:[%s3] sm:$0xf]
  %v514 = vld [vmem:[%s3 + $0x4] sm:$0xf]
  %v515 = vld [vmem:[%s3 + $0x8] sm:$0xf]
  %v516 = vld [vmem:[%s3 + $0xc] sm:$0xf]
  %v517 = vld [vmem:[%s3 + $0x10] sm:$0xf]
  %v518 = vld [vmem:[%s3 + $0x14] sm:$0xf]
  %v519 = vld [vmem:[%s3 + $0x18] sm:$0xf]
  %v520 = vld [vmem:[%s3 + $0x1c] sm:$0xf]
  %v521 = vld [vmem:[%s3 + $0x20] sm:$0xf]
  %v522 = vld [vmem:[%s3 + $0x24] sm:$0xf]
  %v523 = vld [vmem:[%s3 + $0x28] sm:$0xf]
  %v524 = vld [vmem:[%s3 + $0x2c] sm:$0xf]
  %v525 = vld [vmem:[%s3 + $0x30] sm:$0xf]
  %v526 = vld [vmem:[%s3 + $0x34] sm:$0xf]
  %v527 = vld [vmem:[%s3 + $0x38] sm:$0xf]
  %v528 = vld [vmem:[%s3 + $0x3c] sm:$0xf]
  %v529 = vld [vmem:[%s3 + $0x40] sm:$0xf]
  %v530 = vld [vmem:[%s3 + $0x44] sm:$0xf]
  %v531 = vld [vmem:[%s3 + $0x48] sm:$0xf]
  %v532 = vld [vmem:[%s3 + $0x4c] sm:$0xf]
  %v533 = vld [vmem:[%s3 + $0x50] sm:$0xf]
  %v534 = vld [vmem:[%s3 + $0x54] sm:$0xf]
  %v535 = vld [vmem:[%s3 + $0x58] sm:$0xf]
  %v536 = vld [vmem:[%s3 + $0x5c] sm:$0xf]
  %v537 = vld [vmem:[%s3 + $0x60] sm:$0xf]
  %v538 = vld [vmem:[%s3 + $0x64] sm:$0xf]
  %v539 = vld [vmem:[%s3 + $0x68] sm:$0xf]
  %v540 = vld [vmem:[%s3 + $0x6c] sm:$0xf]
  %v541 = vld [vmem:[%s3 + $0x70] sm:$0xf]
  %v542 = vld [vmem:[%s3 + $0x74] sm:$0xf]
  %v543 = vld [vmem:[%s3 + $0x78] sm:$0xf]
  %v544 = vld [vmem:[%s3 + $0x7c] sm:$0xf]
  %v545 = vld [vmem:[%s3 + $0x80] sm:$0xf]
  %v546 = vld [vmem:[%s3 + $0x84] sm:$0xf]
  %v547 = vld [vmem:[%s3 + $0x88] sm:$0xf]
  %v548 = vld [vmem:[%s3 + $0x8c] sm:$0xf]
  %v549 = vld [vmem:[%s3 + $0x90] sm:$0xf]
  %v550 = vld [vmem:[%s3 + $0x94] sm:$0xf]
  %v551 = vld [vmem:[%s3 + $0x98] sm:$0xf]
  %v552 = vld [vmem:[%s3 + $0x9c] sm:$0xf]
  %v553 = vld [vmem:[%s3 + $0xa0] sm:$0xf]
  %v554 = vld [vmem:[%s3 + $0xa4] sm:$0xf]
  %v555 = vld [vmem:[%s3 + $0xa8] sm:$0xf]
  %v556 = vld [vmem:[%s3 + $0xac] sm:$0xf]
  %v557 = vld [vmem:[%s3 + $0xb0] sm:$0xf]
  %v558 = vld [vmem:[%s3 + $0xb4] sm:$0xf]
  %v559 = vld [vmem:[%s3 + $0xb8] sm:$0xf]
  %v560 = vld [vmem:[%s3 + $0xbc] sm:$0xf]
  %v561 = vld [vmem:[%s3 + $0xc0] sm:$0xf]
  %v562 = vld [vmem:[%s3 + $0xc4] sm:$0xf]
  %v563 = vld [vmem:[%s3 + $0xc8] sm:$0xf]
  %v564 = vld [vmem:[%s3 + $0xcc] sm:$0xf]
  %v565 = vld [vmem:[%s3 + $0xd0] sm:$0xf]
  %v566 = vld [vmem:[%s3 + $0xd4] sm:$0xf]
  %v567 = vld [vmem:[%s3 + $0xd8] sm:$0xf]
  %v568 = vld [vmem:[%s3 + $0xdc] sm:$0xf]
  %v569 = vld [vmem:[%s3 + $0xe0] sm:$0xf]
  %v570 = vld [vmem:[%s3 + $0xe4] sm:$0xf]
  %v571 = vld [vmem:[%s3 + $0xe8] sm:$0xf]
  %v572 = vld [vmem:[%s3 + $0xec] sm:$0xf]
  %v573 = vld [vmem:[%s3 + $0xf0] sm:$0xf]
  %v574 = vld [vmem:[%s3 + $0xf4] sm:$0xf]
  %v575 = vld [vmem:[%s3 + $0xf8] sm:$0xf]
  %v576 = vld [vmem:[%s3 + $0xfc] sm:$0xf]
  %v577 = vld [vmem:[%s3 + $0x100] sm:$0xf]
  %v578 = vld [vmem:[%s3 + $0x104] sm:$0xf]
  %v579 = vld [vmem:[%s3 + $0x108] sm:$0xf]
  %v580 = vld [vmem:[%s3 + $0x10c] sm:$0xf]
  %v581 = vld [vmem:[%s3 + $0x110] sm:$0xf]
  %v582 = vld [vmem:[%s3 + $0x114] sm:$0xf]
  %v583 = vld [vmem:[%s3 + $0x118] sm:$0xf]
  %v584 = vld [vmem:[%s3 + $0x11c] sm:$0xf]
  %v585 = vunpack.c.l.bf16 %v513
  %v586 = vunpack.c.l.bf16 %v514
  %v587 = vunpack.c.l.bf16 %v515
  %v588 = vunpack.c.l.bf16 %v516
  %v589 = vunpack.c.l.bf16 %v517
  %v590 = vunpack.c.l.bf16 %v518
  %v591 = vunpack.c.l.bf16 %v519
  %v592 = vunpack.c.l.bf16 %v520
  %v593 = vunpack.c.l.bf16 %v521
  %v594 = vunpack.c.l.bf16 %v522
  %v595 = vunpack.c.l.bf16 %v523
  %v596 = vunpack.c.l.bf16 %v524
  %v597 = vunpack.c.l.bf16 %v525
  %v598 = vunpack.c.l.bf16 %v526
  %v599 = vunpack.c.l.bf16 %v527
  %v600 = vunpack.c.l.bf16 %v528
  %v601 = vunpack.c.l.bf16 %v529
  %v602 = vunpack.c.l.bf16 %v530
  %v603 = vunpack.c.l.bf16 %v531
  %v604 = vunpack.c.l.bf16 %v532
  %v605 = vunpack.c.l.bf16 %v533
  %v606 = vunpack.c.l.bf16 %v534
  %v607 = vunpack.c.l.bf16 %v535
  %v608 = vunpack.c.l.bf16 %v536
  %v609 = vunpack.c.l.bf16 %v537
  %v610 = vunpack.c.l.bf16 %v538
  %v611 = vunpack.c.l.bf16 %v539
  %v612 = vunpack.c.l.bf16 %v540
  %v613 = vunpack.c.l.bf16 %v541
  %v614 = vunpack.c.l.bf16 %v542
  %v615 = vunpack.c.l.bf16 %v543
  %v616 = vunpack.c.l.bf16 %v544
  %v617 = vunpack.c.l.bf16 %v545
  %v618 = vunpack.c.l.bf16 %v546
  %v619 = vunpack.c.l.bf16 %v547
  %v620 = vunpack.c.l.bf16 %v548
  %v621 = vunpack.c.l.bf16 %v549
  %v622 = vunpack.c.l.bf16 %v550
  %v623 = vunpack.c.l.bf16 %v551
  %v624 = vunpack.c.l.bf16 %v552
  %v625 = vunpack.c.l.bf16 %v553
  %v626 = vunpack.c.l.bf16 %v554
  %v627 = vunpack.c.l.bf16 %v555
  %v628 = vunpack.c.l.bf16 %v556
  %v629 = vunpack.c.l.bf16 %v557
  %v630 = vunpack.c.l.bf16 %v558
  %v631 = vunpack.c.l.bf16 %v559
  %v632 = vunpack.c.l.bf16 %v560
  %v633 = vunpack.c.l.bf16 %v561
  %v634 = vunpack.c.l.bf16 %v562
  %v635 = vunpack.c.l.bf16 %v563
  %v636 = vunpack.c.l.bf16 %v564
  %v637 = vunpack.c.l.bf16 %v565
  %v638 = vunpack.c.l.bf16 %v566
  %v639 = vunpack.c.l.bf16 %v567
  %v640 = vunpack.c.l.bf16 %v568
  %v641 = vunpack.c.l.bf16 %v569
  %v642 = vunpack.c.l.bf16 %v570
  %v643 = vunpack.c.l.bf16 %v571
  %v644 = vunpack.c.l.bf16 %v572
  %v645 = vunpack.c.l.bf16 %v573
  %v646 = vunpack.c.l.bf16 %v574
  %v647 = vunpack.c.l.bf16 %v575
  %v648 = vunpack.c.l.bf16 %v576
  %v649 = vunpack.c.l.bf16 %v577
  %v650 = vunpack.c.l.bf16 %v578
  %v651 = vunpack.c.l.bf16 %v579
  %v652 = vunpack.c.l.bf16 %v580
  %v653 = vunpack.c.l.bf16 %v581
  %v654 = vunpack.c.l.bf16 %v582
  %v655 = vunpack.c.l.bf16 %v583
  %v656 = vunpack.c.l.bf16 %v584
  %v657 = vld [vmem:[%s4] sm:$0x1]
  %v658 = vld [vmem:[#allocation2] sm:$0xff]
  %v659 = vld [vmem:[#allocation2 + $0x8] sm:$0xff]
  %v660 = vld [vmem:[#allocation2 + $0x10] sm:$0xff]
  %v661 = vld [vmem:[#allocation2 + $0x18] sm:$0xff]
  %v662 = vld [vmem:[#allocation2 + $0x20] sm:$0xff]
  %v663 = vld [vmem:[#allocation2 + $0x28] sm:$0xff]
  %v664 = vld [vmem:[#allocation2 + $0x30] sm:$0xff]
  %v665 = vld [vmem:[#allocation2 + $0x38] sm:$0xff]
  %v666 = vld [vmem:[#allocation2 + $0x40] sm:$0xff]
  %v667 = vld [vmem:[#allocation2 + $0x48] sm:$0xff]
  %v668 = vld [vmem:[#allocation2 + $0x50] sm:$0xff]
  %v669 = vld [vmem:[#allocation2 + $0x58] sm:$0xff]
  %v670 = vld [vmem:[#allocation2 + $0x60] sm:$0xff]
  %v671 = vld [vmem:[#allocation2 + $0x68] sm:$0xff]
  %v672 = vld [vmem:[#allocation2 + $0x70] sm:$0xff]
  %v673 = vld [vmem:[#allocation2 + $0x78] sm:$0xff]
  %v674 = vld [vmem:[#allocation2 + $0x80] sm:$0xff]
  %v675 = vld [vmem:[#allocation2 + $0x88] sm:$0xff]
  %v676 = vld [vmem:[#allocation2 + $0x90] sm:$0xff]
  %v677 = vld [vmem:[#allocation2 + $0x98] sm:$0xff]
  %v678 = vld [vmem:[#allocation2 + $0xa0] sm:$0xff]
  %v679 = vld [vmem:[#allocation2 + $0xa8] sm:$0xff]
  %680 = vst.msk [vmem:[#allocation4] sm:$0xff] %vm487, %v658
  %681 = vst.msk [vmem:[#allocation4 + $0x28] sm:$0xff] %vm487, %v659
  %682 = vst.msk [vmem:[#allocation4 + $0x50] sm:$0xff] %vm487, %v660
  %683 = vst.msk [vmem:[#allocation4 + $0x78] sm:$0xff] %vm487, %v661
  %684 = vst.msk [vmem:[#allocation4 + $0xa0] sm:$0xff] %vm487, %v662
  %685 = vst.msk [vmem:[#allocation4 + $0xc8] sm:$0xff] %vm487, %v663
  %686 = vst.msk [vmem:[#allocation4 + $0xf0] sm:$0xff] %vm487, %v664
  %687 = vst.msk [vmem:[#allocation4 + $0x118] sm:$0xff] %vm487, %v665
  %688 = vst.msk [vmem:[#allocation4 + $0x140] sm:$0xff] %vm487, %v666
  %689 = vst.msk [vmem:[#allocation4 + $0x168] sm:$0xff] %vm487, %v667
  %690 = vst.msk [vmem:[#allocation4 + $0x190] sm:$0xff] %vm487, %v668
  %691 = vst.msk [vmem:[#allocation4 + $0x1b8] sm:$0xff] %vm487, %v669
  %692 = vst.msk [vmem:[#allocation4 + $0x1e0] sm:$0xff] %vm487, %v670
  %693 = vst.msk [vmem:[#allocation4 + $0x208] sm:$0xff] %vm487, %v671
  %694 = vst.msk [vmem:[#allocation4 + $0x230] sm:$0xff] %vm487, %v672
  %695 = vst.msk [vmem:[#allocation4 + $0x258] sm:$0xff] %vm487, %v673
  %696 = vst.msk [vmem:[#allocation4 + $0x280] sm:$0xff] %vm487, %v674
  %697 = vst.msk [vmem:[#allocation4 + $0x2a8] sm:$0xff] %vm487, %v675
  %698 = vst.msk [vmem:[#allocation4 + $0x2d0] sm:$0xff] %vm487, %v676
  %699 = vst.msk [vmem:[#allocation4 + $0x2f8] sm:$0xff] %vm487, %v677
  %700 = vst.msk [vmem:[#allocation4 + $0x320] sm:$0xff] %vm487, %v678
  %701 = vst.msk [vmem:[#allocation4 + $0x348] sm:$0xff] %vm487, %v679
  %v702 = vld [vmem:[#allocation2 + $0x1] sm:$0xff]
  %v703 = vld [vmem:[#allocation2 + $0x9] sm:$0xff]
  %v704 = vld [vmem:[#allocation2 + $0x11] sm:$0xff]
  %v705 = vld [vmem:[#allocation2 + $0x19] sm:$0xff]
  %v706 = vld [vmem:[#allocation2 + $0x21] sm:$0xff]
  %v707 = vld [vmem:[#allocation2 + $0x29] sm:$0xff]
  %v708 = vld [vmem:[#allocation2 + $0x31] sm:$0xff]
  %v709 = vld [vmem:[#allocation2 + $0x39] sm:$0xff]
  %v710 = vld [vmem:[#allocation2 + $0x41] sm:$0xff]
  %v711 = vld [vmem:[#allocation2 + $0x49] sm:$0xff]
  %v712 = vld [vmem:[#allocation2 + $0x51] sm:$0xff]
  %v713 = vld [vmem:[#allocation2 + $0x59] sm:$0xff]
  %v714 = vld [vmem:[#allocation2 + $0x61] sm:$0xff]
  %v715 = vld [vmem:[#allocation2 + $0x69] sm:$0xff]
  %v716 = vld [vmem:[#allocation2 + $0x71] sm:$0xff]
  %v717 = vld [vmem:[#allocation2 + $0x79] sm:$0xff]
  %v718 = vld [vmem:[#allocation2 + $0x81] sm:$0xff]
  %v719 = vld [vmem:[#allocation2 + $0x89] sm:$0xff]
  %v720 = vld [vmem:[#allocation2 + $0x91] sm:$0xff]
  %v721 = vld [vmem:[#allocation2 + $0x99] sm:$0xff]
  %v722 = vld [vmem:[#allocation2 + $0xa1] sm:$0xff]
  %v723 = vld [vmem:[#allocation2 + $0xa9] sm:$0xff]
  %746 = vrot.lane.b32.xlu0 %v702, 64
  %v747 = vpop.permute.xlu0 %746
  %748 = vrot.lane.b32.xlu0 %v703, 64
  %v749 = vpop.permute.xlu0 %748
  %750 = vrot.lane.b32.xlu0 %v704, 64
  %v751 = vpop.permute.xlu0 %750
  %752 = vrot.lane.b32.xlu0 %v705, 64
  %v753 = vpop.permute.xlu0 %752
  %754 = vrot.lane.b32.xlu0 %v706, 64
  %v755 = vpop.permute.xlu0 %754
  %756 = vrot.lane.b32.xlu0 %v707, 64
  %v757 = vpop.permute.xlu0 %756
  %758 = vrot.lane.b32.xlu0 %v708, 64
  %v759 = vpop.permute.xlu0 %758
  %760 = vrot.lane.b32.xlu0 %v709, 64
  %v761 = vpop.permute.xlu0 %760
  %762 = vrot.lane.b32.xlu0 %v710, 64
  %v763 = vpop.permute.xlu0 %762
  %764 = vrot.lane.b32.xlu0 %v711, 64
  %v765 = vpop.permute.xlu0 %764
  %766 = vrot.lane.b32.xlu0 %v712, 64
  %v767 = vpop.permute.xlu0 %766
  %768 = vrot.lane.b32.xlu0 %v713, 64
  %v769 = vpop.permute.xlu0 %768
  %770 = vrot.lane.b32.xlu0 %v714, 64
  %v771 = vpop.permute.xlu0 %770
  %772 = vrot.lane.b32.xlu0 %v715, 64
  %v773 = vpop.permute.xlu0 %772
  %774 = vrot.lane.b32.xlu0 %v716, 64
  %v775 = vpop.permute.xlu0 %774
  %776 = vrot.lane.b32.xlu0 %v717, 64
  %v777 = vpop.permute.xlu0 %776
  %778 = vrot.lane.b32.xlu0 %v718, 64
  %v779 = vpop.permute.xlu0 %778
  %780 = vrot.lane.b32.xlu0 %v719, 64
  %v781 = vpop.permute.xlu0 %780
  %782 = vrot.lane.b32.xlu0 %v720, 64
  %v783 = vpop.permute.xlu0 %782
  %784 = vrot.lane.b32.xlu0 %v721, 64
  %v785 = vpop.permute.xlu0 %784
  %786 = vrot.lane.b32.xlu0 %v722, 64
  %v787 = vpop.permute.xlu0 %786
  %788 = vrot.lane.b32.xlu0 %v723, 64
  %v789 = vpop.permute.xlu0 %788
  %vm812 = vcmask 1048064
  %813 = vst.msk [vmem:[#allocation4] sm:$0xff] %vm812, %v747
  %814 = vst.msk [vmem:[#allocation4 + $0x28] sm:$0xff] %vm812, %v749
  %815 = vst.msk [vmem:[#allocation4 + $0x50] sm:$0xff] %vm812, %v751
  %816 = vst.msk [vmem:[#allocation4 + $0x78] sm:$0xff] %vm812, %v753
  %817 = vst.msk [vmem:[#allocation4 + $0xa0] sm:$0xff] %vm812, %v755
  %818 = vst.msk [vmem:[#allocation4 + $0xc8] sm:$0xff] %vm812, %v757
  %819 = vst.msk [vmem:[#allocation4 + $0xf0] sm:$0xff] %vm812, %v759
  %820 = vst.msk [vmem:[#allocation4 + $0x118] sm:$0xff] %vm812, %v761
  %821 = vst.msk [vmem:[#allocation4 + $0x140] sm:$0xff] %vm812, %v763
  %822 = vst.msk [vmem:[#allocation4 + $0x168] sm:$0xff] %vm812, %v765
  %823 = vst.msk [vmem:[#allocation4 + $0x190] sm:$0xff] %vm812, %v767
  %824 = vst.msk [vmem:[#allocation4 + $0x1b8] sm:$0xff] %vm812, %v769
  %825 = vst.msk [vmem:[#allocation4 + $0x1e0] sm:$0xff] %vm812, %v771
  %826 = vst.msk [vmem:[#allocation4 + $0x208] sm:$0xff] %vm812, %v773
  %827 = vst.msk [vmem:[#allocation4 + $0x230] sm:$0xff] %vm812, %v775
  %828 = vst.msk [vmem:[#allocation4 + $0x258] sm:$0xff] %vm812, %v777
  %829 = vst.msk [vmem:[#allocation4 + $0x280] sm:$0xff] %vm812, %v779
  %830 = vst.msk [vmem:[#allocation4 + $0x2a8] sm:$0xff] %vm812, %v781
  %831 = vst.msk [vmem:[#allocation4 + $0x2d0] sm:$0xff] %vm812, %v783
  %832 = vst.msk [vmem:[#allocation4 + $0x2f8] sm:$0xff] %vm812, %v785
  %833 = vst.msk [vmem:[#allocation4 + $0x320] sm:$0xff] %vm812, %v787
  %834 = vst.msk [vmem:[#allocation4 + $0x348] sm:$0xff] %vm812, %v789
  %v835 = vld [vmem:[#allocation2 + $0x2] sm:$0xff]
  %v836 = vld [vmem:[#allocation2 + $0xa] sm:$0xff]
  %v837 = vld [vmem:[#allocation2 + $0x12] sm:$0xff]
  %v838 = vld [vmem:[#allocation2 + $0x1a] sm:$0xff]
  %v839 = vld [vmem:[#allocation2 + $0x22] sm:$0xff]
  %v840 = vld [vmem:[#allocation2 + $0x2a] sm:$0xff]
  %v841 = vld [vmem:[#allocation2 + $0x32] sm:$0xff]
  %v842 = vld [vmem:[#allocation2 + $0x3a] sm:$0xff]
  %v843 = vld [vmem:[#allocation2 + $0x42] sm:$0xff]
  %v844 = vld [vmem:[#allocation2 + $0x4a] sm:$0xff]
  %v845 = vld [vmem:[#allocation2 + $0x52] sm:$0xff]
  %v846 = vld [vmem:[#allocation2 + $0x5a] sm:$0xff]
  %v847 = vld [vmem:[#allocation2 + $0x62] sm:$0xff]
  %v848 = vld [vmem:[#allocation2 + $0x6a] sm:$0xff]
  %v849 = vld [vmem:[#allocation2 + $0x72] sm:$0xff]
  %v850 = vld [vmem:[#allocation2 + $0x7a] sm:$0xff]
  %v851 = vld [vmem:[#allocation2 + $0x82] sm:$0xff]
  %v852 = vld [vmem:[#allocation2 + $0x8a] sm:$0xff]
  %v853 = vld [vmem:[#allocation2 + $0x92] sm:$0xff]
  %v854 = vld [vmem:[#allocation2 + $0x9a] sm:$0xff]
  %v855 = vld [vmem:[#allocation2 + $0xa2] sm:$0xff]
  %v856 = vld [vmem:[#allocation2 + $0xaa] sm:$0xff]
  %857 = vst.msk [vmem:[#allocation4 + $0x8] sm:$0xff] %vm487, %v835
  %858 = vst.msk [vmem:[#allocation4 + $0x30] sm:$0xff] %vm487, %v836
  %859 = vst.msk [vmem:[#allocation4 + $0x58] sm:$0xff] %vm487, %v837
  %860 = vst.msk [vmem:[#allocation4 + $0x80] sm:$0xff] %vm487, %v838
  %861 = vst.msk [vmem:[#allocation4 + $0xa8] sm:$0xff] %vm487, %v839
  %862 = vst.msk [vmem:[#allocation4 + $0xd0] sm:$0xff] %vm487, %v840
  %863 = vst.msk [vmem:[#allocation4 + $0xf8] sm:$0xff] %vm487, %v841
  %864 = vst.msk [vmem:[#allocation4 + $0x120] sm:$0xff] %vm487, %v842
  %865 = vst.msk [vmem:[#allocation4 + $0x148] sm:$0xff] %vm487, %v843
  %866 = vst.msk [vmem:[#allocation4 + $0x170] sm:$0xff] %vm487, %v844
  %867 = vst.msk [vmem:[#allocation4 + $0x198] sm:$0xff] %vm487, %v845
  %868 = vst.msk [vmem:[#allocation4 + $0x1c0] sm:$0xff] %vm487, %v846
  %869 = vst.msk [vmem:[#allocation4 + $0x1e8] sm:$0xff] %vm487, %v847
  %870 = vst.msk [vmem:[#allocation4 + $0x210] sm:$0xff] %vm487, %v848
  %871 = vst.msk [vmem:[#allocation4 + $0x238] sm:$0xff] %vm487, %v849
  %872 = vst.msk [vmem:[#allocation4 + $0x260] sm:$0xff] %vm487, %v850
  %873 = vst.msk [vmem:[#allocation4 + $0x288] sm:$0xff] %vm487, %v851
  %874 = vst.msk [vmem:[#allocation4 + $0x2b0] sm:$0xff] %vm487, %v852
  %875 = vst.msk [vmem:[#allocation4 + $0x2d8] sm:$0xff] %vm487, %v853
  %876 = vst.msk [vmem:[#allocation4 + $0x300] sm:$0xff] %vm487, %v854
  %877 = vst.msk [vmem:[#allocation4 + $0x328] sm:$0xff] %vm487, %v855
  %878 = vst.msk [vmem:[#allocation4 + $0x350] sm:$0xff] %vm487, %v856
  %v879 = vld [vmem:[#allocation2 + $0xa] sm:$0xff]
  %v880 = vld [vmem:[#allocation2 + $0x12] sm:$0xff]
  %v881 = vld [vmem:[#allocation2 + $0x1a] sm:$0xff]
  %v882 = vld [vmem:[#allocation2 + $0x22] sm:$0xff]
  %v883 = vld [vmem:[#allocation2 + $0x2a] sm:$0xff]
  %v884 = vld [vmem:[#allocation2 + $0x32] sm:$0xff]
  %v885 = vld [vmem:[#allocation2 + $0x3a] sm:$0xff]
  %v886 = vld [vmem:[#allocation2 + $0x42] sm:$0xff]
  %v887 = vld [vmem:[#allocation2 + $0x4a] sm:$0xff]
  %v888 = vld [vmem:[#allocation2 + $0x52] sm:$0xff]
  %v889 = vld [vmem:[#allocation2 + $0x5a] sm:$0xff]
  %v890 = vld [vmem:[#allocation2 + $0x62] sm:$0xff]
  %v891 = vld [vmem:[#allocation2 + $0x6a] sm:$0xff]
  %v892 = vld [vmem:[#allocation2 + $0x72] sm:$0xff]
  %v893 = vld [vmem:[#allocation2 + $0x7a] sm:$0xff]
  %v894 = vld [vmem:[#allocation2 + $0x82] sm:$0xff]
  %v895 = vld [vmem:[#allocation2 + $0x8a] sm:$0xff]
  %v896 = vld [vmem:[#allocation2 + $0x92] sm:$0xff]
  %v897 = vld [vmem:[#allocation2 + $0x9a] sm:$0xff]
  %v898 = vld [vmem:[#allocation2 + $0xa2] sm:$0xff]
  %v899 = vld [vmem:[#allocation2 + $0xaa] sm:$0xff]
  %v900 = vld [vmem:[#allocation2 + $0xb2] sm:$0xff]
  %923 = vrot.lane.b32.xlu0 %v879, 64
  %v924 = vpop.permute.xlu0 %923
  %925 = vrot.lane.b32.xlu0 %v880, 64
  %v926 = vpop.permute.xlu0 %925
  %927 = vrot.lane.b32.xlu0 %v881, 64
  %v928 = vpop.permute.xlu0 %927
  %929 = vrot.lane.b32.xlu0 %v882, 64
  %v930 = vpop.permute.xlu0 %929
  %931 = vrot.lane.b32.xlu0 %v883, 64
  %v932 = vpop.permute.xlu0 %931
  %933 = vrot.lane.b32.xlu0 %v884, 64
  %v934 = vpop.permute.xlu0 %933
  %935 = vrot.lane.b32.xlu0 %v885, 64
  %v936 = vpop.permute.xlu0 %935
  %937 = vrot.lane.b32.xlu0 %v886, 64
  %v938 = vpop.permute.xlu0 %937
  %939 = vrot.lane.b32.xlu0 %v887, 64
  %v940 = vpop.permute.xlu0 %939
  %941 = vrot.lane.b32.xlu0 %v888, 64
  %v942 = vpop.permute.xlu0 %941
  %943 = vrot.lane.b32.xlu0 %v889, 64
  %v944 = vpop.permute.xlu0 %943
  %945 = vrot.lane.b32.xlu0 %v890, 64
  %v946 = vpop.permute.xlu0 %945
  %947 = vrot.lane.b32.xlu0 %v891, 64
  %v948 = vpop.permute.xlu0 %947
  %949 = vrot.lane.b32.xlu0 %v892, 64
  %v950 = vpop.permute.xlu0 %949
  %951 = vrot.lane.b32.xlu0 %v893, 64
  %v952 = vpop.permute.xlu0 %951
  %953 = vrot.lane.b32.xlu0 %v894, 64
  %v954 = vpop.permute.xlu0 %953
  %955 = vrot.lane.b32.xlu0 %v895, 64
  %v956 = vpop.permute.xlu0 %955
  %957 = vrot.lane.b32.xlu0 %v896, 64
  %v958 = vpop.permute.xlu0 %957
  %959 = vrot.lane.b32.xlu0 %v897, 64
  %v960 = vpop.permute.xlu0 %959
  %961 = vrot.lane.b32.xlu0 %v898, 64
  %v962 = vpop.permute.xlu0 %961
  %963 = vrot.lane.b32.xlu0 %v899, 64
  %v964 = vpop.permute.xlu0 %963
  %965 = vrot.lane.b32.xlu0 %v900, 64
  %v966 = vpop.permute.xlu0 %965
  %989 = vst.msk [vmem:[#allocation4 + $0x8] sm:$0xff] %vm812, %v924
  %990 = vst.msk [vmem:[#allocation4 + $0x30] sm:$0xff] %vm812, %v926
  %991 = vst.msk [vmem:[#allocation4 + $0x58] sm:$0xff] %vm812, %v928
  %992 = vst.msk [vmem:[#allocation4 + $0x80] sm:$0xff] %vm812, %v930
  %993 = vst.msk [vmem:[#allocation4 + $0xa8] sm:$0xff] %vm812, %v932
  %994 = vst.msk [vmem:[#allocation4 + $0xd0] sm:$0xff] %vm812, %v934
  %995 = vst.msk [vmem:[#allocation4 + $0xf8] sm:$0xff] %vm812, %v936
  %996 = vst.msk [vmem:[#allocation4 + $0x120] sm:$0xff] %vm812, %v938
  %997 = vst.msk [vmem:[#allocation4 + $0x148] sm:$0xff] %vm812, %v940
  %998 = vst.msk [vmem:[#allocation4 + $0x170] sm:$0xff] %vm812, %v942
  %999 = vst.msk [vmem:[#allocation4 + $0x198] sm:$0xff] %vm812, %v944
  %1000 = vst.msk [vmem:[#allocation4 + $0x1c0] sm:$0xff] %vm812, %v946
  %1001 = vst.msk [vmem:[#allocation4 + $0x1e8] sm:$0xff] %vm812, %v948
  %1002 = vst.msk [vmem:[#allocation4 + $0x210] sm:$0xff] %vm812, %v950
  %1003 = vst.msk [vmem:[#allocation4 + $0x238] sm:$0xff] %vm812, %v952
  %1004 = vst.msk [vmem:[#allocation4 + $0x260] sm:$0xff] %vm812, %v954
  %1005 = vst.msk [vmem:[#allocation4 + $0x288] sm:$0xff] %vm812, %v956
  %1006 = vst.msk [vmem:[#allocation4 + $0x2b0] sm:$0xff] %vm812, %v958
  %1007 = vst.msk [vmem:[#allocation4 + $0x2d8] sm:$0xff] %vm812, %v960
  %1008 = vst.msk [vmem:[#allocation4 + $0x300] sm:$0xff] %vm812, %v962
  %1009 = vst.msk [vmem:[#allocation4 + $0x328] sm:$0xff] %vm812, %v964
  %1010 = vst.msk [vmem:[#allocation4 + $0x350] sm:$0xff] %vm812, %v966
  %v1011 = vld [vmem:[#allocation2 + $0xb] sm:$0xff]
  %v1012 = vld [vmem:[#allocation2 + $0x13] sm:$0xff]
  %v1013 = vld [vmem:[#allocation2 + $0x1b] sm:$0xff]
  %v1014 = vld [vmem:[#allocation2 + $0x23] sm:$0xff]
  %v1015 = vld [vmem:[#allocation2 + $0x2b] sm:$0xff]
  %v1016 = vld [vmem:[#allocation2 + $0x33] sm:$0xff]
  %v1017 = vld [vmem:[#allocation2 + $0x3b] sm:$0xff]
  %v1018 = vld [vmem:[#allocation2 + $0x43] sm:$0xff]
  %v1019 = vld [vmem:[#allocation2 + $0x4b] sm:$0xff]
  %v1020 = vld [vmem:[#allocation2 + $0x53] sm:$0xff]
  %v1021 = vld [vmem:[#allocation2 + $0x5b] sm:$0xff]
  %v1022 = vld [vmem:[#allocation2 + $0x63] sm:$0xff]
  %v1023 = vld [vmem:[#allocation2 + $0x6b] sm:$0xff]
  %v1024 = vld [vmem:[#allocation2 + $0x73] sm:$0xff]
  %v1025 = vld [vmem:[#allocation2 + $0x7b] sm:$0xff]
  %v1026 = vld [vmem:[#allocation2 + $0x83] sm:$0xff]
  %v1027 = vld [vmem:[#allocation2 + $0x8b] sm:$0xff]
  %v1028 = vld [vmem:[#allocation2 + $0x93] sm:$0xff]
  %v1029 = vld [vmem:[#allocation2 + $0x9b] sm:$0xff]
  %v1030 = vld [vmem:[#allocation2 + $0xa3] sm:$0xff]
  %v1031 = vld [vmem:[#allocation2 + $0xab] sm:$0xff]
  %v1032 = vld [vmem:[#allocation2 + $0xb3] sm:$0xff]
  %1033 = vst.msk [vmem:[#allocation4 + $0x10] sm:$0xff] %vm487, %v1011
  %1034 = vst.msk [vmem:[#allocation4 + $0x38] sm:$0xff] %vm487, %v1012
  %1035 = vst.msk [vmem:[#allocation4 + $0x60] sm:$0xff] %vm487, %v1013
  %1036 = vst.msk [vmem:[#allocation4 + $0x88] sm:$0xff] %vm487, %v1014
  %1037 = vst.msk [vmem:[#allocation4 + $0xb0] sm:$0xff] %vm487, %v1015
  %1038 = vst.msk [vmem:[#allocation4 + $0xd8] sm:$0xff] %vm487, %v1016
  %1039 = vst.msk [vmem:[#allocation4 + $0x100] sm:$0xff] %vm487, %v1017
  %1040 = vst.msk [vmem:[#allocation4 + $0x128] sm:$0xff] %vm487, %v1018
  %1041 = vst.msk [vmem:[#allocation4 + $0x150] sm:$0xff] %vm487, %v1019
  %1042 = vst.msk [vmem:[#allocation4 + $0x178] sm:$0xff] %vm487, %v1020
  %1043 = vst.msk [vmem:[#allocation4 + $0x1a0] sm:$0xff] %vm487, %v1021
  %1044 = vst.msk [vmem:[#allocation4 + $0x1c8] sm:$0xff] %vm487, %v1022
  %1045 = vst.msk [vmem:[#allocation4 + $0x1f0] sm:$0xff] %vm487, %v1023
  %1046 = vst.msk [vmem:[#allocation4 + $0x218] sm:$0xff] %vm487, %v1024
  %1047 = vst.msk [vmem:[#allocation4 + $0x240] sm:$0xff] %vm487, %v1025
  %1048 = vst.msk [vmem:[#allocation4 + $0x268] sm:$0xff] %vm487, %v1026
  %1049 = vst.msk [vmem:[#allocation4 + $0x290] sm:$0xff] %vm487, %v1027
  %1050 = vst.msk [vmem:[#allocation4 + $0x2b8] sm:$0xff] %vm487, %v1028
  %1051 = vst.msk [vmem:[#allocation4 + $0x2e0] sm:$0xff] %vm487, %v1029
  %1052 = vst.msk [vmem:[#allocation4 + $0x308] sm:$0xff] %vm487, %v1030
  %1053 = vst.msk [vmem:[#allocation4 + $0x330] sm:$0xff] %vm487, %v1031
  %1054 = vst.msk [vmem:[#allocation4 + $0x358] sm:$0xff] %vm487, %v1032
  %v1055 = vld [vmem:[#allocation2 + $0xc] sm:$0xff]
  %v1056 = vld [vmem:[#allocation2 + $0x14] sm:$0xff]
  %v1057 = vld [vmem:[#allocation2 + $0x1c] sm:$0xff]
  %v1058 = vld [vmem:[#allocation2 + $0x24] sm:$0xff]
  %v1059 = vld [vmem:[#allocation2 + $0x2c] sm:$0xff]
  %v1060 = vld [vmem:[#allocation2 + $0x34] sm:$0xff]
  %v1061 = vld [vmem:[#allocation2 + $0x3c] sm:$0xff]
  %v1062 = vld [vmem:[#allocation2 + $0x44] sm:$0xff]
  %v1063 = vld [vmem:[#allocation2 + $0x4c] sm:$0xff]
  %v1064 = vld [vmem:[#allocation2 + $0x54] sm:$0xff]
  %v1065 = vld [vmem:[#allocation2 + $0x5c] sm:$0xff]
  %v1066 = vld [vmem:[#allocation2 + $0x64] sm:$0xff]
  %v1067 = vld [vmem:[#allocation2 + $0x6c] sm:$0xff]
  %v1068 = vld [vmem:[#allocation2 + $0x74] sm:$0xff]
  %v1069 = vld [vmem:[#allocation2 + $0x7c] sm:$0xff]
  %v1070 = vld [vmem:[#allocation2 + $0x84] sm:$0xff]
  %v1071 = vld [vmem:[#allocation2 + $0x8c] sm:$0xff]
  %v1072 = vld [vmem:[#allocation2 + $0x94] sm:$0xff]
  %v1073 = vld [vmem:[#allocation2 + $0x9c] sm:$0xff]
  %v1074 = vld [vmem:[#allocation2 + $0xa4] sm:$0xff]
  %v1075 = vld [vmem:[#allocation2 + $0xac] sm:$0xff]
  %v1076 = vld [vmem:[#allocation2 + $0xb4] sm:$0xff]
  %1099 = vrot.lane.b32.xlu0 %v1055, 64
  %v1100 = vpop.permute.xlu0 %1099
  %1101 = vrot.lane.b32.xlu0 %v1056, 64
  %v1102 = vpop.permute.xlu0 %1101
  %1103 = vrot.lane.b32.xlu0 %v1057, 64
  %v1104 = vpop.permute.xlu0 %1103
  %1105 = vrot.lane.b32.xlu0 %v1058, 64
  %v1106 = vpop.permute.xlu0 %1105
  %1107 = vrot.lane.b32.xlu0 %v1059, 64
  %v1108 = vpop.permute.xlu0 %1107
  %1109 = vrot.lane.b32.xlu0 %v1060, 64
  %v1110 = vpop.permute.xlu0 %1109
  %1111 = vrot.lane.b32.xlu0 %v1061, 64
  %v1112 = vpop.permute.xlu0 %1111
  %1113 = vrot.lane.b32.xlu0 %v1062, 64
  %v1114 = vpop.permute.xlu0 %1113
  %1115 = vrot.lane.b32.xlu0 %v1063, 64
  %v1116 = vpop.permute.xlu0 %1115
  %1117 = vrot.lane.b32.xlu0 %v1064, 64
  %v1118 = vpop.permute.xlu0 %1117
  %1119 = vrot.lane.b32.xlu0 %v1065, 64
  %v1120 = vpop.permute.xlu0 %1119
  %1121 = vrot.lane.b32.xlu0 %v1066, 64
  %v1122 = vpop.permute.xlu0 %1121
  %1123 = vrot.lane.b32.xlu0 %v1067, 64
  %v1124 = vpop.permute.xlu0 %1123
  %1125 = vrot.lane.b32.xlu0 %v1068, 64
  %v1126 = vpop.permute.xlu0 %1125
  %1127 = vrot.lane.b32.xlu0 %v1069, 64
  %v1128 = vpop.permute.xlu0 %1127
  %1129 = vrot.lane.b32.xlu0 %v1070, 64
  %v1130 = vpop.permute.xlu0 %1129
  %1131 = vrot.lane.b32.xlu0 %v1071, 64
  %v1132 = vpop.permute.xlu0 %1131
  %1133 = vrot.lane.b32.xlu0 %v1072, 64
  %v1134 = vpop.permute.xlu0 %1133
  %1135 = vrot.lane.b32.xlu0 %v1073, 64
  %v1136 = vpop.permute.xlu0 %1135
  %1137 = vrot.lane.b32.xlu0 %v1074, 64
  %v1138 = vpop.permute.xlu0 %1137
  %1139 = vrot.lane.b32.xlu0 %v1075, 64
  %v1140 = vpop.permute.xlu0 %1139
  %1141 = vrot.lane.b32.xlu0 %v1076, 64
  %v1142 = vpop.permute.xlu0 %1141
  %1165 = vst.msk [vmem:[#allocation4 + $0x10] sm:$0xff] %vm812, %v1100
  %1166 = vst.msk [vmem:[#allocation4 + $0x38] sm:$0xff] %vm812, %v1102
  %1167 = vst.msk [vmem:[#allocation4 + $0x60] sm:$0xff] %vm812, %v1104
  %1168 = vst.msk [vmem:[#allocation4 + $0x88] sm:$0xff] %vm812, %v1106
  %1169 = vst.msk [vmem:[#allocation4 + $0xb0] sm:$0xff] %vm812, %v1108
  %1170 = vst.msk [vmem:[#allocation4 + $0xd8] sm:$0xff] %vm812, %v1110
  %1171 = vst.msk [vmem:[#allocation4 + $0x100] sm:$0xff] %vm812, %v1112
  %1172 = vst.msk [vmem:[#allocation4 + $0x128] sm:$0xff] %vm812, %v1114
  %1173 = vst.msk [vmem:[#allocation4 + $0x150] sm:$0xff] %vm812, %v1116
  %1174 = vst.msk [vmem:[#allocation4 + $0x178] sm:$0xff] %vm812, %v1118
  %1175 = vst.msk [vmem:[#allocation4 + $0x1a0] sm:$0xff] %vm812, %v1120
  %1176 = vst.msk [vmem:[#allocation4 + $0x1c8] sm:$0xff] %vm812, %v1122
  %1177 = vst.msk [vmem:[#allocation4 + $0x1f0] sm:$0xff] %vm812, %v1124
  %1178 = vst.msk [vmem:[#allocation4 + $0x218] sm:$0xff] %vm812, %v1126
  %1179 = vst.msk [vmem:[#allocation4 + $0x240] sm:$0xff] %vm812, %v1128
  %1180 = vst.msk [vmem:[#allocation4 + $0x268] sm:$0xff] %vm812, %v1130
  %1181 = vst.msk [vmem:[#allocation4 + $0x290] sm:$0xff] %vm812, %v1132
  %1182 = vst.msk [vmem:[#allocation4 + $0x2b8] sm:$0xff] %vm812, %v1134
  %1183 = vst.msk [vmem:[#allocation4 + $0x2e0] sm:$0xff] %vm812, %v1136
  %1184 = vst.msk [vmem:[#allocation4 + $0x308] sm:$0xff] %vm812, %v1138
  %1185 = vst.msk [vmem:[#allocation4 + $0x330] sm:$0xff] %vm812, %v1140
  %1186 = vst.msk [vmem:[#allocation4 + $0x358] sm:$0xff] %vm812, %v1142
  %v1187 = vld [vmem:[#allocation2 + $0x14] sm:$0xff]
  %v1188 = vld [vmem:[#allocation2 + $0x1c] sm:$0xff]
  %v1189 = vld [vmem:[#allocation2 + $0x24] sm:$0xff]
  %v1190 = vld [vmem:[#allocation2 + $0x2c] sm:$0xff]
  %v1191 = vld [vmem:[#allocation2 + $0x34] sm:$0xff]
  %v1192 = vld [vmem:[#allocation2 + $0x3c] sm:$0xff]
  %v1193 = vld [vmem:[#allocation2 + $0x44] sm:$0xff]
  %v1194 = vld [vmem:[#allocation2 + $0x4c] sm:$0xff]
  %v1195 = vld [vmem:[#allocation2 + $0x54] sm:$0xff]
  %v1196 = vld [vmem:[#allocation2 + $0x5c] sm:$0xff]
  %v1197 = vld [vmem:[#allocation2 + $0x64] sm:$0xff]
  %v1198 = vld [vmem:[#allocation2 + $0x6c] sm:$0xff]
  %v1199 = vld [vmem:[#allocation2 + $0x74] sm:$0xff]
  %v1200 = vld [vmem:[#allocation2 + $0x7c] sm:$0xff]
  %v1201 = vld [vmem:[#allocation2 + $0x84] sm:$0xff]
  %v1202 = vld [vmem:[#allocation2 + $0x8c] sm:$0xff]
  %v1203 = vld [vmem:[#allocation2 + $0x94] sm:$0xff]
  %v1204 = vld [vmem:[#allocation2 + $0x9c] sm:$0xff]
  %v1205 = vld [vmem:[#allocation2 + $0xa4] sm:$0xff]
  %v1206 = vld [vmem:[#allocation2 + $0xac] sm:$0xff]
  %v1207 = vld [vmem:[#allocation2 + $0xb4] sm:$0xff]
  %v1208 = vld [vmem:[#allocation2 + $0xbc] sm:$0xff]
  %1209 = vst.msk [vmem:[#allocation4 + $0x18] sm:$0xff] %vm487, %v1187
  %1210 = vst.msk [vmem:[#allocation4 + $0x40] sm:$0xff] %vm487, %v1188
  %1211 = vst.msk [vmem:[#allocation4 + $0x68] sm:$0xff] %vm487, %v1189
  %1212 = vst.msk [vmem:[#allocation4 + $0x90] sm:$0xff] %vm487, %v1190
  %1213 = vst.msk [vmem:[#allocation4 + $0xb8] sm:$0xff] %vm487, %v1191
  %1214 = vst.msk [vmem:[#allocation4 + $0xe0] sm:$0xff] %vm487, %v1192
  %1215 = vst.msk [vmem:[#allocation4 + $0x108] sm:$0xff] %vm487, %v1193
  %1216 = vst.msk [vmem:[#allocation4 + $0x130] sm:$0xff] %vm487, %v1194
  %1217 = vst.msk [vmem:[#allocation4 + $0x158] sm:$0xff] %vm487, %v1195
  %1218 = vst.msk [vmem:[#allocation4 + $0x180] sm:$0xff] %vm487, %v1196
  %1219 = vst.msk [vmem:[#allocation4 + $0x1a8] sm:$0xff] %vm487, %v1197
  %1220 = vst.msk [vmem:[#allocation4 + $0x1d0] sm:$0xff] %vm487, %v1198
  %1221 = vst.msk [vmem:[#allocation4 + $0x1f8] sm:$0xff] %vm487, %v1199
  %1222 = vst.msk [vmem:[#allocation4 + $0x220] sm:$0xff] %vm487, %v1200
  %1223 = vst.msk [vmem:[#allocation4 + $0x248] sm:$0xff] %vm487, %v1201
  %1224 = vst.msk [vmem:[#allocation4 + $0x270] sm:$0xff] %vm487, %v1202
  %1225 = vst.msk [vmem:[#allocation4 + $0x298] sm:$0xff] %vm487, %v1203
  %1226 = vst.msk [vmem:[#allocation4 + $0x2c0] sm:$0xff] %vm487, %v1204
  %1227 = vst.msk [vmem:[#allocation4 + $0x2e8] sm:$0xff] %vm487, %v1205
  %1228 = vst.msk [vmem:[#allocation4 + $0x310] sm:$0xff] %vm487, %v1206
  %1229 = vst.msk [vmem:[#allocation4 + $0x338] sm:$0xff] %vm487, %v1207
  %1230 = vst.msk [vmem:[#allocation4 + $0x360] sm:$0xff] %vm487, %v1208
  %v1231 = vld [vmem:[#allocation2 + $0x15] sm:$0xff]
  %v1232 = vld [vmem:[#allocation2 + $0x1d] sm:$0xff]
  %v1233 = vld [vmem:[#allocation2 + $0x25] sm:$0xff]
  %v1234 = vld [vmem:[#allocation2 + $0x2d] sm:$0xff]
  %v1235 = vld [vmem:[#allocation2 + $0x35] sm:$0xff]
  %v1236 = vld [vmem:[#allocation2 + $0x3d] sm:$0xff]
  %v1237 = vld [vmem:[#allocation2 + $0x45] sm:$0xff]
  %v1238 = vld [vmem:[#allocation2 + $0x4d] sm:$0xff]
  %v1239 = vld [vmem:[#allocation2 + $0x55] sm:$0xff]
  %v1240 = vld [vmem:[#allocation2 + $0x5d] sm:$0xff]
  %v1241 = vld [vmem:[#allocation2 + $0x65] sm:$0xff]
  %v1242 = vld [vmem:[#allocation2 + $0x6d] sm:$0xff]
  %v1243 = vld [vmem:[#allocation2 + $0x75] sm:$0xff]
  %v1244 = vld [vmem:[#allocation2 + $0x7d] sm:$0xff]
  %v1245 = vld [vmem:[#allocation2 + $0x85] sm:$0xff]
  %v1246 = vld [vmem:[#allocation2 + $0x8d] sm:$0xff]
  %v1247 = vld [vmem:[#allocation2 + $0x95] sm:$0xff]
  %v1248 = vld [vmem:[#allocation2 + $0x9d] sm:$0xff]
  %v1249 = vld [vmem:[#allocation2 + $0xa5] sm:$0xff]
  %v1250 = vld [vmem:[#allocation2 + $0xad] sm:$0xff]
  %v1251 = vld [vmem:[#allocation2 + $0xb5] sm:$0xff]
  %v1252 = vld [vmem:[#allocation2 + $0xbd] sm:$0xff]
  %1275 = vrot.lane.b32.xlu0 %v1231, 64
  %v1276 = vpop.permute.xlu0 %1275
  %1277 = vrot.lane.b32.xlu0 %v1232, 64
  %v1278 = vpop.permute.xlu0 %1277
  %1279 = vrot.lane.b32.xlu0 %v1233, 64
  %v1280 = vpop.permute.xlu0 %1279
  %1281 = vrot.lane.b32.xlu0 %v1234, 64
  %v1282 = vpop.permute.xlu0 %1281
  %1283 = vrot.lane.b32.xlu0 %v1235, 64
  %v1284 = vpop.permute.xlu0 %1283
  %1285 = vrot.lane.b32.xlu0 %v1236, 64
  %v1286 = vpop.permute.xlu0 %1285
  %1287 = vrot.lane.b32.xlu0 %v1237, 64
  %v1288 = vpop.permute.xlu0 %1287
  %1289 = vrot.lane.b32.xlu0 %v1238, 64
  %v1290 = vpop.permute.xlu0 %1289
  %1291 = vrot.lane.b32.xlu0 %v1239, 64
  %v1292 = vpop.permute.xlu0 %1291
  %1293 = vrot.lane.b32.xlu0 %v1240, 64
  %v1294 = vpop.permute.xlu0 %1293
  %1295 = vrot.lane.b32.xlu0 %v1241, 64
  %v1296 = vpop.permute.xlu0 %1295
  %1297 = vrot.lane.b32.xlu0 %v1242, 64
  %v1298 = vpop.permute.xlu0 %1297
  %1299 = vrot.lane.b32.xlu0 %v1243, 64
  %v1300 = vpop.permute.xlu0 %1299
  %1301 = vrot.lane.b32.xlu0 %v1244, 64
  %v1302 = vpop.permute.xlu0 %1301
  %1303 = vrot.lane.b32.xlu0 %v1245, 64
  %v1304 = vpop.permute.xlu0 %1303
  %1305 = vrot.lane.b32.xlu0 %v1246, 64
  %v1306 = vpop.permute.xlu0 %1305
  %1307 = vrot.lane.b32.xlu0 %v1247, 64
  %v1308 = vpop.permute.xlu0 %1307
  %1309 = vrot.lane.b32.xlu0 %v1248, 64
  %v1310 = vpop.permute.xlu0 %1309
  %1311 = vrot.lane.b32.xlu0 %v1249, 64
  %v1312 = vpop.permute.xlu0 %1311
  %1313 = vrot.lane.b32.xlu0 %v1250, 64
  %v1314 = vpop.permute.xlu0 %1313
  %1315 = vrot.lane.b32.xlu0 %v1251, 64
  %v1316 = vpop.permute.xlu0 %1315
  %1317 = vrot.lane.b32.xlu0 %v1252, 64
  %v1318 = vpop.permute.xlu0 %1317
  %1341 = vst.msk [vmem:[#allocation4 + $0x18] sm:$0xff] %vm812, %v1276
  %1342 = vst.msk [vmem:[#allocation4 + $0x40] sm:$0xff] %vm812, %v1278
  %1343 = vst.msk [vmem:[#allocation4 + $0x68] sm:$0xff] %vm812, %v1280
  %1344 = vst.msk [vmem:[#allocation4 + $0x90] sm:$0xff] %vm812, %v1282
  %1345 = vst.msk [vmem:[#allocation4 + $0xb8] sm:$0xff] %vm812, %v1284
  %1346 = vst.msk [vmem:[#allocation4 + $0xe0] sm:$0xff] %vm812, %v1286
  %1347 = vst.msk [vmem:[#allocation4 + $0x108] sm:$0xff] %vm812, %v1288
  %1348 = vst.msk [vmem:[#allocation4 + $0x130] sm:$0xff] %vm812, %v1290
  %1349 = vst.msk [vmem:[#allocation4 + $0x158] sm:$0xff] %vm812, %v1292
  %1350 = vst.msk [vmem:[#allocation4 + $0x180] sm:$0xff] %vm812, %v1294
  %1351 = vst.msk [vmem:[#allocation4 + $0x1a8] sm:$0xff] %vm812, %v1296
  %1352 = vst.msk [vmem:[#allocation4 + $0x1d0] sm:$0xff] %vm812, %v1298
  %1353 = vst.msk [vmem:[#allocation4 + $0x1f8] sm:$0xff] %vm812, %v1300
  %1354 = vst.msk [vmem:[#allocation4 + $0x220] sm:$0xff] %vm812, %v1302
  %1355 = vst.msk [vmem:[#allocation4 + $0x248] sm:$0xff] %vm812, %v1304
  %1356 = vst.msk [vmem:[#allocation4 + $0x270] sm:$0xff] %vm812, %v1306
  %1357 = vst.msk [vmem:[#allocation4 + $0x298] sm:$0xff] %vm812, %v1308
  %1358 = vst.msk [vmem:[#allocation4 + $0x2c0] sm:$0xff] %vm812, %v1310
  %1359 = vst.msk [vmem:[#allocation4 + $0x2e8] sm:$0xff] %vm812, %v1312
  %1360 = vst.msk [vmem:[#allocation4 + $0x310] sm:$0xff] %vm812, %v1314
  %1361 = vst.msk [vmem:[#allocation4 + $0x338] sm:$0xff] %vm812, %v1316
  %1362 = vst.msk [vmem:[#allocation4 + $0x360] sm:$0xff] %vm812, %v1318
  %v1363 = vld [vmem:[#allocation2 + $0x16] sm:$0xff]
  %v1364 = vld [vmem:[#allocation2 + $0x1e] sm:$0xff]
  %v1365 = vld [vmem:[#allocation2 + $0x26] sm:$0xff]
  %v1366 = vld [vmem:[#allocation2 + $0x2e] sm:$0xff]
  %v1367 = vld [vmem:[#allocation2 + $0x36] sm:$0xff]
  %v1368 = vld [vmem:[#allocation2 + $0x3e] sm:$0xff]
  %v1369 = vld [vmem:[#allocation2 + $0x46] sm:$0xff]
  %v1370 = vld [vmem:[#allocation2 + $0x4e] sm:$0xff]
  %v1371 = vld [vmem:[#allocation2 + $0x56] sm:$0xff]
  %v1372 = vld [vmem:[#allocation2 + $0x5e] sm:$0xff]
  %v1373 = vld [vmem:[#allocation2 + $0x66] sm:$0xff]
  %v1374 = vld [vmem:[#allocation2 + $0x6e] sm:$0xff]
  %v1375 = vld [vmem:[#allocation2 + $0x76] sm:$0xff]
  %v1376 = vld [vmem:[#allocation2 + $0x7e] sm:$0xff]
  %v1377 = vld [vmem:[#allocation2 + $0x86] sm:$0xff]
  %v1378 = vld [vmem:[#allocation2 + $0x8e] sm:$0xff]
  %v1379 = vld [vmem:[#allocation2 + $0x96] sm:$0xff]
  %v1380 = vld [vmem:[#allocation2 + $0x9e] sm:$0xff]
  %v1381 = vld [vmem:[#allocation2 + $0xa6] sm:$0xff]
  %v1382 = vld [vmem:[#allocation2 + $0xae] sm:$0xff]
  %v1383 = vld [vmem:[#allocation2 + $0xb6] sm:$0xff]
  %v1384 = vld [vmem:[#allocation2 + $0xbe] sm:$0xff]
  %1385 = vst.msk [vmem:[#allocation4 + $0x20] sm:$0xff] %vm487, %v1363
  %1386 = vst.msk [vmem:[#allocation4 + $0x48] sm:$0xff] %vm487, %v1364
  %1387 = vst.msk [vmem:[#allocation4 + $0x70] sm:$0xff] %vm487, %v1365
  %1388 = vst.msk [vmem:[#allocation4 + $0x98] sm:$0xff] %vm487, %v1366
  %1389 = vst.msk [vmem:[#allocation4 + $0xc0] sm:$0xff] %vm487, %v1367
  %1390 = vst.msk [vmem:[#allocation4 + $0xe8] sm:$0xff] %vm487, %v1368
  %1391 = vst.msk [vmem:[#allocation4 + $0x110] sm:$0xff] %vm487, %v1369
  %1392 = vst.msk [vmem:[#allocation4 + $0x138] sm:$0xff] %vm487, %v1370
  %1393 = vst.msk [vmem:[#allocation4 + $0x160] sm:$0xff] %vm487, %v1371
  %1394 = vst.msk [vmem:[#allocation4 + $0x188] sm:$0xff] %vm487, %v1372
  %1395 = vst.msk [vmem:[#allocation4 + $0x1b0] sm:$0xff] %vm487, %v1373
  %1396 = vst.msk [vmem:[#allocation4 + $0x1d8] sm:$0xff] %vm487, %v1374
  %1397 = vst.msk [vmem:[#allocation4 + $0x200] sm:$0xff] %vm487, %v1375
  %1398 = vst.msk [vmem:[#allocation4 + $0x228] sm:$0xff] %vm487, %v1376
  %1399 = vst.msk [vmem:[#allocation4 + $0x250] sm:$0xff] %vm487, %v1377
  %1400 = vst.msk [vmem:[#allocation4 + $0x278] sm:$0xff] %vm487, %v1378
  %1401 = vst.msk [vmem:[#allocation4 + $0x2a0] sm:$0xff] %vm487, %v1379
  %1402 = vst.msk [vmem:[#allocation4 + $0x2c8] sm:$0xff] %vm487, %v1380
  %1403 = vst.msk [vmem:[#allocation4 + $0x2f0] sm:$0xff] %vm487, %v1381
  %1404 = vst.msk [vmem:[#allocation4 + $0x318] sm:$0xff] %vm487, %v1382
  %1405 = vst.msk [vmem:[#allocation4 + $0x340] sm:$0xff] %vm487, %v1383
  %1406 = vst.msk [vmem:[#allocation4 + $0x368] sm:$0xff] %vm487, %v1384
  %v1407 = vld [vmem:[#allocation4] sm:$0xff]
  %v1408 = vld [vmem:[#allocation4 + $0x8] sm:$0xff]
  %v1409 = vld [vmem:[#allocation4 + $0x10] sm:$0xff]
  %v1410 = vld [vmem:[#allocation4 + $0x18] sm:$0xff]
  %v1411 = vld [vmem:[#allocation4 + $0x20] sm:$0xff]
  %v1412 = vld [vmem:[#allocation4 + $0x28] sm:$0xff]
  %v1413 = vld [vmem:[#allocation4 + $0x30] sm:$0xff]
  %v1414 = vld [vmem:[#allocation4 + $0x38] sm:$0xff]
  %v1415 = vld [vmem:[#allocation4 + $0x40] sm:$0xff]
  %v1416 = vld [vmem:[#allocation4 + $0x48] sm:$0xff]
  %v1417 = vld [vmem:[#allocation4 + $0x50] sm:$0xff]
  %v1418 = vld [vmem:[#allocation4 + $0x58] sm:$0xff]
  %v1419 = vld [vmem:[#allocation4 + $0x60] sm:$0xff]
  %v1420 = vld [vmem:[#allocation4 + $0x68] sm:$0xff]
  %v1421 = vld [vmem:[#allocation4 + $0x70] sm:$0xff]
  %v1422 = vld [vmem:[#allocation4 + $0x78] sm:$0xff]
  %v1423 = vld [vmem:[#allocation4 + $0x80] sm:$0xff]
  %v1424 = vld [vmem:[#allocation4 + $0x88] sm:$0xff]
  %v1425 = vld [vmem:[#allocation4 + $0x90] sm:$0xff]
  %v1426 = vld [vmem:[#allocation4 + $0x98] sm:$0xff]
  %v1427 = vld [vmem:[#allocation4 + $0xa0] sm:$0xff]
  %v1428 = vld [vmem:[#allocation4 + $0xa8] sm:$0xff]
  %v1429 = vld [vmem:[#allocation4 + $0xb0] sm:$0xff]
  %v1430 = vld [vmem:[#allocation4 + $0xb8] sm:$0xff]
  %v1431 = vld [vmem:[#allocation4 + $0xc0] sm:$0xff]
  %v1432 = vld [vmem:[#allocation4 + $0xc8] sm:$0xff]
  %v1433 = vld [vmem:[#allocation4 + $0xd0] sm:$0xff]
  %v1434 = vld [vmem:[#allocation4 + $0xd8] sm:$0xff]
  %v1435 = vld [vmem:[#allocation4 + $0xe0] sm:$0xff]
  %v1436 = vld [vmem:[#allocation4 + $0xe8] sm:$0xff]
  %v1437 = vld [vmem:[#allocation4 + $0xf0] sm:$0xff]
  %v1438 = vld [vmem:[#allocation4 + $0xf8] sm:$0xff]
  %v1439 = vld [vmem:[#allocation4 + $0x100] sm:$0xff]
  %v1440 = vld [vmem:[#allocation4 + $0x108] sm:$0xff]
  %v1441 = vld [vmem:[#allocation4 + $0x110] sm:$0xff]
  %v1442 = vld [vmem:[#allocation4 + $0x118] sm:$0xff]
  %v1443 = vld [vmem:[#allocation4 + $0x120] sm:$0xff]
  %v1444 = vld [vmem:[#allocation4 + $0x128] sm:$0xff]
  %v1445 = vld [vmem:[#allocation4 + $0x130] sm:$0xff]
  %v1446 = vld [vmem:[#allocation4 + $0x138] sm:$0xff]
  %v1447 = vld [vmem:[#allocation4 + $0x140] sm:$0xff]
  %v1448 = vld [vmem:[#allocation4 + $0x148] sm:$0xff]
  %v1449 = vld [vmem:[#allocation4 + $0x150] sm:$0xff]
  %v1450 = vld [vmem:[#allocation4 + $0x158] sm:$0xff]
  %v1451 = vld [vmem:[#allocation4 + $0x160] sm:$0xff]
  %v1452 = vld [vmem:[#allocation4 + $0x168] sm:$0xff]
  %v1453 = vld [vmem:[#allocation4 + $0x170] sm:$0xff]
  %v1454 = vld [vmem:[#allocation4 + $0x178] sm:$0xff]
  %v1455 = vld [vmem:[#allocation4 + $0x180] sm:$0xff]
  %v1456 = vld [vmem:[#allocation4 + $0x188] sm:$0xff]
  %v1457 = vld [vmem:[#allocation4 + $0x190] sm:$0xff]
  %v1458 = vld [vmem:[#allocation4 + $0x198] sm:$0xff]
  %v1459 = vld [vmem:[#allocation4 + $0x1a0] sm:$0xff]
  %v1460 = vld [vmem:[#allocation4 + $0x1a8] sm:$0xff]
  %v1461 = vld [vmem:[#allocation4 + $0x1b0] sm:$0xff]
  %v1462 = vld [vmem:[#allocation4 + $0x1b8] sm:$0xff]
  %v1463 = vld [vmem:[#allocation4 + $0x1c0] sm:$0xff]
  %v1464 = vld [vmem:[#allocation4 + $0x1c8] sm:$0xff]
  %v1465 = vld [vmem:[#allocation4 + $0x1d0] sm:$0xff]
  %v1466 = vld [vmem:[#allocation4 + $0x1d8] sm:$0xff]
  %v1467 = vld [vmem:[#allocation4 + $0x1e0] sm:$0xff]
  %v1468 = vld [vmem:[#allocation4 + $0x1e8] sm:$0xff]
  %v1469 = vld [vmem:[#allocation4 + $0x1f0] sm:$0xff]
  %v1470 = vld [vmem:[#allocation4 + $0x1f8] sm:$0xff]
  %v1471 = vld [vmem:[#allocation4 + $0x200] sm:$0xff]
  %v1472 = vld [vmem:[#allocation4 + $0x208] sm:$0xff]
  %v1473 = vld [vmem:[#allocation4 + $0x210] sm:$0xff]
  %v1474 = vld [vmem:[#allocation4 + $0x218] sm:$0xff]
  %v1475 = vld [vmem:[#allocation4 + $0x220] sm:$0xff]
  %v1476 = vld [vmem:[#allocation4 + $0x228] sm:$0xff]
  %v1477 = vld [vmem:[#allocation4 + $0x230] sm:$0xff]
  %v1478 = vld [vmem:[#allocation4 + $0x238] sm:$0xff]
  %v1479 = vld [vmem:[#allocation4 + $0x240] sm:$0xff]
  %v1480 = vld [vmem:[#allocation4 + $0x248] sm:$0xff]
  %v1481 = vld [vmem:[#allocation4 + $0x250] sm:$0xff]
  %v1482 = vld [vmem:[#allocation4 + $0x258] sm:$0xff]
  %v1483 = vld [vmem:[#allocation4 + $0x260] sm:$0xff]
  %v1484 = vld [vmem:[#allocation4 + $0x268] sm:$0xff]
  %v1485 = vld [vmem:[#allocation4 + $0x270] sm:$0xff]
  %v1486 = vld [vmem:[#allocation4 + $0x278] sm:$0xff]
  %v1487 = vld [vmem:[#allocation4 + $0x280] sm:$0xff]
  %v1488 = vld [vmem:[#allocation4 + $0x288] sm:$0xff]
  %v1489 = vld [vmem:[#allocation4 + $0x290] sm:$0xff]
  %v1490 = vld [vmem:[#allocation4 + $0x298] sm:$0xff]
  %v1491 = vld [vmem:[#allocation4 + $0x2a0] sm:$0xff]
  %v1492 = vld [vmem:[#allocation4 + $0x2a8] sm:$0xff]
  %v1493 = vld [vmem:[#allocation4 + $0x2b0] sm:$0xff]
  %v1494 = vld [vmem:[#allocation4 + $0x2b8] sm:$0xff]
  %v1495 = vld [vmem:[#allocation4 + $0x2c0] sm:$0xff]
  %v1496 = vld [vmem:[#allocation4 + $0x2c8] sm:$0xff]
  %v1497 = vld [vmem:[#allocation4 + $0x2d0] sm:$0xff]
  %v1498 = vld [vmem:[#allocation4 + $0x2d8] sm:$0xff]
  %v1499 = vld [vmem:[#allocation4 + $0x2e0] sm:$0xff]
  %v1500 = vld [vmem:[#allocation4 + $0x2e8] sm:$0xff]
  %v1501 = vld [vmem:[#allocation4 + $0x2f0] sm:$0xff]
  %v1502 = vld [vmem:[#allocation4 + $0x2f8] sm:$0xff]
  %v1503 = vld [vmem:[#allocation4 + $0x300] sm:$0xff]
  %v1504 = vld [vmem:[#allocation4 + $0x308] sm:$0xff]
  %v1505 = vld [vmem:[#allocation4 + $0x310] sm:$0xff]
  %v1506 = vld [vmem:[#allocation4 + $0x318] sm:$0xff]
  %v1507 = vld [vmem:[#allocation4 + $0x320] sm:$0xff]
  %v1508 = vld [vmem:[#allocation4 + $0x328] sm:$0xff]
  %v1509 = vld [vmem:[#allocation4 + $0x330] sm:$0xff]
  %v1510 = vld [vmem:[#allocation4 + $0x338] sm:$0xff]
  %v1511 = vld [vmem:[#allocation4 + $0x340] sm:$0xff]
  %v1512 = vld [vmem:[#allocation4 + $0x348] sm:$0xff]
  %v1513 = vld [vmem:[#allocation4 + $0x350] sm:$0xff]
  %v1514 = vld [vmem:[#allocation4 + $0x358] sm:$0xff]
  %v1515 = vld [vmem:[#allocation4 + $0x360] sm:$0xff]
  %v1516 = vld [vmem:[#allocation4 + $0x368] sm:$0xff]
  %v1518 = vlaneseq
  %v1519 = vshrl.u32 %v1518, 7
  %v1520 = vsub.s32 0, %v1519
  %v1521 = vrot.slane %v657, %v1520
  %v1524 = vsel %vm487, %v1411, 0
  %v1527 = vsel %vm487, %v1416, 0
  %v1530 = vsel %vm487, %v1421, 0
  %v1533 = vsel %vm487, %v1426, 0
  %v1536 = vsel %vm487, %v1431, 0
  %v1539 = vsel %vm487, %v1436, 0
  %v1542 = vsel %vm487, %v1441, 0
  %v1545 = vsel %vm487, %v1446, 0
  %v1548 = vsel %vm487, %v1451, 0
  %v1551 = vsel %vm487, %v1456, 0
  %v1554 = vsel %vm487, %v1461, 0
  %v1557 = vsel %vm487, %v1466, 0
  %v1560 = vsel %vm487, %v1471, 0
  %v1563 = vsel %vm487, %v1476, 0
  %v1566 = vsel %vm487, %v1481, 0
  %v1569 = vsel %vm487, %v1486, 0
  %v1572 = vsel %vm487, %v1491, 0
  %v1575 = vsel %vm487, %v1496, 0
  %v1578 = vsel %vm487, %v1501, 0
  %v1581 = vsel %vm487, %v1506, 0
  %v1584 = vsel %vm487, %v1511, 0
  %v1587 = vsel %vm487, %v1516, 0
  %1589 = vmatprep.subr.mxu0 0.0
  %1590 = vmatpush1.msra.mxu0 %v585
  %1591 = vmatprep.subr.mxu0 0.0
  %1592 = vmatpush1.msra.mxu0 %v586
  %1593 = vmatprep.subr.mxu0 0.0
  %1594 = vmatpush1.msra.mxu0 %v587
  %1595 = vmatprep.subr.mxu0 0.0
  %1596 = vmatpush1.msra.mxu0 %v588
  %1597 = vmatprep.subr.mxu0 0.0
  %1598 = vmatpush1.msra.mxu0 %v589
  %1599 = vmatprep.subr.mxu0 0.0
  %1600 = vmatpush1.msra.mxu0 %v590
  %1601 = vmatprep.subr.mxu0 0.0
  %1602 = vmatpush1.msra.mxu0 %v591
  %1603 = vmatprep.subr.mxu0 0.0
  %1604 = vmatpush1.msra.mxu0 %v592
  %1605 = vmatprep.subr.mxu0 0.0
  %1606 = vmatpush1.msra.mxu0 %v593
  %1607 = vmatprep.subr.mxu0 0.0
  %1608 = vmatpush1.msra.mxu0 %v594
  %1609 = vmatprep.subr.mxu0 0.0
  %1610 = vmatpush1.msra.mxu0 %v595
  %1611 = vmatprep.subr.mxu0 0.0
  %1612 = vmatpush1.msra.mxu0 %v596
  %1613 = vmatprep.subr.mxu0 0.0
  %1614 = vmatpush1.msra.mxu0 %v597
  %1615 = vmatprep.subr.mxu0 0.0
  %1616 = vmatpush1.msra.mxu0 %v598
  %1617 = vmatprep.subr.mxu0 0.0
  %1618 = vmatpush1.msra.mxu0 %v599
  %1619 = vmatprep.subr.mxu0 0.0
  %1620 = vmatpush1.msra.mxu0 %v600
  %1621 = vmatprep.subr.mxu0 0.0
  %1622 = vmatpush1.msra.mxu0 %v601
  %1623 = vmatprep.subr.mxu0 0.0
  %1624 = vmatpush1.msra.mxu0 %v602
  %1625 = vmatprep.subr.mxu0 0.0
  %1626 = vmatpush1.msra.mxu0 %v603
  %1627 = vmatprep.subr.mxu0 0.0
  %1628 = vmatpush1.msra.mxu0 %v604
  %1629 = vmatprep.subr.mxu0 0.0
  %1630 = vmatpush1.msra.mxu0 %v605
  %1631 = vmatprep.subr.mxu0 0.0
  %1632 = vmatpush1.msra.mxu0 %v606
  %1633 = vmatprep.subr.mxu0 0.0
  %1634 = vmatpush1.msra.mxu0 %v607
  %1635 = vmatprep.subr.mxu0 0.0
  %1636 = vmatpush1.msra.mxu0 %v608
  %1637 = vmatprep.subr.mxu0 0.0
  %1638 = vmatpush1.msra.mxu0 %v609
  %1639 = vmatprep.subr.mxu0 0.0
  %1640 = vmatpush1.msra.mxu0 %v610
  %1641 = vmatprep.subr.mxu0 0.0
  %1642 = vmatpush1.msra.mxu0 %v611
  %1643 = vmatprep.subr.mxu0 0.0
  %1644 = vmatpush1.msra.mxu0 %v612
  %1645 = vmatprep.subr.mxu0 0.0
  %1646 = vmatpush1.msra.mxu0 %v613
  %1647 = vmatprep.subr.mxu0 0.0
  %1648 = vmatpush1.msra.mxu0 %v614
  %1649 = vmatprep.subr.mxu0 0.0
  %1650 = vmatpush1.msra.mxu0 %v615
  %1651 = vmatprep.subr.mxu0 0.0
  %1652 = vmatpush1.msra.mxu0 %v616
  %1653 = vmatprep.mubr.f32.mxu0 %v1408
  %1654 = vmatmul.mubr.f32.gmra.mrb[0].mxu0 %v1407
  %v1655 = vpop.f32.mrb[0].mxu0
  %v1656 = vadd.f32 %v1521, %v1655
  %v1657 = vpop.f32.mrb[0].mxu0
  %1658 = vmatprep.mubr.f32.mxu0 %v1413
  %1659 = vmatmul.mubr.f32.gmra.mrb[0].mxu0 %v1412
  %v1660 = vpop.f32.mrb[0].mxu0
  %v1661 = vadd.f32 %v1521, %v1660
  %v1662 = vpop.f32.mrb[0].mxu0
  %1663 = vmatprep.mubr.f32.mxu0 %v1418
  %1664 = vmatmul.mubr.f32.gmra.mrb[0].mxu0 %v1417
  %v1665 = vpop.f32.mrb[0].mxu0
  %v1666 = vadd.f32 %v1521, %v1665
  %v1667 = vpop.f32.mrb[0].mxu0
  %1668 = vmatprep.mubr.f32.mxu0 %v1423
  %1669 = vmatmul.mubr.f32.gmra.mrb[0].mxu0 %v1422
  %v1670 = vpop.f32.mrb[0].mxu0
  %v1671 = vadd.f32 %v1521, %v1670
  %v1672 = vpop.f32.mrb[0].mxu0
  %1673 = vmatprep.mubr.f32.mxu0 %v1428
  %1674 = vmatmul.mubr.f32.gmra.mrb[0].mxu0 %v1427
  %v1675 = vpop.f32.mrb[0].mxu0
  %v1676 = vadd.f32 %v1521, %v1675
  %v1677 = vpop.f32.mrb[0].mxu0
  %1678 = vmatprep.mubr.f32.mxu0 %v1433
  %1679 = vmatmul.mubr.f32.gmra.mrb[0].mxu0 %v1432
  %v1680 = vpop.f32.mrb[0].mxu0
  %v1681 = vadd.f32 %v1521, %v1680
  %v1682 = vpop.f32.mrb[0].mxu0
  %1683 = vmatprep.mubr.f32.mxu0 %v1438
  %1684 = vmatmul.mubr.f32.gmra.mrb[0].mxu0 %v1437
  %v1685 = vpop.f32.mrb[0].mxu0
  %v1686 = vadd.f32 %v1521, %v1685
  %v1687 = vpop.f32.mrb[0].mxu0
  %1688 = vmatprep.mubr.f32.mxu0 %v1443
  %1689 = vmatmul.mubr.f32.gmra.mrb[0].mxu0 %v1442
  %v1690 = vpop.f32.mrb[0].mxu0
  %v1691 = vadd.f32 %v1521, %v1690
  %v1692 = vpop.f32.mrb[0].mxu0
  %1693 = vmatprep.mubr.f32.mxu0 %v1448
  %1694 = vmatmul.mubr.f32.gmra.mrb[0].mxu0 %v1447
  %v1695 = vpop.f32.mrb[0].mxu0
  %v1696 = vadd.f32 %v1521, %v1695
  %v1697 = vpop.f32.mrb[0].mxu0
  %1698 = vmatprep.mubr.f32.mxu0 %v1453
  %1699 = vmatmul.mubr.f32.gmra.mrb[0].mxu0 %v1452
  %v1700 = vpop.f32.mrb[0].mxu0
  %v1701 = vadd.f32 %v1521, %v1700
  %v1702 = vpop.f32.mrb[0].mxu0
  %1703 = vmatprep.mubr.f32.mxu0 %v1458
  %1704 = vmatmul.mubr.f32.gmra.mrb[0].mxu0 %v1457
  %v1705 = vpop.f32.mrb[0].mxu0
  %v1706 = vadd.f32 %v1521, %v1705
  %v1707 = vpop.f32.mrb[0].mxu0
  %1708 = vmatprep.mubr.f32.mxu0 %v1463
  %1709 = vmatmul.mubr.f32.gmra.mrb[0].mxu0 %v1462
  %v1710 = vpop.f32.mrb[0].mxu0
  %v1711 = vadd.f32 %v1521, %v1710
  %v1712 = vpop.f32.mrb[0].mxu0
  %1713 = vmatprep.mubr.f32.mxu0 %v1468
  %1714 = vmatmul.mubr.f32.gmra.mrb[0].mxu0 %v1467
  %v1715 = vpop.f32.mrb[0].mxu0
  %v1716 = vadd.f32 %v1521, %v1715
  %v1717 = vpop.f32.mrb[0].mxu0
  %1718 = vmatprep.mubr.f32.mxu0 %v1473
  %1719 = vmatmul.mubr.f32.gmra.mrb[0].mxu0 %v1472
  %v1720 = vpop.f32.mrb[0].mxu0
  %v1721 = vadd.f32 %v1521, %v1720
  %v1722 = vpop.f32.mrb[0].mxu0
  %1723 = vmatprep.mubr.f32.mxu0 %v1478
  %1724 = vmatmul.mubr.f32.gmra.mrb[0].mxu0 %v1477
  %v1725 = vpop.f32.mrb[0].mxu0
  %v1726 = vadd.f32 %v1521, %v1725
  %v1727 = vpop.f32.mrb[0].mxu0
  %1728 = vmatprep.mubr.f32.mxu0 %v1483
  %1729 = vmatmul.mubr.f32.gmra.mrb[0].mxu0 %v1482
  %v1730 = vpop.f32.mrb[0].mxu0
  %v1731 = vadd.f32 %v1521, %v1730
  %v1732 = vpop.f32.mrb[0].mxu0
  %1733 = vmatprep.mubr.f32.mxu0 %v1488
  %1734 = vmatmul.mubr.f32.gmra.mrb[0].mxu0 %v1487
  %v1735 = vpop.f32.mrb[0].mxu0
  %v1736 = vadd.f32 %v1521, %v1735
  %v1737 = vpop.f32.mrb[0].mxu0
  %1738 = vmatprep.mubr.f32.mxu0 %v1493
  %1739 = vmatmul.mubr.f32.gmra.mrb[0].mxu0 %v1492
  %v1740 = vpop.f32.mrb[0].mxu0
  %v1741 = vadd.f32 %v1521, %v1740
  %v1742 = vpop.f32.mrb[0].mxu0
  %1743 = vmatprep.mubr.f32.mxu0 %v1498
  %1744 = vmatmul.mubr.f32.gmra.mrb[0].mxu0 %v1497
  %v1745 = vpop.f32.mrb[0].mxu0
  %v1746 = vadd.f32 %v1521, %v1745
  %v1747 = vpop.f32.mrb[0].mxu0
  %1748 = vmatprep.mubr.f32.mxu0 %v1503
  %1749 = vmatmul.mubr.f32.gmra.mrb[0].mxu0 %v1502
  %v1750 = vpop.f32.mrb[0].mxu0
  %v1751 = vadd.f32 %v1521, %v1750
  %v1752 = vpop.f32.mrb[0].mxu0
  %1753 = vmatprep.mubr.f32.mxu0 %v1508
  %1754 = vmatmul.mubr.f32.gmra.mrb[0].mxu0 %v1507
  %v1755 = vpop.f32.mrb[0].mxu0
  %v1756 = vadd.f32 %v1521, %v1755
  %v1757 = vpop.f32.mrb[0].mxu0
  %1758 = vmatprep.mubr.f32.mxu0 %v1513
  %1759 = vmatmul.mubr.f32.gmra.mrb[0].mxu0 %v1512
  %v1760 = vpop.f32.mrb[0].mxu0
  %v1761 = vadd.f32 %v1521, %v1760
  %v1762 = vpop.f32.mrb[0].mxu0
  %1763 = vdwg.mxu0
  %1764 = vmatprep.subr.mxu0 0.0
  %1765 = vmatpush1.msra.mxu0 %v617
  %1766 = vmatprep.subr.mxu0 0.0
  %1767 = vmatpush1.msra.mxu0 %v618
  %1768 = vmatprep.subr.mxu0 0.0
  %1769 = vmatpush1.msra.mxu0 %v619
  %1770 = vmatprep.subr.mxu0 0.0
  %1771 = vmatpush1.msra.mxu0 %v620
  %1772 = vmatprep.subr.mxu0 0.0
  %1773 = vmatpush1.msra.mxu0 %v621
  %1774 = vmatprep.subr.mxu0 0.0
  %1775 = vmatpush1.msra.mxu0 %v622
  %1776 = vmatprep.subr.mxu0 0.0
  %1777 = vmatpush1.msra.mxu0 %v623
  %1778 = vmatprep.subr.mxu0 0.0
  %1779 = vmatpush1.msra.mxu0 %v624
  %1780 = vmatprep.subr.mxu0 0.0
  %1781 = vmatpush1.msra.mxu0 %v625
  %1782 = vmatprep.subr.mxu0 0.0
  %1783 = vmatpush1.msra.mxu0 %v626
  %1784 = vmatprep.subr.mxu0 0.0
  %1785 = vmatpush1.msra.mxu0 %v627
  %1786 = vmatprep.subr.mxu0 0.0
  %1787 = vmatpush1.msra.mxu0 %v628
  %1788 = vmatprep.subr.mxu0 0.0
  %1789 = vmatpush1.msra.mxu0 %v629
  %1790 = vmatprep.subr.mxu0 0.0
  %1791 = vmatpush1.msra.mxu0 %v630
  %1792 = vmatprep.subr.mxu0 0.0
  %1793 = vmatpush1.msra.mxu0 %v631
  %1794 = vmatprep.subr.mxu0 0.0
  %1795 = vmatpush1.msra.mxu0 %v632
  %1796 = vmatprep.subr.mxu0 0.0
  %1797 = vmatpush1.msra.mxu0 %v633
  %1798 = vmatprep.subr.mxu0 0.0
  %1799 = vmatpush1.msra.mxu0 %v634
  %1800 = vmatprep.subr.mxu0 0.0
  %1801 = vmatpush1.msra.mxu0 %v635
  %1802 = vmatprep.subr.mxu0 0.0
  %1803 = vmatpush1.msra.mxu0 %v636
  %1804 = vmatprep.subr.mxu0 0.0
  %1805 = vmatpush1.msra.mxu0 %v637
  %1806 = vmatprep.subr.mxu0 0.0
  %1807 = vmatpush1.msra.mxu0 %v638
  %1808 = vmatprep.subr.mxu0 0.0
  %1809 = vmatpush1.msra.mxu0 %v639
  %1810 = vmatprep.subr.mxu0 0.0
  %1811 = vmatpush1.msra.mxu0 %v640
  %1812 = vmatprep.subr.mxu0 0.0
  %1813 = vmatpush1.msra.mxu0 %v641
  %1814 = vmatprep.subr.mxu0 0.0
  %1815 = vmatpush1.msra.mxu0 %v642
  %1816 = vmatprep.subr.mxu0 0.0
  %1817 = vmatpush1.msra.mxu0 %v643
  %1818 = vmatprep.subr.mxu0 0.0
  %1819 = vmatpush1.msra.mxu0 %v644
  %1820 = vmatprep.subr.mxu0 0.0
  %1821 = vmatpush1.msra.mxu0 %v645
  %1822 = vmatprep.subr.mxu0 0.0
  %1823 = vmatpush1.msra.mxu0 %v646
  %1824 = vmatprep.subr.mxu0 0.0
  %1825 = vmatpush1.msra.mxu0 %v647
  %1826 = vmatprep.subr.mxu0 0.0
  %1827 = vmatpush1.msra.mxu0 %v648
  %1828 = vmatprep.mubr.f32.mxu0 %v1410
  %1829 = vmatmul.mubr.f32.gmra.mrb[0].mxu0 %v1409
  %v1830 = vpop.f32.mrb[0].mxu0
  %v1831 = vadd.f32 %v1656, %v1830
  %v1832 = vpop.f32.mrb[0].mxu0
  %1833 = vmatprep.mubr.f32.mxu0 %v1415
  %1834 = vmatmul.mubr.f32.gmra.mrb[0].mxu0 %v1414
  %v1835 = vpop.f32.mrb[0].mxu0
  %v1836 = vadd.f32 %v1661, %v1835
  %v1837 = vpop.f32.mrb[0].mxu0
  %1838 = vmatprep.mubr.f32.mxu0 %v1420
  %1839 = vmatmul.mubr.f32.gmra.mrb[0].mxu0 %v1419
  %v1840 = vpop.f32.mrb[0].mxu0
  %v1841 = vadd.f32 %v1666, %v1840
  %v1842 = vpop.f32.mrb[0].mxu0
  %1843 = vmatprep.mubr.f32.mxu0 %v1425
  %1844 = vmatmul.mubr.f32.gmra.mrb[0].mxu0 %v1424
  %v1845 = vpop.f32.mrb[0].mxu0
  %v1846 = vadd.f32 %v1671, %v1845
  %v1847 = vpop.f32.mrb[0].mxu0
  %1848 = vmatprep.mubr.f32.mxu0 %v1430
  %1849 = vmatmul.mubr.f32.gmra.mrb[0].mxu0 %v1429
  %v1850 = vpop.f32.mrb[0].mxu0
  %v1851 = vadd.f32 %v1676, %v1850
  %v1852 = vpop.f32.mrb[0].mxu0
  %1853 = vmatprep.mubr.f32.mxu0 %v1435
  %1854 = vmatmul.mubr.f32.gmra.mrb[0].mxu0 %v1434
  %v1855 = vpop.f32.mrb[0].mxu0
  %v1856 = vadd.f32 %v1681, %v1855
  %v1857 = vpop.f32.mrb[0].mxu0
  %1858 = vmatprep.mubr.f32.mxu0 %v1440
  %1859 = vmatmul.mubr.f32.gmra.mrb[0].mxu0 %v1439
  %v1860 = vpop.f32.mrb[0].mxu0
  %v1861 = vadd.f32 %v1686, %v1860
  %v1862 = vpop.f32.mrb[0].mxu0
  %1863 = vmatprep.mubr.f32.mxu0 %v1445
  %1864 = vmatmul.mubr.f32.gmra.mrb[0].mxu0 %v1444
  %v1865 = vpop.f32.mrb[0].mxu0
  %v1866 = vadd.f32 %v1691, %v1865
  %v1867 = vpop.f32.mrb[0].mxu0
  %1868 = vmatprep.mubr.f32.mxu0 %v1450
  %1869 = vmatmul.mubr.f32.gmra.mrb[0].mxu0 %v1449
  %v1870 = vpop.f32.mrb[0].mxu0
  %v1871 = vadd.f32 %v1696, %v1870
  %v1872 = vpop.f32.mrb[0].mxu0
  %1873 = vmatprep.mubr.f32.mxu0 %v1455
  %1874 = vmatmul.mubr.f32.gmra.mrb[0].mxu0 %v1454
  %v1875 = vpop.f32.mrb[0].mxu0
  %v1876 = vadd.f32 %v1701, %v1875
  %v1877 = vpop.f32.mrb[0].mxu0
  %1878 = vmatprep.mubr.f32.mxu0 %v1460
  %1879 = vmatmul.mubr.f32.gmra.mrb[0].mxu0 %v1459
  %v1880 = vpop.f32.mrb[0].mxu0
  %v1881 = vadd.f32 %v1706, %v1880
  %v1882 = vpop.f32.mrb[0].mxu0
  %1883 = vmatprep.mubr.f32.mxu0 %v1465
  %1884 = vmatmul.mubr.f32.gmra.mrb[0].mxu0 %v1464
  %v1885 = vpop.f32.mrb[0].mxu0
  %v1886 = vadd.f32 %v1711, %v1885
  %v1887 = vpop.f32.mrb[0].mxu0
  %1888 = vmatprep.mubr.f32.mxu0 %v1470
  %1889 = vmatmul.mubr.f32.gmra.mrb[0].mxu0 %v1469
  %v1890 = vpop.f32.mrb[0].mxu0
  %v1891 = vadd.f32 %v1716, %v1890
  %v1892 = vpop.f32.mrb[0].mxu0
  %1893 = vmatprep.mubr.f32.mxu0 %v1475
  %1894 = vmatmul.mubr.f32.gmra.mrb[0].mxu0 %v1474
  %v1895 = vpop.f32.mrb[0].mxu0
  %v1896 = vadd.f32 %v1721, %v1895
  %v1897 = vpop.f32.mrb[0].mxu0
  %1898 = vmatprep.mubr.f32.mxu0 %v1480
  %1899 = vmatmul.mubr.f32.gmra.mrb[0].mxu0 %v1479
  %v1900 = vpop.f32.mrb[0].mxu0
  %v1901 = vadd.f32 %v1726, %v1900
  %v1902 = vpop.f32.mrb[0].mxu0
  %1903 = vmatprep.mubr.f32.mxu0 %v1485
  %1904 = vmatmul.mubr.f32.gmra.mrb[0].mxu0 %v1484
  %v1905 = vpop.f32.mrb[0].mxu0
  %v1906 = vadd.f32 %v1731, %v1905
  %v1907 = vpop.f32.mrb[0].mxu0
  %1908 = vmatprep.mubr.f32.mxu0 %v1490
  %1909 = vmatmul.mubr.f32.gmra.mrb[0].mxu0 %v1489
  %v1910 = vpop.f32.mrb[0].mxu0
  %v1911 = vadd.f32 %v1736, %v1910
  %v1912 = vpop.f32.mrb[0].mxu0
  %1913 = vmatprep.mubr.f32.mxu0 %v1495
  %1914 = vmatmul.mubr.f32.gmra.mrb[0].mxu0 %v1494
  %v1915 = vpop.f32.mrb[0].mxu0
  %v1916 = vadd.f32 %v1741, %v1915
  %v1917 = vpop.f32.mrb[0].mxu0
  %1918 = vmatprep.mubr.f32.mxu0 %v1500
  %1919 = vmatmul.mubr.f32.gmra.mrb[0].mxu0 %v1499
  %v1920 = vpop.f32.mrb[0].mxu0
  %v1921 = vadd.f32 %v1746, %v1920
  %v1922 = vpop.f32.mrb[0].mxu0
  %1923 = vmatprep.mubr.f32.mxu0 %v1505
  %1924 = vmatmul.mubr.f32.gmra.mrb[0].mxu0 %v1504
  %v1925 = vpop.f32.mrb[0].mxu0
  %v1926 = vadd.f32 %v1751, %v1925
  %v1927 = vpop.f32.mrb[0].mxu0
  %1928 = vmatprep.mubr.f32.mxu0 %v1510
  %1929 = vmatmul.mubr.f32.gmra.mrb[0].mxu0 %v1509
  %v1930 = vpop.f32.mrb[0].mxu0
  %v1931 = vadd.f32 %v1756, %v1930
  %v1932 = vpop.f32.mrb[0].mxu0
  %1933 = vmatprep.mubr.f32.mxu0 %v1515
  %1934 = vmatmul.mubr.f32.gmra.mrb[0].mxu0 %v1514
  %v1935 = vpop.f32.mrb[0].mxu0
  %v1936 = vadd.f32 %v1761, %v1935
  %v1937 = vpop.f32.mrb[0].mxu0
  %1938 = vdwg.mxu0
  %1939 = vmatprep.subr.mxu0 0.0
  %1940 = vmatpush1.msra.mxu0 %v649
  %1941 = vmatprep.subr.mxu0 0.0
  %1942 = vmatpush1.msra.mxu0 %v650
  %1943 = vmatprep.subr.mxu0 0.0
  %1944 = vmatpush1.msra.mxu0 %v651
  %1945 = vmatprep.subr.mxu0 0.0
  %1946 = vmatpush1.msra.mxu0 %v652
  %1947 = vmatprep.subr.mxu0 0.0
  %1948 = vmatpush1.msra.mxu0 %v653
  %1949 = vmatprep.subr.mxu0 0.0
  %1950 = vmatpush1.msra.mxu0 %v654
  %1951 = vmatprep.subr.mxu0 0.0
  %1952 = vmatpush1.msra.mxu0 %v655
  %1953 = vmatprep.subr.mxu0 0.0
  %1954 = vmatpush1.msra.mxu0 %v656
  %1955 = vmatprep.subr.mxu0 0.0
  %1956 = vmatpush1.msra.mxu0 0.0
  %1957 = vmatprep.subr.mxu0 0.0
  %1958 = vmatpush1.msra.mxu0 0.0
  %1959 = vmatprep.subr.mxu0 0.0
  %1960 = vmatpush1.msra.mxu0 0.0
  %1961 = vmatprep.subr.mxu0 0.0
  %1962 = vmatpush1.msra.mxu0 0.0
  %1963 = vmatprep.subr.mxu0 0.0
  %1964 = vmatpush1.msra.mxu0 0.0
  %1965 = vmatprep.subr.mxu0 0.0
  %1966 = vmatpush1.msra.mxu0 0.0
  %1967 = vmatprep.subr.mxu0 0.0
  %1968 = vmatpush1.msra.mxu0 0.0
  %1969 = vmatprep.subr.mxu0 0.0
  %1970 = vmatpush1.msra.mxu0 0.0
  %1971 = vmatprep.subr.mxu0 0.0
  %1972 = vmatpush1.msra.mxu0 0.0
  %1973 = vmatprep.subr.mxu0 0.0
  %1974 = vmatpush1.msra.mxu0 0.0
  %1975 = vmatprep.subr.mxu0 0.0
  %1976 = vmatpush1.msra.mxu0 0.0
  %1977 = vmatprep.subr.mxu0 0.0
  %1978 = vmatpush1.msra.mxu0 0.0
  %1979 = vmatprep.subr.mxu0 0.0
  %1980 = vmatpush1.msra.mxu0 0.0
  %1981 = vmatprep.subr.mxu0 0.0
  %1982 = vmatpush1.msra.mxu0 0.0
  %1983 = vmatprep.subr.mxu0 0.0
  %1984 = vmatpush1.msra.mxu0 0.0
  %1985 = vmatprep.subr.mxu0 0.0
  %1986 = vmatpush1.msra.mxu0 0.0
  %1987 = vmatprep.subr.mxu0 0.0
  %1988 = vmatpush1.msra.mxu0 0.0
  %1989 = vmatprep.subr.mxu0 0.0
  %1990 = vmatpush1.msra.mxu0 0.0
  %1991 = vmatprep.subr.mxu0 0.0
  %1992 = vmatpush1.msra.mxu0 0.0
  %1993 = vmatprep.subr.mxu0 0.0
  %1994 = vmatpush1.msra.mxu0 0.0
  %1995 = vmatprep.subr.mxu0 0.0
  %1996 = vmatpush1.msra.mxu0 0.0
  %1997 = vmatprep.subr.mxu0 0.0
  %1998 = vmatpush1.msra.mxu0 0.0
  %1999 = vmatprep.subr.mxu0 0.0
  %2000 = vmatpush1.msra.mxu0 0.0
  %2001 = vmatprep.subr.mxu0 0.0
  %2002 = vmatpush1.msra.mxu0 0.0
  %2003 = vmatprep.mubr.f32.mxu0 0.0
  %2004 = vmatmul.mubr.f32.gmra.mrb[0].mxu0 %v1524
  %v2005 = vpop.f32.mrb[0].mxu0
  %v2006 = vadd.f32 %v1831, %v2005
  %v2007 = vpop.f32.mrb[0].mxu0
  %2008 = vmatprep.mubr.f32.mxu0 0.0
  %2009 = vmatmul.mubr.f32.gmra.mrb[0].mxu0 %v1527
  %v2010 = vpop.f32.mrb[0].mxu0
  %v2011 = vadd.f32 %v1836, %v2010
  %v2012 = vpop.f32.mrb[0].mxu0
  %2013 = vmatprep.mubr.f32.mxu0 0.0
  %2014 = vmatmul.mubr.f32.gmra.mrb[0].mxu0 %v1530
  %v2015 = vpop.f32.mrb[0].mxu0
  %v2016 = vadd.f32 %v1841, %v2015
  %v2017 = vpop.f32.mrb[0].mxu0
  %2018 = vmatprep.mubr.f32.mxu0 0.0
  %2019 = vmatmul.mubr.f32.gmra.mrb[0].mxu0 %v1533
  %v2020 = vpop.f32.mrb[0].mxu0
  %v2021 = vadd.f32 %v1846, %v2020
  %v2022 = vpop.f32.mrb[0].mxu0
  %2023 = vmatprep.mubr.f32.mxu0 0.0
  %2024 = vmatmul.mubr.f32.gmra.mrb[0].mxu0 %v1536
  %v2025 = vpop.f32.mrb[0].mxu0
  %v2026 = vadd.f32 %v1851, %v2025
  %v2027 = vpop.f32.mrb[0].mxu0
  %2028 = vmatprep.mubr.f32.mxu0 0.0
  %2029 = vmatmul.mubr.f32.gmra.mrb[0].mxu0 %v1539
  %v2030 = vpop.f32.mrb[0].mxu0
  %v2031 = vadd.f32 %v1856, %v2030
  %v2032 = vpop.f32.mrb[0].mxu0
  %2033 = vmatprep.mubr.f32.mxu0 0.0
  %2034 = vmatmul.mubr.f32.gmra.mrb[0].mxu0 %v1542
  %v2035 = vpop.f32.mrb[0].mxu0
  %v2036 = vadd.f32 %v1861, %v2035
  %v2037 = vpop.f32.mrb[0].mxu0
  %2038 = vmatprep.mubr.f32.mxu0 0.0
  %2039 = vmatmul.mubr.f32.gmra.mrb[0].mxu0 %v1545
  %v2040 = vpop.f32.mrb[0].mxu0
  %v2041 = vadd.f32 %v1866, %v2040
  %v2042 = vpop.f32.mrb[0].mxu0
  %2043 = vmatprep.mubr.f32.mxu0 0.0
  %2044 = vmatmul.mubr.f32.gmra.mrb[0].mxu0 %v1548
  %v2045 = vpop.f32.mrb[0].mxu0
  %v2046 = vadd.f32 %v1871, %v2045
  %v2047 = vpop.f32.mrb[0].mxu0
  %2048 = vmatprep.mubr.f32.mxu0 0.0
  %2049 = vmatmul.mubr.f32.gmra.mrb[0].mxu0 %v1551
  %v2050 = vpop.f32.mrb[0].mxu0
  %v2051 = vadd.f32 %v1876, %v2050
  %v2052 = vpop.f32.mrb[0].mxu0
  %2053 = vmatprep.mubr.f32.mxu0 0.0
  %2054 = vmatmul.mubr.f32.gmra.mrb[0].mxu0 %v1554
  %v2055 = vpop.f32.mrb[0].mxu0
  %v2056 = vadd.f32 %v1881, %v2055
  %v2057 = vpop.f32.mrb[0].mxu0
  %2058 = vmatprep.mubr.f32.mxu0 0.0
  %2059 = vmatmul.mubr.f32.gmra.mrb[0].mxu0 %v1557
  %v2060 = vpop.f32.mrb[0].mxu0
  %v2061 = vadd.f32 %v1886, %v2060
  %v2062 = vpop.f32.mrb[0].mxu0
  %2063 = vmatprep.mubr.f32.mxu0 0.0
  %2064 = vmatmul.mubr.f32.gmra.mrb[0].mxu0 %v1560
  %v2065 = vpop.f32.mrb[0].mxu0
  %v2066 = vadd.f32 %v1891, %v2065
  %v2067 = vpop.f32.mrb[0].mxu0
  %2068 = vmatprep.mubr.f32.mxu0 0.0
  %2069 = vmatmul.mubr.f32.gmra.mrb[0].mxu0 %v1563
  %v2070 = vpop.f32.mrb[0].mxu0
  %v2071 = vadd.f32 %v1896, %v2070
  %v2072 = vpop.f32.mrb[0].mxu0
  %2073 = vmatprep.mubr.f32.mxu0 0.0
  %2074 = vmatmul.mubr.f32.gmra.mrb[0].mxu0 %v1566
  %v2075 = vpop.f32.mrb[0].mxu0
  %v2076 = vadd.f32 %v1901, %v2075
  %v2077 = vpop.f32.mrb[0].mxu0
  %2078 = vmatprep.mubr.f32.mxu0 0.0
  %2079 = vmatmul.mubr.f32.gmra.mrb[0].mxu0 %v1569
  %v2080 = vpop.f32.mrb[0].mxu0
  %v2081 = vadd.f32 %v1906, %v2080
  %v2082 = vpop.f32.mrb[0].mxu0
  %2083 = vmatprep.mubr.f32.mxu0 0.0
  %2084 = vmatmul.mubr.f32.gmra.mrb[0].mxu0 %v1572
  %v2085 = vpop.f32.mrb[0].mxu0
  %v2086 = vadd.f32 %v1911, %v2085
  %v2087 = vpop.f32.mrb[0].mxu0
  %2088 = vmatprep.mubr.f32.mxu0 0.0
  %2089 = vmatmul.mubr.f32.gmra.mrb[0].mxu0 %v1575
  %v2090 = vpop.f32.mrb[0].mxu0
  %v2091 = vadd.f32 %v1916, %v2090
  %v2092 = vpop.f32.mrb[0].mxu0
  %2093 = vmatprep.mubr.f32.mxu0 0.0
  %2094 = vmatmul.mubr.f32.gmra.mrb[0].mxu0 %v1578
  %v2095 = vpop.f32.mrb[0].mxu0
  %v2096 = vadd.f32 %v1921, %v2095
  %v2097 = vpop.f32.mrb[0].mxu0
  %2098 = vmatprep.mubr.f32.mxu0 0.0
  %2099 = vmatmul.mubr.f32.gmra.mrb[0].mxu0 %v1581
  %v2100 = vpop.f32.mrb[0].mxu0
  %v2101 = vadd.f32 %v1926, %v2100
  %v2102 = vpop.f32.mrb[0].mxu0
  %2103 = vmatprep.mubr.f32.mxu0 0.0
  %2104 = vmatmul.mubr.f32.gmra.mrb[0].mxu0 %v1584
  %v2105 = vpop.f32.mrb[0].mxu0
  %v2106 = vadd.f32 %v1931, %v2105
  %v2107 = vpop.f32.mrb[0].mxu0
  %2108 = vmatprep.mubr.f32.mxu0 0.0
  %2109 = vmatmul.mubr.f32.gmra.mrb[0].mxu0 %v1587
  %v2110 = vpop.f32.mrb[0].mxu0
  %v2111 = vadd.f32 %v1936, %v2110
  %v2112 = vpop.f32.mrb[0].mxu0
  %2113 = vdwg.mxu0
  %v2114 = vmax.f32 %v2006, 0.0
  %v2115 = vmax.f32 %v2011, 0.0
  %v2116 = vmax.f32 %v2016, 0.0
  %v2117 = vmax.f32 %v2021, 0.0
  %v2118 = vmax.f32 %v2026, 0.0
  %v2119 = vmax.f32 %v2031, 0.0
  %v2120 = vmax.f32 %v2036, 0.0
  %v2121 = vmax.f32 %v2041, 0.0
  %v2122 = vmax.f32 %v2046, 0.0
  %v2123 = vmax.f32 %v2051, 0.0
  %v2124 = vmax.f32 %v2056, 0.0
  %v2125 = vmax.f32 %v2061, 0.0
  %v2126 = vmax.f32 %v2066, 0.0
  %v2127 = vmax.f32 %v2071, 0.0
  %v2128 = vmax.f32 %v2076, 0.0
  %v2129 = vmax.f32 %v2081, 0.0
  %v2130 = vmax.f32 %v2086, 0.0
  %v2131 = vmax.f32 %v2091, 0.0
  %v2132 = vmax.f32 %v2096, 0.0
  %v2133 = vmax.f32 %v2101, 0.0
  %v2134 = vmax.f32 %v2106, 0.0
  %v2135 = vmax.f32 %v2111, 0.0
  %2136 = vst.msk [vmem:[#allocation3] sm:$0xff] %vm487, %v2114
  %2137 = vst.msk [vmem:[#allocation3 + $0x8] sm:$0xff] %vm487, %v2115
  %2138 = vst.msk [vmem:[#allocation3 + $0x10] sm:$0xff] %vm487, %v2116
  %2139 = vst.msk [vmem:[#allocation3 + $0x18] sm:$0xff] %vm487, %v2117
  %2140 = vst.msk [vmem:[#allocation3 + $0x20] sm:$0xff] %vm487, %v2118
  %2141 = vst.msk [vmem:[#allocation3 + $0x28] sm:$0xff] %vm487, %v2119
  %2142 = vst.msk [vmem:[#allocation3 + $0x30] sm:$0xff] %vm487, %v2120
  %2143 = vst.msk [vmem:[#allocation3 + $0x38] sm:$0xff] %vm487, %v2121
  %2144 = vst.msk [vmem:[#allocation3 + $0x40] sm:$0xff] %vm487, %v2122
  %2145 = vst.msk [vmem:[#allocation3 + $0x48] sm:$0xff] %vm487, %v2123
  %2146 = vst.msk [vmem:[#allocation3 + $0x50] sm:$0xff] %vm487, %v2124
  %2147 = vst.msk [vmem:[#allocation3 + $0x58] sm:$0xff] %vm487, %v2125
  %2148 = vst.msk [vmem:[#allocation3 + $0x60] sm:$0xff] %vm487, %v2126
  %2149 = vst.msk [vmem:[#allocation3 + $0x68] sm:$0xff] %vm487, %v2127
  %2150 = vst.msk [vmem:[#allocation3 + $0x70] sm:$0xff] %vm487, %v2128
  %2151 = vst.msk [vmem:[#allocation3 + $0x78] sm:$0xff] %vm487, %v2129
  %2152 = vst.msk [vmem:[#allocation3 + $0x80] sm:$0xff] %vm487, %v2130
  %2153 = vst.msk [vmem:[#allocation3 + $0x88] sm:$0xff] %vm487, %v2131
  %2154 = vst.msk [vmem:[#allocation3 + $0x90] sm:$0xff] %vm487, %v2132
  %2155 = vst.msk [vmem:[#allocation3 + $0x98] sm:$0xff] %vm487, %v2133
  %2156 = vst.msk [vmem:[#allocation3 + $0xa0] sm:$0xff] %vm487, %v2134
  %2157 = vst.msk [vmem:[#allocation3 + $0xa8] sm:$0xff] %vm487, %v2135
  %v2158 = vld [vmem:[#allocation3] sm:$0xff]
  %v2159 = vld [vmem:[#allocation3 + $0x8] sm:$0xff]
  %v2160 = vld [vmem:[#allocation3 + $0x10] sm:$0xff]
  %v2161 = vld [vmem:[#allocation3 + $0x18] sm:$0xff]
  %v2162 = vld [vmem:[#allocation3 + $0x20] sm:$0xff]
  %v2163 = vld [vmem:[#allocation3 + $0x28] sm:$0xff]
  %v2164 = vld [vmem:[#allocation3 + $0x30] sm:$0xff]
  %v2165 = vld [vmem:[#allocation3 + $0x38] sm:$0xff]
  %v2166 = vld [vmem:[#allocation3 + $0x40] sm:$0xff]
  %v2167 = vld [vmem:[#allocation3 + $0x48] sm:$0xff]
  %v2168 = vld [vmem:[#allocation3 + $0x50] sm:$0xff]
  %v2169 = vld [vmem:[#allocation3 + $0x58] sm:$0xff]
  %v2170 = vld [vmem:[#allocation3 + $0x60] sm:$0xff]
  %v2171 = vld [vmem:[#allocation3 + $0x68] sm:$0xff]
  %v2172 = vld [vmem:[#allocation3 + $0x70] sm:$0xff]
  %v2173 = vld [vmem:[#allocation3 + $0x78] sm:$0xff]
  %v2174 = vld [vmem:[#allocation3 + $0x80] sm:$0xff]
  %v2175 = vld [vmem:[#allocation3 + $0x88] sm:$0xff]
  %v2176 = vld [vmem:[#allocation3 + $0x90] sm:$0xff]
  %2177 = vst.msk [vmem:[#allocation4] sm:$0xff] %vm487, %v2158
  %2178 = vst.msk [vmem:[#allocation4 + $0x28] sm:$0xff] %vm487, %v2159
  %2179 = vst.msk [vmem:[#allocation4 + $0x50] sm:$0xff] %vm487, %v2160
  %2180 = vst.msk [vmem:[#allocation4 + $0x78] sm:$0xff] %vm487, %v2161
  %2181 = vst.msk [vmem:[#allocation4 + $0xa0] sm:$0xff] %vm487, %v2162
  %2182 = vst.msk [vmem:[#allocation4 + $0xc8] sm:$0xff] %vm487, %v2163
  %2183 = vst.msk [vmem:[#allocation4 + $0xf0] sm:$0xff] %vm487, %v2164
  %2184 = vst.msk [vmem:[#allocation4 + $0x118] sm:$0xff] %vm487, %v2165
  %2185 = vst.msk [vmem:[#allocation4 + $0x140] sm:$0xff] %vm487, %v2166
  %2186 = vst.msk [vmem:[#allocation4 + $0x168] sm:$0xff] %vm487, %v2167
  %2187 = vst.msk [vmem:[#allocation4 + $0x190] sm:$0xff] %vm487, %v2168
  %2188 = vst.msk [vmem:[#allocation4 + $0x1b8] sm:$0xff] %vm487, %v2169
  %2189 = vst.msk [vmem:[#allocation4 + $0x1e0] sm:$0xff] %vm487, %v2170
  %2190 = vst.msk [vmem:[#allocation4 + $0x208] sm:$0xff] %vm487, %v2171
  %2191 = vst.msk [vmem:[#allocation4 + $0x230] sm:$0xff] %vm487, %v2172
  %2192 = vst.msk [vmem:[#allocation4 + $0x258] sm:$0xff] %vm487, %v2173
  %2193 = vst.msk [vmem:[#allocation4 + $0x280] sm:$0xff] %vm487, %v2174
  %2194 = vst.msk [vmem:[#allocation4 + $0x2a8] sm:$0xff] %vm487, %v2175
  %2195 = vst.msk [vmem:[#allocation4 + $0x2d0] sm:$0xff] %vm487, %v2176
  %v2196 = vld [vmem:[#allocation3 + $0x1] sm:$0xff]
  %v2197 = vld [vmem:[#allocation3 + $0x9] sm:$0xff]
  %v2198 = vld [vmem:[#allocation3 + $0x11] sm:$0xff]
  %v2199 = vld [vmem:[#allocation3 + $0x19] sm:$0xff]
  %v2200 = vld [vmem:[#allocation3 + $0x21] sm:$0xff]
  %v2201 = vld [vmem:[#allocation3 + $0x29] sm:$0xff]
  %v2202 = vld [vmem:[#allocation3 + $0x31] sm:$0xff]
  %v2203 = vld [vmem:[#allocation3 + $0x39] sm:$0xff]
  %v2204 = vld [vmem:[#allocation3 + $0x41] sm:$0xff]
  %v2205 = vld [vmem:[#allocation3 + $0x49] sm:$0xff]
  %v2206 = vld [vmem:[#allocation3 + $0x51] sm:$0xff]
  %v2207 = vld [vmem:[#allocation3 + $0x59] sm:$0xff]
  %v2208 = vld [vmem:[#allocation3 + $0x61] sm:$0xff]
  %v2209 = vld [vmem:[#allocation3 + $0x69] sm:$0xff]
  %v2210 = vld [vmem:[#allocation3 + $0x71] sm:$0xff]
  %v2211 = vld [vmem:[#allocation3 + $0x79] sm:$0xff]
  %v2212 = vld [vmem:[#allocation3 + $0x81] sm:$0xff]
  %v2213 = vld [vmem:[#allocation3 + $0x89] sm:$0xff]
  %v2214 = vld [vmem:[#allocation3 + $0x91] sm:$0xff]
  %2234 = vrot.lane.b32.xlu0 %v2196, 64
  %v2235 = vpop.permute.xlu0 %2234
  %2236 = vrot.lane.b32.xlu0 %v2197, 64
  %v2237 = vpop.permute.xlu0 %2236
  %2238 = vrot.lane.b32.xlu0 %v2198, 64
  %v2239 = vpop.permute.xlu0 %2238
  %2240 = vrot.lane.b32.xlu0 %v2199, 64
  %v2241 = vpop.permute.xlu0 %2240
  %2242 = vrot.lane.b32.xlu0 %v2200, 64
  %v2243 = vpop.permute.xlu0 %2242
  %2244 = vrot.lane.b32.xlu0 %v2201, 64
  %v2245 = vpop.permute.xlu0 %2244
  %2246 = vrot.lane.b32.xlu0 %v2202, 64
  %v2247 = vpop.permute.xlu0 %2246
  %2248 = vrot.lane.b32.xlu0 %v2203, 64
  %v2249 = vpop.permute.xlu0 %2248
  %2250 = vrot.lane.b32.xlu0 %v2204, 64
  %v2251 = vpop.permute.xlu0 %2250
  %2252 = vrot.lane.b32.xlu0 %v2205, 64
  %v2253 = vpop.permute.xlu0 %2252
  %2254 = vrot.lane.b32.xlu0 %v2206, 64
  %v2255 = vpop.permute.xlu0 %2254
  %2256 = vrot.lane.b32.xlu0 %v2207, 64
  %v2257 = vpop.permute.xlu0 %2256
  %2258 = vrot.lane.b32.xlu0 %v2208, 64
  %v2259 = vpop.permute.xlu0 %2258
  %2260 = vrot.lane.b32.xlu0 %v2209, 64
  %v2261 = vpop.permute.xlu0 %2260
  %2262 = vrot.lane.b32.xlu0 %v2210, 64
  %v2263 = vpop.permute.xlu0 %2262
  %2264 = vrot.lane.b32.xlu0 %v2211, 64
  %v2265 = vpop.permute.xlu0 %2264
  %2266 = vrot.lane.b32.xlu0 %v2212, 64
  %v2267 = vpop.permute.xlu0 %2266
  %2268 = vrot.lane.b32.xlu0 %v2213, 64
  %v2269 = vpop.permute.xlu0 %2268
  %2270 = vrot.lane.b32.xlu0 %v2214, 64
  %v2271 = vpop.permute.xlu0 %2270
  %2291 = vst.msk [vmem:[#allocation4] sm:$0xff] %vm812, %v2235
  %2292 = vst.msk [vmem:[#allocation4 + $0x28] sm:$0xff] %vm812, %v2237
  %2293 = vst.msk [vmem:[#allocation4 + $0x50] sm:$0xff] %vm812, %v2239
  %2294 = vst.msk [vmem:[#allocation4 + $0x78] sm:$0xff] %vm812, %v2241
  %2295 = vst.msk [vmem:[#allocation4 + $0xa0] sm:$0xff] %vm812, %v2243
  %2296 = vst.msk [vmem:[#allocation4 + $0xc8] sm:$0xff] %vm812, %v2245
  %2297 = vst.msk [vmem:[#allocation4 + $0xf0] sm:$0xff] %vm812, %v2247
  %2298 = vst.msk [vmem:[#allocation4 + $0x118] sm:$0xff] %vm812, %v2249
  %2299 = vst.msk [vmem:[#allocation4 + $0x140] sm:$0xff] %vm812, %v2251
  %2300 = vst.msk [vmem:[#allocation4 + $0x168] sm:$0xff] %vm812, %v2253
  %2301 = vst.msk [vmem:[#allocation4 + $0x190] sm:$0xff] %vm812, %v2255
  %2302 = vst.msk [vmem:[#allocation4 + $0x1b8] sm:$0xff] %vm812, %v2257
  %2303 = vst.msk [vmem:[#allocation4 + $0x1e0] sm:$0xff] %vm812, %v2259
  %2304 = vst.msk [vmem:[#allocation4 + $0x208] sm:$0xff] %vm812, %v2261
  %2305 = vst.msk [vmem:[#allocation4 + $0x230] sm:$0xff] %vm812, %v2263
  %2306 = vst.msk [vmem:[#allocation4 + $0x258] sm:$0xff] %vm812, %v2265
  %2307 = vst.msk [vmem:[#allocation4 + $0x280] sm:$0xff] %vm812, %v2267
  %2308 = vst.msk [vmem:[#allocation4 + $0x2a8] sm:$0xff] %vm812, %v2269
  %2309 = vst.msk [vmem:[#allocation4 + $0x2d0] sm:$0xff] %vm812, %v2271
  %v2310 = vld [vmem:[#allocation3 + $0x2] sm:$0xff]
  %v2311 = vld [vmem:[#allocation3 + $0xa] sm:$0xff]
  %v2312 = vld [vmem:[#allocation3 + $0x12] sm:$0xff]
  %v2313 = vld [vmem:[#allocation3 + $0x1a] sm:$0xff]
  %v2314 = vld [vmem:[#allocation3 + $0x22] sm:$0xff]
  %v2315 = vld [vmem:[#allocation3 + $0x2a] sm:$0xff]
  %v2316 = vld [vmem:[#allocation3 + $0x32] sm:$0xff]
  %v2317 = vld [vmem:[#allocation3 + $0x3a] sm:$0xff]
  %v2318 = vld [vmem:[#allocation3 + $0x42] sm:$0xff]
  %v2319 = vld [vmem:[#allocation3 + $0x4a] sm:$0xff]
  %v2320 = vld [vmem:[#allocation3 + $0x52] sm:$0xff]
  %v2321 = vld [vmem:[#allocation3 + $0x5a] sm:$0xff]
  %v2322 = vld [vmem:[#allocation3 + $0x62] sm:$0xff]
  %v2323 = vld [vmem:[#allocation3 + $0x6a] sm:$0xff]
  %v2324 = vld [vmem:[#allocation3 + $0x72] sm:$0xff]
  %v2325 = vld [vmem:[#allocation3 + $0x7a] sm:$0xff]
  %v2326 = vld [vmem:[#allocation3 + $0x82] sm:$0xff]
  %v2327 = vld [vmem:[#allocation3 + $0x8a] sm:$0xff]
  %v2328 = vld [vmem:[#allocation3 + $0x92] sm:$0xff]
  %2329 = vst.msk [vmem:[#allocation4 + $0x8] sm:$0xff] %vm487, %v2310
  %2330 = vst.msk [vmem:[#allocation4 + $0x30] sm:$0xff] %vm487, %v2311
  %2331 = vst.msk [vmem:[#allocation4 + $0x58] sm:$0xff] %vm487, %v2312
  %2332 = vst.msk [vmem:[#allocation4 + $0x80] sm:$0xff] %vm487, %v2313
  %2333 = vst.msk [vmem:[#allocation4 + $0xa8] sm:$0xff] %vm487, %v2314
  %2334 = vst.msk [vmem:[#allocation4 + $0xd0] sm:$0xff] %vm487, %v2315
  %2335 = vst.msk [vmem:[#allocation4 + $0xf8] sm:$0xff] %vm487, %v2316
  %2336 = vst.msk [vmem:[#allocation4 + $0x120] sm:$0xff] %vm487, %v2317
  %2337 = vst.msk [vmem:[#allocation4 + $0x148] sm:$0xff] %vm487, %v2318
  %2338 = vst.msk [vmem:[#allocation4 + $0x170] sm:$0xff] %vm487, %v2319
  %2339 = vst.msk [vmem:[#allocation4 + $0x198] sm:$0xff] %vm487, %v2320
  %2340 = vst.msk [vmem:[#allocation4 + $0x1c0] sm:$0xff] %vm487, %v2321
  %2341 = vst.msk [vmem:[#allocation4 + $0x1e8] sm:$0xff] %vm487, %v2322
  %2342 = vst.msk [vmem:[#allocation4 + $0x210] sm:$0xff] %vm487, %v2323
  %2343 = vst.msk [vmem:[#allocation4 + $0x238] sm:$0xff] %vm487, %v2324
  %2344 = vst.msk [vmem:[#allocation4 + $0x260] sm:$0xff] %vm487, %v2325
  %2345 = vst.msk [vmem:[#allocation4 + $0x288] sm:$0xff] %vm487, %v2326
  %2346 = vst.msk [vmem:[#allocation4 + $0x2b0] sm:$0xff] %vm487, %v2327
  %2347 = vst.msk [vmem:[#allocation4 + $0x2d8] sm:$0xff] %vm487, %v2328
  %v2348 = vld [vmem:[#allocation3 + $0xa] sm:$0xff]
  %v2349 = vld [vmem:[#allocation3 + $0x12] sm:$0xff]
  %v2350 = vld [vmem:[#allocation3 + $0x1a] sm:$0xff]
  %v2351 = vld [vmem:[#allocation3 + $0x22] sm:$0xff]
  %v2352 = vld [vmem:[#allocation3 + $0x2a] sm:$0xff]
  %v2353 = vld [vmem:[#allocation3 + $0x32] sm:$0xff]
  %v2354 = vld [vmem:[#allocation3 + $0x3a] sm:$0xff]
  %v2355 = vld [vmem:[#allocation3 + $0x42] sm:$0xff]
  %v2356 = vld [vmem:[#allocation3 + $0x4a] sm:$0xff]
  %v2357 = vld [vmem:[#allocation3 + $0x52] sm:$0xff]
  %v2358 = vld [vmem:[#allocation3 + $0x5a] sm:$0xff]
  %v2359 = vld [vmem:[#allocation3 + $0x62] sm:$0xff]
  %v2360 = vld [vmem:[#allocation3 + $0x6a] sm:$0xff]
  %v2361 = vld [vmem:[#allocation3 + $0x72] sm:$0xff]
  %v2362 = vld [vmem:[#allocation3 + $0x7a] sm:$0xff]
  %v2363 = vld [vmem:[#allocation3 + $0x82] sm:$0xff]
  %v2364 = vld [vmem:[#allocation3 + $0x8a] sm:$0xff]
  %v2365 = vld [vmem:[#allocation3 + $0x92] sm:$0xff]
  %v2366 = vld [vmem:[#allocation3 + $0x9a] sm:$0xff]
  %2386 = vrot.lane.b32.xlu0 %v2348, 64
  %v2387 = vpop.permute.xlu0 %2386
  %2388 = vrot.lane.b32.xlu0 %v2349, 64
  %v2389 = vpop.permute.xlu0 %2388
  %2390 = vrot.lane.b32.xlu0 %v2350, 64
  %v2391 = vpop.permute.xlu0 %2390
  %2392 = vrot.lane.b32.xlu0 %v2351, 64
  %v2393 = vpop.permute.xlu0 %2392
  %2394 = vrot.lane.b32.xlu0 %v2352, 64
  %v2395 = vpop.permute.xlu0 %2394
  %2396 = vrot.lane.b32.xlu0 %v2353, 64
  %v2397 = vpop.permute.xlu0 %2396
  %2398 = vrot.lane.b32.xlu0 %v2354, 64
  %v2399 = vpop.permute.xlu0 %2398
  %2400 = vrot.lane.b32.xlu0 %v2355, 64
  %v2401 = vpop.permute.xlu0 %2400
  %2402 = vrot.lane.b32.xlu0 %v2356, 64
  %v2403 = vpop.permute.xlu0 %2402
  %2404 = vrot.lane.b32.xlu0 %v2357, 64
  %v2405 = vpop.permute.xlu0 %2404
  %2406 = vrot.lane.b32.xlu0 %v2358, 64
  %v2407 = vpop.permute.xlu0 %2406
  %2408 = vrot.lane.b32.xlu0 %v2359, 64
  %v2409 = vpop.permute.xlu0 %2408
  %2410 = vrot.lane.b32.xlu0 %v2360, 64
  %v2411 = vpop.permute.xlu0 %2410
  %2412 = vrot.lane.b32.xlu0 %v2361, 64
  %v2413 = vpop.permute.xlu0 %2412
  %2414 = vrot.lane.b32.xlu0 %v2362, 64
  %v2415 = vpop.permute.xlu0 %2414
  %2416 = vrot.lane.b32.xlu0 %v2363, 64
  %v2417 = vpop.permute.xlu0 %2416
  %2418 = vrot.lane.b32.xlu0 %v2364, 64
  %v2419 = vpop.permute.xlu0 %2418
  %2420 = vrot.lane.b32.xlu0 %v2365, 64
  %v2421 = vpop.permute.xlu0 %2420
  %2422 = vrot.lane.b32.xlu0 %v2366, 64
  %v2423 = vpop.permute.xlu0 %2422
  %2443 = vst.msk [vmem:[#allocation4 + $0x8] sm:$0xff] %vm812, %v2387
  %2444 = vst.msk [vmem:[#allocation4 + $0x30] sm:$0xff] %vm812, %v2389
  %2445 = vst.msk [vmem:[#allocation4 + $0x58] sm:$0xff] %vm812, %v2391
  %2446 = vst.msk [vmem:[#allocation4 + $0x80] sm:$0xff] %vm812, %v2393
  %2447 = vst.msk [vmem:[#allocation4 + $0xa8] sm:$0xff] %vm812, %v2395
  %2448 = vst.msk [vmem:[#allocation4 + $0xd0] sm:$0xff] %vm812, %v2397
  %2449 = vst.msk [vmem:[#allocation4 + $0xf8] sm:$0xff] %vm812, %v2399
  %2450 = vst.msk [vmem:[#allocation4 + $0x120] sm:$0xff] %vm812, %v2401
  %2451 = vst.msk [vmem:[#allocation4 + $0x148] sm:$0xff] %vm812, %v2403
  %2452 = vst.msk [vmem:[#allocation4 + $0x170] sm:$0xff] %vm812, %v2405
  %2453 = vst.msk [vmem:[#allocation4 + $0x198] sm:$0xff] %vm812, %v2407
  %2454 = vst.msk [vmem:[#allocation4 + $0x1c0] sm:$0xff] %vm812, %v2409
  %2455 = vst.msk [vmem:[#allocation4 + $0x1e8] sm:$0xff] %vm812, %v2411
  %2456 = vst.msk [vmem:[#allocation4 + $0x210] sm:$0xff] %vm812, %v2413
  %2457 = vst.msk [vmem:[#allocation4 + $0x238] sm:$0xff] %vm812, %v2415
  %2458 = vst.msk [vmem:[#allocation4 + $0x260] sm:$0xff] %vm812, %v2417
  %2459 = vst.msk [vmem:[#allocation4 + $0x288] sm:$0xff] %vm812, %v2419
  %2460 = vst.msk [vmem:[#allocation4 + $0x2b0] sm:$0xff] %vm812, %v2421
  %2461 = vst.msk [vmem:[#allocation4 + $0x2d8] sm:$0xff] %vm812, %v2423
  %v2462 = vld [vmem:[#allocation3 + $0xb] sm:$0xff]
  %v2463 = vld [vmem:[#allocation3 + $0x13] sm:$0xff]
  %v2464 = vld [vmem:[#allocation3 + $0x1b] sm:$0xff]
  %v2465 = vld [vmem:[#allocation3 + $0x23] sm:$0xff]
  %v2466 = vld [vmem:[#allocation3 + $0x2b] sm:$0xff]
  %v2467 = vld [vmem:[#allocation3 + $0x33] sm:$0xff]
  %v2468 = vld [vmem:[#allocation3 + $0x3b] sm:$0xff]
  %v2469 = vld [vmem:[#allocation3 + $0x43] sm:$0xff]
  %v2470 = vld [vmem:[#allocation3 + $0x4b] sm:$0xff]
  %v2471 = vld [vmem:[#allocation3 + $0x53] sm:$0xff]
  %v2472 = vld [vmem:[#allocation3 + $0x5b] sm:$0xff]
  %v2473 = vld [vmem:[#allocation3 + $0x63] sm:$0xff]
  %v2474 = vld [vmem:[#allocation3 + $0x6b] sm:$0xff]
  %v2475 = vld [vmem:[#allocation3 + $0x73] sm:$0xff]
  %v2476 = vld [vmem:[#allocation3 + $0x7b] sm:$0xff]
  %v2477 = vld [vmem:[#allocation3 + $0x83] sm:$0xff]
  %v2478 = vld [vmem:[#allocation3 + $0x8b] sm:$0xff]
  %v2479 = vld [vmem:[#allocation3 + $0x93] sm:$0xff]
  %v2480 = vld [vmem:[#allocation3 + $0x9b] sm:$0xff]
  %2481 = vst.msk [vmem:[#allocation4 + $0x10] sm:$0xff] %vm487, %v2462
  %2482 = vst.msk [vmem:[#allocation4 + $0x38] sm:$0xff] %vm487, %v2463
  %2483 = vst.msk [vmem:[#allocation4 + $0x60] sm:$0xff] %vm487, %v2464
  %2484 = vst.msk [vmem:[#allocation4 + $0x88] sm:$0xff] %vm487, %v2465
  %2485 = vst.msk [vmem:[#allocation4 + $0xb0] sm:$0xff] %vm487, %v2466
  %2486 = vst.msk [vmem:[#allocation4 + $0xd8] sm:$0xff] %vm487, %v2467
  %2487 = vst.msk [vmem:[#allocation4 + $0x100] sm:$0xff] %vm487, %v2468
  %2488 = vst.msk [vmem:[#allocation4 + $0x128] sm:$0xff] %vm487, %v2469
  %2489 = vst.msk [vmem:[#allocation4 + $0x150] sm:$0xff] %vm487, %v2470
  %2490 = vst.msk [vmem:[#allocation4 + $0x178] sm:$0xff] %vm487, %v2471
  %2491 = vst.msk [vmem:[#allocation4 + $0x1a0] sm:$0xff] %vm487, %v2472
  %2492 = vst.msk [vmem:[#allocation4 + $0x1c8] sm:$0xff] %vm487, %v2473
  %2493 = vst.msk [vmem:[#allocation4 + $0x1f0] sm:$0xff] %vm487, %v2474
  %2494 = vst.msk [vmem:[#allocation4 + $0x218] sm:$0xff] %vm487, %v2475
  %2495 = vst.msk [vmem:[#allocation4 + $0x240] sm:$0xff] %vm487, %v2476
  %2496 = vst.msk [vmem:[#allocation4 + $0x268] sm:$0xff] %vm487, %v2477
  %2497 = vst.msk [vmem:[#allocation4 + $0x290] sm:$0xff] %vm487, %v2478
  %2498 = vst.msk [vmem:[#allocation4 + $0x2b8] sm:$0xff] %vm487, %v2479
  %2499 = vst.msk [vmem:[#allocation4 + $0x2e0] sm:$0xff] %vm487, %v2480
  %v2500 = vld [vmem:[#allocation3 + $0xc] sm:$0xff]
  %v2501 = vld [vmem:[#allocation3 + $0x14] sm:$0xff]
  %v2502 = vld [vmem:[#allocation3 + $0x1c] sm:$0xff]
  %v2503 = vld [vmem:[#allocation3 + $0x24] sm:$0xff]
  %v2504 = vld [vmem:[#allocation3 + $0x2c] sm:$0xff]
  %v2505 = vld [vmem:[#allocation3 + $0x34] sm:$0xff]
  %v2506 = vld [vmem:[#allocation3 + $0x3c] sm:$0xff]
  %v2507 = vld [vmem:[#allocation3 + $0x44] sm:$0xff]
  %v2508 = vld [vmem:[#allocation3 + $0x4c] sm:$0xff]
  %v2509 = vld [vmem:[#allocation3 + $0x54] sm:$0xff]
  %v2510 = vld [vmem:[#allocation3 + $0x5c] sm:$0xff]
  %v2511 = vld [vmem:[#allocation3 + $0x64] sm:$0xff]
  %v2512 = vld [vmem:[#allocation3 + $0x6c] sm:$0xff]
  %v2513 = vld [vmem:[#allocation3 + $0x74] sm:$0xff]
  %v2514 = vld [vmem:[#allocation3 + $0x7c] sm:$0xff]
  %v2515 = vld [vmem:[#allocation3 + $0x84] sm:$0xff]
  %v2516 = vld [vmem:[#allocation3 + $0x8c] sm:$0xff]
  %v2517 = vld [vmem:[#allocation3 + $0x94] sm:$0xff]
  %v2518 = vld [vmem:[#allocation3 + $0x9c] sm:$0xff]
  %2538 = vrot.lane.b32.xlu0 %v2500, 64
  %v2539 = vpop.permute.xlu0 %2538
  %2540 = vrot.lane.b32.xlu0 %v2501, 64
  %v2541 = vpop.permute.xlu0 %2540
  %2542 = vrot.lane.b32.xlu0 %v2502, 64
  %v2543 = vpop.permute.xlu0 %2542
  %2544 = vrot.lane.b32.xlu0 %v2503, 64
  %v2545 = vpop.permute.xlu0 %2544
  %2546 = vrot.lane.b32.xlu0 %v2504, 64
  %v2547 = vpop.permute.xlu0 %2546
  %2548 = vrot.lane.b32.xlu0 %v2505, 64
  %v2549 = vpop.permute.xlu0 %2548
  %2550 = vrot.lane.b32.xlu0 %v2506, 64
  %v2551 = vpop.permute.xlu0 %2550
  %2552 = vrot.lane.b32.xlu0 %v2507, 64
  %v2553 = vpop.permute.xlu0 %2552
  %2554 = vrot.lane.b32.xlu0 %v2508, 64
  %v2555 = vpop.permute.xlu0 %2554
  %2556 = vrot.lane.b32.xlu0 %v2509, 64
  %v2557 = vpop.permute.xlu0 %2556
  %2558 = vrot.lane.b32.xlu0 %v2510, 64
  %v2559 = vpop.permute.xlu0 %2558
  %2560 = vrot.lane.b32.xlu0 %v2511, 64
  %v2561 = vpop.permute.xlu0 %2560
  %2562 = vrot.lane.b32.xlu0 %v2512, 64
  %v2563 = vpop.permute.xlu0 %2562
  %2564 = vrot.lane.b32.xlu0 %v2513, 64
  %v2565 = vpop.permute.xlu0 %2564
  %2566 = vrot.lane.b32.xlu0 %v2514, 64
  %v2567 = vpop.permute.xlu0 %2566
  %2568 = vrot.lane.b32.xlu0 %v2515, 64
  %v2569 = vpop.permute.xlu0 %2568
  %2570 = vrot.lane.b32.xlu0 %v2516, 64
  %v2571 = vpop.permute.xlu0 %2570
  %2572 = vrot.lane.b32.xlu0 %v2517, 64
  %v2573 = vpop.permute.xlu0 %2572
  %2574 = vrot.lane.b32.xlu0 %v2518, 64
  %v2575 = vpop.permute.xlu0 %2574
  %2595 = vst.msk [vmem:[#allocation4 + $0x10] sm:$0xff] %vm812, %v2539
  %2596 = vst.msk [vmem:[#allocation4 + $0x38] sm:$0xff] %vm812, %v2541
  %2597 = vst.msk [vmem:[#allocation4 + $0x60] sm:$0xff] %vm812, %v2543
  %2598 = vst.msk [vmem:[#allocation4 + $0x88] sm:$0xff] %vm812, %v2545
  %2599 = vst.msk [vmem:[#allocation4 + $0xb0] sm:$0xff] %vm812, %v2547
  %2600 = vst.msk [vmem:[#allocation4 + $0xd8] sm:$0xff] %vm812, %v2549
  %2601 = vst.msk [vmem:[#allocation4 + $0x100] sm:$0xff] %vm812, %v2551
  %2602 = vst.msk [vmem:[#allocation4 + $0x128] sm:$0xff] %vm812, %v2553
  %2603 = vst.msk [vmem:[#allocation4 + $0x150] sm:$0xff] %vm812, %v2555
  %2604 = vst.msk [vmem:[#allocation4 + $0x178] sm:$0xff] %vm812, %v2557
  %2605 = vst.msk [vmem:[#allocation4 + $0x1a0] sm:$0xff] %vm812, %v2559
  %2606 = vst.msk [vmem:[#allocation4 + $0x1c8] sm:$0xff] %vm812, %v2561
  %2607 = vst.msk [vmem:[#allocation4 + $0x1f0] sm:$0xff] %vm812, %v2563
  %2608 = vst.msk [vmem:[#allocation4 + $0x218] sm:$0xff] %vm812, %v2565
  %2609 = vst.msk [vmem:[#allocation4 + $0x240] sm:$0xff] %vm812, %v2567
  %2610 = vst.msk [vmem:[#allocation4 + $0x268] sm:$0xff] %vm812, %v2569
  %2611 = vst.msk [vmem:[#allocation4 + $0x290] sm:$0xff] %vm812, %v2571
  %2612 = vst.msk [vmem:[#allocation4 + $0x2b8] sm:$0xff] %vm812, %v2573
  %2613 = vst.msk [vmem:[#allocation4 + $0x2e0] sm:$0xff] %vm812, %v2575
  %v2614 = vld [vmem:[#allocation3 + $0x14] sm:$0xff]
  %v2615 = vld [vmem:[#allocation3 + $0x1c] sm:$0xff]
  %v2616 = vld [vmem:[#allocation3 + $0x24] sm:$0xff]
  %v2617 = vld [vmem:[#allocation3 + $0x2c] sm:$0xff]
  %v2618 = vld [vmem:[#allocation3 + $0x34] sm:$0xff]
  %v2619 = vld [vmem:[#allocation3 + $0x3c] sm:$0xff]
  %v2620 = vld [vmem:[#allocation3 + $0x44] sm:$0xff]
  %v2621 = vld [vmem:[#allocation3 + $0x4c] sm:$0xff]
  %v2622 = vld [vmem:[#allocation3 + $0x54] sm:$0xff]
  %v2623 = vld [vmem:[#allocation3 + $0x5c] sm:$0xff]
  %v2624 = vld [vmem:[#allocation3 + $0x64] sm:$0xff]
  %v2625 = vld [vmem:[#allocation3 + $0x6c] sm:$0xff]
  %v2626 = vld [vmem:[#allocation3 + $0x74] sm:$0xff]
  %v2627 = vld [vmem:[#allocation3 + $0x7c] sm:$0xff]
  %v2628 = vld [vmem:[#allocation3 + $0x84] sm:$0xff]
  %v2629 = vld [vmem:[#allocation3 + $0x8c] sm:$0xff]
  %v2630 = vld [vmem:[#allocation3 + $0x94] sm:$0xff]
  %v2631 = vld [vmem:[#allocation3 + $0x9c] sm:$0xff]
  %v2632 = vld [vmem:[#allocation3 + $0xa4] sm:$0xff]
  %2633 = vst.msk [vmem:[#allocation4 + $0x18] sm:$0xff] %vm487, %v2614
  %2634 = vst.msk [vmem:[#allocation4 + $0x40] sm:$0xff] %vm487, %v2615
  %2635 = vst.msk [vmem:[#allocation4 + $0x68] sm:$0xff] %vm487, %v2616
  %2636 = vst.msk [vmem:[#allocation4 + $0x90] sm:$0xff] %vm487, %v2617
  %2637 = vst.msk [vmem:[#allocation4 + $0xb8] sm:$0xff] %vm487, %v2618
  %2638 = vst.msk [vmem:[#allocation4 + $0xe0] sm:$0xff] %vm487, %v2619
  %2639 = vst.msk [vmem:[#allocation4 + $0x108] sm:$0xff] %vm487, %v2620
  %2640 = vst.msk [vmem:[#allocation4 + $0x130] sm:$0xff] %vm487, %v2621
  %2641 = vst.msk [vmem:[#allocation4 + $0x158] sm:$0xff] %vm487, %v2622
  %2642 = vst.msk [vmem:[#allocation4 + $0x180] sm:$0xff] %vm487, %v2623
  %2643 = vst.msk [vmem:[#allocation4 + $0x1a8] sm:$0xff] %vm487, %v2624
  %2644 = vst.msk [vmem:[#allocation4 + $0x1d0] sm:$0xff] %vm487, %v2625
  %2645 = vst.msk [vmem:[#allocation4 + $0x1f8] sm:$0xff] %vm487, %v2626
  %2646 = vst.msk [vmem:[#allocation4 + $0x220] sm:$0xff] %vm487, %v2627
  %2647 = vst.msk [vmem:[#allocation4 + $0x248] sm:$0xff] %vm487, %v2628
  %2648 = vst.msk [vmem:[#allocation4 + $0x270] sm:$0xff] %vm487, %v2629
  %2649 = vst.msk [vmem:[#allocation4 + $0x298] sm:$0xff] %vm487, %v2630
  %2650 = vst.msk [vmem:[#allocation4 + $0x2c0] sm:$0xff] %vm487, %v2631
  %2651 = vst.msk [vmem:[#allocation4 + $0x2e8] sm:$0xff] %vm487, %v2632
  %v2652 = vld [vmem:[#allocation3 + $0x15] sm:$0xff]
  %v2653 = vld [vmem:[#allocation3 + $0x1d] sm:$0xff]
  %v2654 = vld [vmem:[#allocation3 + $0x25] sm:$0xff]
  %v2655 = vld [vmem:[#allocation3 + $0x2d] sm:$0xff]
  %v2656 = vld [vmem:[#allocation3 + $0x35] sm:$0xff]
  %v2657 = vld [vmem:[#allocation3 + $0x3d] sm:$0xff]
  %v2658 = vld [vmem:[#allocation3 + $0x45] sm:$0xff]
  %v2659 = vld [vmem:[#allocation3 + $0x4d] sm:$0xff]
  %v2660 = vld [vmem:[#allocation3 + $0x55] sm:$0xff]
  %v2661 = vld [vmem:[#allocation3 + $0x5d] sm:$0xff]
  %v2662 = vld [vmem:[#allocation3 + $0x65] sm:$0xff]
  %v2663 = vld [vmem:[#allocation3 + $0x6d] sm:$0xff]
  %v2664 = vld [vmem:[#allocation3 + $0x75] sm:$0xff]
  %v2665 = vld [vmem:[#allocation3 + $0x7d] sm:$0xff]
  %v2666 = vld [vmem:[#allocation3 + $0x85] sm:$0xff]
  %v2667 = vld [vmem:[#allocation3 + $0x8d] sm:$0xff]
  %v2668 = vld [vmem:[#allocation3 + $0x95] sm:$0xff]
  %v2669 = vld [vmem:[#allocation3 + $0x9d] sm:$0xff]
  %v2670 = vld [vmem:[#allocation3 + $0xa5] sm:$0xff]
  %2690 = vrot.lane.b32.xlu0 %v2652, 64
  %v2691 = vpop.permute.xlu0 %2690
  %2692 = vrot.lane.b32.xlu0 %v2653, 64
  %v2693 = vpop.permute.xlu0 %2692
  %2694 = vrot.lane.b32.xlu0 %v2654, 64
  %v2695 = vpop.permute.xlu0 %2694
  %2696 = vrot.lane.b32.xlu0 %v2655, 64
  %v2697 = vpop.permute.xlu0 %2696
  %2698 = vrot.lane.b32.xlu0 %v2656, 64
  %v2699 = vpop.permute.xlu0 %2698
  %2700 = vrot.lane.b32.xlu0 %v2657, 64
  %v2701 = vpop.permute.xlu0 %2700
  %2702 = vrot.lane.b32.xlu0 %v2658, 64
  %v2703 = vpop.permute.xlu0 %2702
  %2704 = vrot.lane.b32.xlu0 %v2659, 64
  %v2705 = vpop.permute.xlu0 %2704
  %2706 = vrot.lane.b32.xlu0 %v2660, 64
  %v2707 = vpop.permute.xlu0 %2706
  %2708 = vrot.lane.b32.xlu0 %v2661, 64
  %v2709 = vpop.permute.xlu0 %2708
  %2710 = vrot.lane.b32.xlu0 %v2662, 64
  %v2711 = vpop.permute.xlu0 %2710
  %2712 = vrot.lane.b32.xlu0 %v2663, 64
  %v2713 = vpop.permute.xlu0 %2712
  %2714 = vrot.lane.b32.xlu0 %v2664, 64
  %v2715 = vpop.permute.xlu0 %2714
  %2716 = vrot.lane.b32.xlu0 %v2665, 64
  %v2717 = vpop.permute.xlu0 %2716
  %2718 = vrot.lane.b32.xlu0 %v2666, 64
  %v2719 = vpop.permute.xlu0 %2718
  %2720 = vrot.lane.b32.xlu0 %v2667, 64
  %v2721 = vpop.permute.xlu0 %2720
  %2722 = vrot.lane.b32.xlu0 %v2668, 64
  %v2723 = vpop.permute.xlu0 %2722
  %2724 = vrot.lane.b32.xlu0 %v2669, 64
  %v2725 = vpop.permute.xlu0 %2724
  %2726 = vrot.lane.b32.xlu0 %v2670, 64
  %v2727 = vpop.permute.xlu0 %2726
  %2747 = vst.msk [vmem:[#allocation4 + $0x18] sm:$0xff] %vm812, %v2691
  %2748 = vst.msk [vmem:[#allocation4 + $0x40] sm:$0xff] %vm812, %v2693
  %2749 = vst.msk [vmem:[#allocation4 + $0x68] sm:$0xff] %vm812, %v2695
  %2750 = vst.msk [vmem:[#allocation4 + $0x90] sm:$0xff] %vm812, %v2697
  %2751 = vst.msk [vmem:[#allocation4 + $0xb8] sm:$0xff] %vm812, %v2699
  %2752 = vst.msk [vmem:[#allocation4 + $0xe0] sm:$0xff] %vm812, %v2701
  %2753 = vst.msk [vmem:[#allocation4 + $0x108] sm:$0xff] %vm812, %v2703
  %2754 = vst.msk [vmem:[#allocation4 + $0x130] sm:$0xff] %vm812, %v2705
  %2755 = vst.msk [vmem:[#allocation4 + $0x158] sm:$0xff] %vm812, %v2707
  %2756 = vst.msk [vmem:[#allocation4 + $0x180] sm:$0xff] %vm812, %v2709
  %2757 = vst.msk [vmem:[#allocation4 + $0x1a8] sm:$0xff] %vm812, %v2711
  %2758 = vst.msk [vmem:[#allocation4 + $0x1d0] sm:$0xff] %vm812, %v2713
  %2759 = vst.msk [vmem:[#allocation4 + $0x1f8] sm:$0xff] %vm812, %v2715
  %2760 = vst.msk [vmem:[#allocation4 + $0x220] sm:$0xff] %vm812, %v2717
  %2761 = vst.msk [vmem:[#allocation4 + $0x248] sm:$0xff] %vm812, %v2719
  %2762 = vst.msk [vmem:[#allocation4 + $0x270] sm:$0xff] %vm812, %v2721
  %2763 = vst.msk [vmem:[#allocation4 + $0x298] sm:$0xff] %vm812, %v2723
  %2764 = vst.msk [vmem:[#allocation4 + $0x2c0] sm:$0xff] %vm812, %v2725
  %2765 = vst.msk [vmem:[#allocation4 + $0x2e8] sm:$0xff] %vm812, %v2727
  %v2766 = vld [vmem:[#allocation3 + $0x16] sm:$0xff]
  %v2767 = vld [vmem:[#allocation3 + $0x1e] sm:$0xff]
  %v2768 = vld [vmem:[#allocation3 + $0x26] sm:$0xff]
  %v2769 = vld [vmem:[#allocation3 + $0x2e] sm:$0xff]
  %v2770 = vld [vmem:[#allocation3 + $0x36] sm:$0xff]
  %v2771 = vld [vmem:[#allocation3 + $0x3e] sm:$0xff]
  %v2772 = vld [vmem:[#allocation3 + $0x46] sm:$0xff]
  %v2773 = vld [vmem:[#allocation3 + $0x4e] sm:$0xff]
  %v2774 = vld [vmem:[#allocation3 + $0x56] sm:$0xff]
  %v2775 = vld [vmem:[#allocation3 + $0x5e] sm:$0xff]
  %v2776 = vld [vmem:[#allocation3 + $0x66] sm:$0xff]
  %v2777 = vld [vmem:[#allocation3 + $0x6e] sm:$0xff]
  %v2778 = vld [vmem:[#allocation3 + $0x76] sm:$0xff]
  %v2779 = vld [vmem:[#allocation3 + $0x7e] sm:$0xff]
  %v2780 = vld [vmem:[#allocation3 + $0x86] sm:$0xff]
  %v2781 = vld [vmem:[#allocation3 + $0x8e] sm:$0xff]
  %v2782 = vld [vmem:[#allocation3 + $0x96] sm:$0xff]
  %v2783 = vld [vmem:[#allocation3 + $0x9e] sm:$0xff]
  %v2784 = vld [vmem:[#allocation3 + $0xa6] sm:$0xff]
  %2785 = vst.msk [vmem:[#allocation4 + $0x20] sm:$0xff] %vm487, %v2766
  %2786 = vst.msk [vmem:[#allocation4 + $0x48] sm:$0xff] %vm487, %v2767
  %2787 = vst.msk [vmem:[#allocation4 + $0x70] sm:$0xff] %vm487, %v2768
  %2788 = vst.msk [vmem:[#allocation4 + $0x98] sm:$0xff] %vm487, %v2769
  %2789 = vst.msk [vmem:[#allocation4 + $0xc0] sm:$0xff] %vm487, %v2770
  %2790 = vst.msk [vmem:[#allocation4 + $0xe8] sm:$0xff] %vm487, %v2771
  %2791 = vst.msk [vmem:[#allocation4 + $0x110] sm:$0xff] %vm487, %v2772
  %2792 = vst.msk [vmem:[#allocation4 + $0x138] sm:$0xff] %vm487, %v2773
  %2793 = vst.msk [vmem:[#allocation4 + $0x160] sm:$0xff] %vm487, %v2774
  %2794 = vst.msk [vmem:[#allocation4 + $0x188] sm:$0xff] %vm487, %v2775
  %2795 = vst.msk [vmem:[#allocation4 + $0x1b0] sm:$0xff] %vm487, %v2776
  %2796 = vst.msk [vmem:[#allocation4 + $0x1d8] sm:$0xff] %vm487, %v2777
  %2797 = vst.msk [vmem:[#allocation4 + $0x200] sm:$0xff] %vm487, %v2778
  %2798 = vst.msk [vmem:[#allocation4 + $0x228] sm:$0xff] %vm487, %v2779
  %2799 = vst.msk [vmem:[#allocation4 + $0x250] sm:$0xff] %vm487, %v2780
  %2800 = vst.msk [vmem:[#allocation4 + $0x278] sm:$0xff] %vm487, %v2781
  %2801 = vst.msk [vmem:[#allocation4 + $0x2a0] sm:$0xff] %vm487, %v2782
  %2802 = vst.msk [vmem:[#allocation4 + $0x2c8] sm:$0xff] %vm487, %v2783
  %2803 = vst.msk [vmem:[#allocation4 + $0x2f0] sm:$0xff] %vm487, %v2784
  %v2804 = vld [vmem:[#allocation4] sm:$0xff]
  %v2805 = vld [vmem:[#allocation4 + $0x8] sm:$0xff]
  %v2806 = vld [vmem:[#allocation4 + $0x10] sm:$0xff]
  %v2807 = vld [vmem:[#allocation4 + $0x18] sm:$0xff]
  %v2808 = vld [vmem:[#allocation4 + $0x20] sm:$0xff]
  %v2809 = vld [vmem:[#allocation4 + $0x28] sm:$0xff]
  %v2810 = vld [vmem:[#allocation4 + $0x30] sm:$0xff]
  %v2811 = vld [vmem:[#allocation4 + $0x38] sm:$0xff]
  %v2812 = vld [vmem:[#allocation4 + $0x40] sm:$0xff]
  %v2813 = vld [vmem:[#allocation4 + $0x48] sm:$0xff]
  %v2814 = vld [vmem:[#allocation4 + $0x50] sm:$0xff]
  %v2815 = vld [vmem:[#allocation4 + $0x58] sm:$0xff]
  %v2816 = vld [vmem:[#allocation4 + $0x60] sm:$0xff]
  %v2817 = vld [vmem:[#allocation4 + $0x68] sm:$0xff]
  %v2818 = vld [vmem:[#allocation4 + $0x70] sm:$0xff]
  %v2819 = vld [vmem:[#allocation4 + $0x78] sm:$0xff]
  %v2820 = vld [vmem:[#allocation4 + $0x80] sm:$0xff]
  %v2821 = vld [vmem:[#allocation4 + $0x88] sm:$0xff]
  %v2822 = vld [vmem:[#allocation4 + $0x90] sm:$0xff]
  %v2823 = vld [vmem:[#allocation4 + $0x98] sm:$0xff]
  %v2824 = vld [vmem:[#allocation4 + $0xa0] sm:$0xff]
  %v2825 = vld [vmem:[#allocation4 + $0xa8] sm:$0xff]
  %v2826 = vld [vmem:[#allocation4 + $0xb0] sm:$0xff]
  %v2827 = vld [vmem:[#allocation4 + $0xb8] sm:$0xff]
  %v2828 = vld [vmem:[#allocation4 + $0xc0] sm:$0xff]
  %v2829 = vld [vmem:[#allocation4 + $0xc8] sm:$0xff]
  %v2830 = vld [vmem:[#allocation4 + $0xd0] sm:$0xff]
  %v2831 = vld [vmem:[#allocation4 + $0xd8] sm:$0xff]
  %v2832 = vld [vmem:[#allocation4 + $0xe0] sm:$0xff]
  %v2833 = vld [vmem:[#allocation4 + $0xe8] sm:$0xff]
  %v2834 = vld [vmem:[#allocation4 + $0xf0] sm:$0xff]
  %v2835 = vld [vmem:[#allocation4 + $0xf8] sm:$0xff]
  %v2836 = vld [vmem:[#allocation4 + $0x100] sm:$0xff]
  %v2837 = vld [vmem:[#allocation4 + $0x108] sm:$0xff]
  %v2838 = vld [vmem:[#allocation4 + $0x110] sm:$0xff]
  %v2839 = vld [vmem:[#allocation4 + $0x118] sm:$0xff]
  %v2840 = vld [vmem:[#allocation4 + $0x120] sm:$0xff]
  %v2841 = vld [vmem:[#allocation4 + $0x128] sm:$0xff]
  %v2842 = vld [vmem:[#allocation4 + $0x130] sm:$0xff]
  %v2843 = vld [vmem:[#allocation4 + $0x138] sm:$0xff]
  %v2844 = vld [vmem:[#allocation4 + $0x140] sm:$0xff]
  %v2845 = vld [vmem:[#allocation4 + $0x148] sm:$0xff]
  %v2846 = vld [vmem:[#allocation4 + $0x150] sm:$0xff]
  %v2847 = vld [vmem:[#allocation4 + $0x158] sm:$0xff]
  %v2848 = vld [vmem:[#allocation4 + $0x160] sm:$0xff]
  %v2849 = vld [vmem:[#allocation4 + $0x168] sm:$0xff]
  %v2850 = vld [vmem:[#allocation4 + $0x170] sm:$0xff]
  %v2851 = vld [vmem:[#allocation4 + $0x178] sm:$0xff]
  %v2852 = vld [vmem:[#allocation4 + $0x180] sm:$0xff]
  %v2853 = vld [vmem:[#allocation4 + $0x188] sm:$0xff]
  %v2854 = vld [vmem:[#allocation4 + $0x190] sm:$0xff]
  %v2855 = vld [vmem:[#allocation4 + $0x198] sm:$0xff]
  %v2856 = vld [vmem:[#allocation4 + $0x1a0] sm:$0xff]
  %v2857 = vld [vmem:[#allocation4 + $0x1a8] sm:$0xff]
  %v2858 = vld [vmem:[#allocation4 + $0x1b0] sm:$0xff]
  %v2859 = vld [vmem:[#allocation4 + $0x1b8] sm:$0xff]
  %v2860 = vld [vmem:[#allocation4 + $0x1c0] sm:$0xff]
  %v2861 = vld [vmem:[#allocation4 + $0x1c8] sm:$0xff]
  %v2862 = vld [vmem:[#allocation4 + $0x1d0] sm:$0xff]
  %v2863 = vld [vmem:[#allocation4 + $0x1d8] sm:$0xff]
  %v2864 = vld [vmem:[#allocation4 + $0x1e0] sm:$0xff]
  %v2865 = vld [vmem:[#allocation4 + $0x1e8] sm:$0xff]
  %v2866 = vld [vmem:[#allocation4 + $0x1f0] sm:$0xff]
  %v2867 = vld [vmem:[#allocation4 + $0x1f8] sm:$0xff]
  %v2868 = vld [vmem:[#allocation4 + $0x200] sm:$0xff]
  %v2869 = vld [vmem:[#allocation4 + $0x208] sm:$0xff]
  %v2870 = vld [vmem:[#allocation4 + $0x210] sm:$0xff]
  %v2871 = vld [vmem:[#allocation4 + $0x218] sm:$0xff]
  %v2872 = vld [vmem:[#allocation4 + $0x220] sm:$0xff]
  %v2873 = vld [vmem:[#allocation4 + $0x228] sm:$0xff]
  %v2874 = vld [vmem:[#allocation4 + $0x230] sm:$0xff]
  %v2875 = vld [vmem:[#allocation4 + $0x238] sm:$0xff]
  %v2876 = vld [vmem:[#allocation4 + $0x240] sm:$0xff]
  %v2877 = vld [vmem:[#allocation4 + $0x248] sm:$0xff]
  %v2878 = vld [vmem:[#allocation4 + $0x250] sm:$0xff]
  %v2879 = vld [vmem:[#allocation4 + $0x258] sm:$0xff]
  %v2880 = vld [vmem:[#allocation4 + $0x260] sm:$0xff]
  %v2881 = vld [vmem:[#allocation4 + $0x268] sm:$0xff]
  %v2882 = vld [vmem:[#allocation4 + $0x270] sm:$0xff]
  %v2883 = vld [vmem:[#allocation4 + $0x278] sm:$0xff]
  %v2884 = vld [vmem:[#allocation4 + $0x280] sm:$0xff]
  %v2885 = vld [vmem:[#allocation4 + $0x288] sm:$0xff]
  %v2886 = vld [vmem:[#allocation4 + $0x290] sm:$0xff]
  %v2887 = vld [vmem:[#allocation4 + $0x298] sm:$0xff]
  %v2888 = vld [vmem:[#allocation4 + $0x2a0] sm:$0xff]
  %v2889 = vld [vmem:[#allocation4 + $0x2a8] sm:$0xff]
  %v2890 = vld [vmem:[#allocation4 + $0x2b0] sm:$0xff]
  %v2891 = vld [vmem:[#allocation4 + $0x2b8] sm:$0xff]
  %v2892 = vld [vmem:[#allocation4 + $0x2c0] sm:$0xff]
  %v2893 = vld [vmem:[#allocation4 + $0x2c8] sm:$0xff]
  %v2894 = vld [vmem:[#allocation4 + $0x2d0] sm:$0xff]
  %v2895 = vld [vmem:[#allocation4 + $0x2d8] sm:$0xff]
  %v2896 = vld [vmem:[#allocation4 + $0x2e0] sm:$0xff]
  %v2897 = vld [vmem:[#allocation4 + $0x2e8] sm:$0xff]
  %v2898 = vld [vmem:[#allocation4 + $0x2f0] sm:$0xff]
  %v2900 = vsel %vm487, %v2808, 0
  %v2903 = vsel %vm487, %v2813, 0
  %v2906 = vsel %vm487, %v2818, 0
  %v2909 = vsel %vm487, %v2823, 0
  %v2912 = vsel %vm487, %v2828, 0
  %v2915 = vsel %vm487, %v2833, 0
  %v2918 = vsel %vm487, %v2838, 0
  %v2921 = vsel %vm487, %v2843, 0
  %v2924 = vsel %vm487, %v2848, 0
  %v2927 = vsel %vm487, %v2853, 0
  %v2930 = vsel %vm487, %v2858, 0
  %v2933 = vsel %vm487, %v2863, 0
  %v2936 = vsel %vm487, %v2868, 0
  %v2939 = vsel %vm487, %v2873, 0
  %v2942 = vsel %vm487, %v2878, 0
  %v2945 = vsel %vm487, %v2883, 0
  %v2948 = vsel %vm487, %v2888, 0
  %v2951 = vsel %vm487, %v2893, 0
  %v2954 = vsel %vm487, %v2898, 0
  %2956 = vmatprep.subr.mxu0 0.0
  %2957 = vmatpush1.msra.mxu0 %v585
  %2958 = vmatprep.subr.mxu0 0.0
  %2959 = vmatpush1.msra.mxu0 %v586
  %2960 = vmatprep.subr.mxu0 0.0
  %2961 = vmatpush1.msra.mxu0 %v587
  %2962 = vmatprep.subr.mxu0 0.0
  %2963 = vmatpush1.msra.mxu0 %v588
  %2964 = vmatprep.subr.mxu0 0.0
  %2965 = vmatpush1.msra.mxu0 %v589
  %2966 = vmatprep.subr.mxu0 0.0
  %2967 = vmatpush1.msra.mxu0 %v590
  %2968 = vmatprep.subr.mxu0 0.0
  %2969 = vmatpush1.msra.mxu0 %v591
  %2970 = vmatprep.subr.mxu0 0.0
  %2971 = vmatpush1.msra.mxu0 %v592
  %2972 = vmatprep.subr.mxu0 0.0
  %2973 = vmatpush1.msra.mxu0 %v593
  %2974 = vmatprep.subr.mxu0 0.0
  %2975 = vmatpush1.msra.mxu0 %v594
  %2976 = vmatprep.subr.mxu0 0.0
  %2977 = vmatpush1.msra.mxu0 %v595
  %2978 = vmatprep.subr.mxu0 0.0
  %2979 = vmatpush1.msra.mxu0 %v596
  %2980 = vmatprep.subr.mxu0 0.0
  %2981 = vmatpush1.msra.mxu0 %v597
  %2982 = vmatprep.subr.mxu0 0.0
  %2983 = vmatpush1.msra.mxu0 %v598
  %2984 = vmatprep.subr.mxu0 0.0
  %2985 = vmatpush1.msra.mxu0 %v599
  %2986 = vmatprep.subr.mxu0 0.0
  %2987 = vmatpush1.msra.mxu0 %v600
  %2988 = vmatprep.subr.mxu0 0.0
  %2989 = vmatpush1.msra.mxu0 %v601
  %2990 = vmatprep.subr.mxu0 0.0
  %2991 = vmatpush1.msra.mxu0 %v602
  %2992 = vmatprep.subr.mxu0 0.0
  %2993 = vmatpush1.msra.mxu0 %v603
  %2994 = vmatprep.subr.mxu0 0.0
  %2995 = vmatpush1.msra.mxu0 %v604
  %2996 = vmatprep.subr.mxu0 0.0
  %2997 = vmatpush1.msra.mxu0 %v605
  %2998 = vmatprep.subr.mxu0 0.0
  %2999 = vmatpush1.msra.mxu0 %v606
  %3000 = vmatprep.subr.mxu0 0.0
  %3001 = vmatpush1.msra.mxu0 %v607
  %3002 = vmatprep.subr.mxu0 0.0
  %3003 = vmatpush1.msra.mxu0 %v608
  %3004 = vmatprep.subr.mxu0 0.0
  %3005 = vmatpush1.msra.mxu0 %v609
  %3006 = vmatprep.subr.mxu0 0.0
  %3007 = vmatpush1.msra.mxu0 %v610
  %3008 = vmatprep.subr.mxu0 0.0
  %3009 = vmatpush1.msra.mxu0 %v611
  %3010 = vmatprep.subr.mxu0 0.0
  %3011 = vmatpush1.msra.mxu0 %v612
  %3012 = vmatprep.subr.mxu0 0.0
  %3013 = vmatpush1.msra.mxu0 %v613
  %3014 = vmatprep.subr.mxu0 0.0
  %3015 = vmatpush1.msra.mxu0 %v614
  %3016 = vmatprep.subr.mxu0 0.0
  %3017 = vmatpush1.msra.mxu0 %v615
  %3018 = vmatprep.subr.mxu0 0.0
  %3019 = vmatpush1.msra.mxu0 %v616
  %3020 = vmatprep.mubr.f32.mxu0 %v2805
  %3021 = vmatmul.mubr.f32.gmra.mrb[0].mxu0 %v2804
  %v3022 = vpop.f32.mrb[0].mxu0
  %v3023 = vadd.f32 %v1521, %v3022
  %v3024 = vpop.f32.mrb[0].mxu0
  %3025 = vmatprep.mubr.f32.mxu0 %v2810
  %3026 = vmatmul.mubr.f32.gmra.mrb[0].mxu0 %v2809
  %v3027 = vpop.f32.mrb[0].mxu0
  %v3028 = vadd.f32 %v1521, %v3027
  %v3029 = vpop.f32.mrb[0].mxu0
  %3030 = vmatprep.mubr.f32.mxu0 %v2815
  %3031 = vmatmul.mubr.f32.gmra.mrb[0].mxu0 %v2814
  %v3032 = vpop.f32.mrb[0].mxu0
  %v3033 = vadd.f32 %v1521, %v3032
  %v3034 = vpop.f32.mrb[0].mxu0
  %3035 = vmatprep.mubr.f32.mxu0 %v2820
  %3036 = vmatmul.mubr.f32.gmra.mrb[0].mxu0 %v2819
  %v3037 = vpop.f32.mrb[0].mxu0
  %v3038 = vadd.f32 %v1521, %v3037
  %v3039 = vpop.f32.mrb[0].mxu0
  %3040 = vmatprep.mubr.f32.mxu0 %v2825
  %3041 = vmatmul.mubr.f32.gmra.mrb[0].mxu0 %v2824
  %v3042 = vpop.f32.mrb[0].mxu0
  %v3043 = vadd.f32 %v1521, %v3042
  %v3044 = vpop.f32.mrb[0].mxu0
  %3045 = vmatprep.mubr.f32.mxu0 %v2830
  %3046 = vmatmul.mubr.f32.gmra.mrb[0].mxu0 %v2829
  %v3047 = vpop.f32.mrb[0].mxu0
  %v3048 = vadd.f32 %v1521, %v3047
  %v3049 = vpop.f32.mrb[0].mxu0
  %3050 = vmatprep.mubr.f32.mxu0 %v2835
  %3051 = vmatmul.mubr.f32.gmra.mrb[0].mxu0 %v2834
  %v3052 = vpop.f32.mrb[0].mxu0
  %v3053 = vadd.f32 %v1521, %v3052
  %v3054 = vpop.f32.mrb[0].mxu0
  %3055 = vmatprep.mubr.f32.mxu0 %v2840
  %3056 = vmatmul.mubr.f32.gmra.mrb[0].mxu0 %v2839
  %v3057 = vpop.f32.mrb[0].mxu0
  %v3058 = vadd.f32 %v1521, %v3057
  %v3059 = vpop.f32.mrb[0].mxu0
  %3060 = vmatprep.mubr.f32.mxu0 %v2845
  %3061 = vmatmul.mubr.f32.gmra.mrb[0].mxu0 %v2844
  %v3062 = vpop.f32.mrb[0].mxu0
  %v3063 = vadd.f32 %v1521, %v3062
  %v3064 = vpop.f32.mrb[0].mxu0
  %3065 = vmatprep.mubr.f32.mxu0 %v2850
  %3066 = vmatmul.mubr.f32.gmra.mrb[0].mxu0 %v2849
  %v3067 = vpop.f32.mrb[0].mxu0
  %v3068 = vadd.f32 %v1521, %v3067
  %v3069 = vpop.f32.mrb[0].mxu0
  %3070 = vmatprep.mubr.f32.mxu0 %v2855
  %3071 = vmatmul.mubr.f32.gmra.mrb[0].mxu0 %v2854
  %v3072 = vpop.f32.mrb[0].mxu0
  %v3073 = vadd.f32 %v1521, %v3072
  %v3074 = vpop.f32.mrb[0].mxu0
  %3075 = vmatprep.mubr.f32.mxu0 %v2860
  %3076 = vmatmul.mubr.f32.gmra.mrb[0].mxu0 %v2859
  %v3077 = vpop.f32.mrb[0].mxu0
  %v3078 = vadd.f32 %v1521, %v3077
  %v3079 = vpop.f32.mrb[0].mxu0
  %3080 = vmatprep.mubr.f32.mxu0 %v2865
  %3081 = vmatmul.mubr.f32.gmra.mrb[0].mxu0 %v2864
  %v3082 = vpop.f32.mrb[0].mxu0
  %v3083 = vadd.f32 %v1521, %v3082
  %v3084 = vpop.f32.mrb[0].mxu0
  %3085 = vmatprep.mubr.f32.mxu0 %v2870
  %3086 = vmatmul.mubr.f32.gmra.mrb[0].mxu0 %v2869
  %v3087 = vpop.f32.mrb[0].mxu0
  %v3088 = vadd.f32 %v1521, %v3087
  %v3089 = vpop.f32.mrb[0].mxu0
  %3090 = vmatprep.mubr.f32.mxu0 %v2875
  %3091 = vmatmul.mubr.f32.gmra.mrb[0].mxu0 %v2874
  %v3092 = vpop.f32.mrb[0].mxu0
  %v3093 = vadd.f32 %v1521, %v3092
  %v3094 = vpop.f32.mrb[0].mxu0
  %3095 = vmatprep.mubr.f32.mxu0 %v2880
  %3096 = vmatmul.mubr.f32.gmra.mrb[0].mxu0 %v2879
  %v3097 = vpop.f32.mrb[0].mxu0
  %v3098 = vadd.f32 %v1521, %v3097
  %v3099 = vpop.f32.mrb[0].mxu0
  %3100 = vmatprep.mubr.f32.mxu0 %v2885
  %3101 = vmatmul.mubr.f32.gmra.mrb[0].mxu0 %v2884
  %v3102 = vpop.f32.mrb[0].mxu0
  %v3103 = vadd.f32 %v1521, %v3102
  %v3104 = vpop.f32.mrb[0].mxu0
  %3105 = vmatprep.mubr.f32.mxu0 %v2890
  %3106 = vmatmul.mubr.f32.gmra.mrb[0].mxu0 %v2889
  %v3107 = vpop.f32.mrb[0].mxu0
  %v3108 = vadd.f32 %v1521, %v3107
  %v3109 = vpop.f32.mrb[0].mxu0
  %3110 = vmatprep.mubr.f32.mxu0 %v2895
  %3111 = vmatmul.mubr.f32.gmra.mrb[0].mxu0 %v2894
  %v3112 = vpop.f32.mrb[0].mxu0
  %v3113 = vadd.f32 %v1521, %v3112
  %v3114 = vpop.f32.mrb[0].mxu0
  %3115 = vdwg.mxu0
  %3116 = vmatprep.subr.mxu0 0.0
  %3117 = vmatpush1.msra.mxu0 %v617
  %3118 = vmatprep.subr.mxu0 0.0
  %3119 = vmatpush1.msra.mxu0 %v618
  %3120 = vmatprep.subr.mxu0 0.0
  %3121 = vmatpush1.msra.mxu0 %v619
  %3122 = vmatprep.subr.mxu0 0.0
  %3123 = vmatpush1.msra.mxu0 %v620
  %3124 = vmatprep.subr.mxu0 0.0
  %3125 = vmatpush1.msra.mxu0 %v621
  %3126 = vmatprep.subr.mxu0 0.0
  %3127 = vmatpush1.msra.mxu0 %v622
  %3128 = vmatprep.subr.mxu0 0.0
  %3129 = vmatpush1.msra.mxu0 %v623
  %3130 = vmatprep.subr.mxu0 0.0
  %3131 = vmatpush1.msra.mxu0 %v624
  %3132 = vmatprep.subr.mxu0 0.0
  %3133 = vmatpush1.msra.mxu0 %v625
  %3134 = vmatprep.subr.mxu0 0.0
  %3135 = vmatpush1.msra.mxu0 %v626
  %3136 = vmatprep.subr.mxu0 0.0
  %3137 = vmatpush1.msra.mxu0 %v627
  %3138 = vmatprep.subr.mxu0 0.0
  %3139 = vmatpush1.msra.mxu0 %v628
  %3140 = vmatprep.subr.mxu0 0.0
  %3141 = vmatpush1.msra.mxu0 %v629
  %3142 = vmatprep.subr.mxu0 0.0
  %3143 = vmatpush1.msra.mxu0 %v630
  %3144 = vmatprep.subr.mxu0 0.0
  %3145 = vmatpush1.msra.mxu0 %v631
  %3146 = vmatprep.subr.mxu0 0.0
  %3147 = vmatpush1.msra.mxu0 %v632
  %3148 = vmatprep.subr.mxu0 0.0
  %3149 = vmatpush1.msra.mxu0 %v633
  %3150 = vmatprep.subr.mxu0 0.0
  %3151 = vmatpush1.msra.mxu0 %v634
  %3152 = vmatprep.subr.mxu0 0.0
  %3153 = vmatpush1.msra.mxu0 %v635
  %3154 = vmatprep.subr.mxu0 0.0
  %3155 = vmatpush1.msra.mxu0 %v636
  %3156 = vmatprep.subr.mxu0 0.0
  %3157 = vmatpush1.msra.mxu0 %v637
  %3158 = vmatprep.subr.mxu0 0.0
  %3159 = vmatpush1.msra.mxu0 %v638
  %3160 = vmatprep.subr.mxu0 0.0
  %3161 = vmatpush1.msra.mxu0 %v639
  %3162 = vmatprep.subr.mxu0 0.0
  %3163 = vmatpush1.msra.mxu0 %v640
  %3164 = vmatprep.subr.mxu0 0.0
  %3165 = vmatpush1.msra.mxu0 %v641
  %3166 = vmatprep.subr.mxu0 0.0
  %3167 = vmatpush1.msra.mxu0 %v642
  %3168 = vmatprep.subr.mxu0 0.0
  %3169 = vmatpush1.msra.mxu0 %v643
  %3170 = vmatprep.subr.mxu0 0.0
  %3171 = vmatpush1.msra.mxu0 %v644
  %3172 = vmatprep.subr.mxu0 0.0
  %3173 = vmatpush1.msra.mxu0 %v645
  %3174 = vmatprep.subr.mxu0 0.0
  %3175 = vmatpush1.msra.mxu0 %v646
  %3176 = vmatprep.subr.mxu0 0.0
  %3177 = vmatpush1.msra.mxu0 %v647
  %3178 = vmatprep.subr.mxu0 0.0
  %3179 = vmatpush1.msra.mxu0 %v648
  %3180 = vmatprep.mubr.f32.mxu0 %v2807
  %3181 = vmatmul.mubr.f32.gmra.mrb[0].mxu0 %v2806
  %v3182 = vpop.f32.mrb[0].mxu0
  %v3183 = vadd.f32 %v3023, %v3182
  %v3184 = vpop.f32.mrb[0].mxu0
  %3185 = vmatprep.mubr.f32.mxu0 %v2812
  %3186 = vmatmul.mubr.f32.gmra.mrb[0].mxu0 %v2811
  %v3187 = vpop.f32.mrb[0].mxu0
  %v3188 = vadd.f32 %v3028, %v3187
  %v3189 = vpop.f32.mrb[0].mxu0
  %3190 = vmatprep.mubr.f32.mxu0 %v2817
  %3191 = vmatmul.mubr.f32.gmra.mrb[0].mxu0 %v2816
  %v3192 = vpop.f32.mrb[0].mxu0
  %v3193 = vadd.f32 %v3033, %v3192
  %v3194 = vpop.f32.mrb[0].mxu0
  %3195 = vmatprep.mubr.f32.mxu0 %v2822
  %3196 = vmatmul.mubr.f32.gmra.mrb[0].mxu0 %v2821
  %v3197 = vpop.f32.mrb[0].mxu0
  %v3198 = vadd.f32 %v3038, %v3197
  %v3199 = vpop.f32.mrb[0].mxu0
  %3200 = vmatprep.mubr.f32.mxu0 %v2827
  %3201 = vmatmul.mubr.f32.gmra.mrb[0].mxu0 %v2826
  %v3202 = vpop.f32.mrb[0].mxu0
  %v3203 = vadd.f32 %v3043, %v3202
  %v3204 = vpop.f32.mrb[0].mxu0
  %3205 = vmatprep.mubr.f32.mxu0 %v2832
  %3206 = vmatmul.mubr.f32.gmra.mrb[0].mxu0 %v2831
  %v3207 = vpop.f32.mrb[0].mxu0
  %v3208 = vadd.f32 %v3048, %v3207
  %v3209 = vpop.f32.mrb[0].mxu0
  %3210 = vmatprep.mubr.f32.mxu0 %v2837
  %3211 = vmatmul.mubr.f32.gmra.mrb[0].mxu0 %v2836
  %v3212 = vpop.f32.mrb[0].mxu0
  %v3213 = vadd.f32 %v3053, %v3212
  %v3214 = vpop.f32.mrb[0].mxu0
  %3215 = vmatprep.mubr.f32.mxu0 %v2842
  %3216 = vmatmul.mubr.f32.gmra.mrb[0].mxu0 %v2841
  %v3217 = vpop.f32.mrb[0].mxu0
  %v3218 = vadd.f32 %v3058, %v3217
  %v3219 = vpop.f32.mrb[0].mxu0
  %3220 = vmatprep.mubr.f32.mxu0 %v2847
  %3221 = vmatmul.mubr.f32.gmra.mrb[0].mxu0 %v2846
  %v3222 = vpop.f32.mrb[0].mxu0
  %v3223 = vadd.f32 %v3063, %v3222
  %v3224 = vpop.f32.mrb[0].mxu0
  %3225 = vmatprep.mubr.f32.mxu0 %v2852
  %3226 = vmatmul.mubr.f32.gmra.mrb[0].mxu0 %v2851
  %v3227 = vpop.f32.mrb[0].mxu0
  %v3228 = vadd.f32 %v3068, %v3227
  %v3229 = vpop.f32.mrb[0].mxu0
  %3230 = vmatprep.mubr.f32.mxu0 %v2857
  %3231 = vmatmul.mubr.f32.gmra.mrb[0].mxu0 %v2856
  %v3232 = vpop.f32.mrb[0].mxu0
  %v3233 = vadd.f32 %v3073, %v3232
  %v3234 = vpop.f32.mrb[0].mxu0
  %3235 = vmatprep.mubr.f32.mxu0 %v2862
  %3236 = vmatmul.mubr.f32.gmra.mrb[0].mxu0 %v2861
  %v3237 = vpop.f32.mrb[0].mxu0
  %v3238 = vadd.f32 %v3078, %v3237
  %v3239 = vpop.f32.mrb[0].mxu0
  %3240 = vmatprep.mubr.f32.mxu0 %v2867
  %3241 = vmatmul.mubr.f32.gmra.mrb[0].mxu0 %v2866
  %v3242 = vpop.f32.mrb[0].mxu0
  %v3243 = vadd.f32 %v3083, %v3242
  %v3244 = vpop.f32.mrb[0].mxu0
  %3245 = vmatprep.mubr.f32.mxu0 %v2872
  %3246 = vmatmul.mubr.f32.gmra.mrb[0].mxu0 %v2871
  %v3247 = vpop.f32.mrb[0].mxu0
  %v3248 = vadd.f32 %v3088, %v3247
  %v3249 = vpop.f32.mrb[0].mxu0
  %3250 = vmatprep.mubr.f32.mxu0 %v2877
  %3251 = vmatmul.mubr.f32.gmra.mrb[0].mxu0 %v2876
  %v3252 = vpop.f32.mrb[0].mxu0
  %v3253 = vadd.f32 %v3093, %v3252
  %v3254 = vpop.f32.mrb[0].mxu0
  %3255 = vmatprep.mubr.f32.mxu0 %v2882
  %3256 = vmatmul.mubr.f32.gmra.mrb[0].mxu0 %v2881
  %v3257 = vpop.f32.mrb[0].mxu0
  %v3258 = vadd.f32 %v3098, %v3257
  %v3259 = vpop.f32.mrb[0].mxu0
  %3260 = vmatprep.mubr.f32.mxu0 %v2887
  %3261 = vmatmul.mubr.f32.gmra.mrb[0].mxu0 %v2886
  %v3262 = vpop.f32.mrb[0].mxu0
  %v3263 = vadd.f32 %v3103, %v3262
  %v3264 = vpop.f32.mrb[0].mxu0
  %3265 = vmatprep.mubr.f32.mxu0 %v2892
  %3266 = vmatmul.mubr.f32.gmra.mrb[0].mxu0 %v2891
  %v3267 = vpop.f32.mrb[0].mxu0
  %v3268 = vadd.f32 %v3108, %v3267
  %v3269 = vpop.f32.mrb[0].mxu0
  %3270 = vmatprep.mubr.f32.mxu0 %v2897
  %3271 = vmatmul.mubr.f32.gmra.mrb[0].mxu0 %v2896
  %v3272 = vpop.f32.mrb[0].mxu0
  %v3273 = vadd.f32 %v3113, %v3272
  %v3274 = vpop.f32.mrb[0].mxu0
  %3275 = vdwg.mxu0
  %3276 = vmatprep.subr.mxu0 0.0
  %3277 = vmatpush1.msra.mxu0 %v649
  %3278 = vmatprep.subr.mxu0 0.0
  %3279 = vmatpush1.msra.mxu0 %v650
  %3280 = vmatprep.subr.mxu0 0.0
  %3281 = vmatpush1.msra.mxu0 %v651
  %3282 = vmatprep.subr.mxu0 0.0
  %3283 = vmatpush1.msra.mxu0 %v652
  %3284 = vmatprep.subr.mxu0 0.0
  %3285 = vmatpush1.msra.mxu0 %v653
  %3286 = vmatprep.subr.mxu0 0.0
  %3287 = vmatpush1.msra.mxu0 %v654
  %3288 = vmatprep.subr.mxu0 0.0
  %3289 = vmatpush1.msra.mxu0 %v655
  %3290 = vmatprep.subr.mxu0 0.0
  %3291 = vmatpush1.msra.mxu0 %v656
  %3292 = vmatprep.subr.mxu0 0.0
  %3293 = vmatpush1.msra.mxu0 0.0
  %3294 = vmatprep.subr.mxu0 0.0
  %3295 = vmatpush1.msra.mxu0 0.0
  %3296 = vmatprep.subr.mxu0 0.0
  %3297 = vmatpush1.msra.mxu0 0.0
  %3298 = vmatprep.subr.mxu0 0.0
  %3299 = vmatpush1.msra.mxu0 0.0
  %3300 = vmatprep.subr.mxu0 0.0
  %3301 = vmatpush1.msra.mxu0 0.0
  %3302 = vmatprep.subr.mxu0 0.0
  %3303 = vmatpush1.msra.mxu0 0.0
  %3304 = vmatprep.subr.mxu0 0.0
  %3305 = vmatpush1.msra.mxu0 0.0
  %3306 = vmatprep.subr.mxu0 0.0
  %3307 = vmatpush1.msra.mxu0 0.0
  %3308 = vmatprep.subr.mxu0 0.0
  %3309 = vmatpush1.msra.mxu0 0.0
  %3310 = vmatprep.subr.mxu0 0.0
  %3311 = vmatpush1.msra.mxu0 0.0
  %3312 = vmatprep.subr.mxu0 0.0
  %3313 = vmatpush1.msra.mxu0 0.0
  %3314 = vmatprep.subr.mxu0 0.0
  %3315 = vmatpush1.msra.mxu0 0.0
  %3316 = vmatprep.subr.mxu0 0.0
  %3317 = vmatpush1.msra.mxu0 0.0
  %3318 = vmatprep.subr.mxu0 0.0
  %3319 = vmatpush1.msra.mxu0 0.0
  %3320 = vmatprep.subr.mxu0 0.0
  %3321 = vmatpush1.msra.mxu0 0.0
  %3322 = vmatprep.subr.mxu0 0.0
  %3323 = vmatpush1.msra.mxu0 0.0
  %3324 = vmatprep.subr.mxu0 0.0
  %3325 = vmatpush1.msra.mxu0 0.0
  %3326 = vmatprep.subr.mxu0 0.0
  %3327 = vmatpush1.msra.mxu0 0.0
  %3328 = vmatprep.subr.mxu0 0.0
  %3329 = vmatpush1.msra.mxu0 0.0
  %3330 = vmatprep.subr.mxu0 0.0
  %3331 = vmatpush1.msra.mxu0 0.0
  %3332 = vmatprep.subr.mxu0 0.0
  %3333 = vmatpush1.msra.mxu0 0.0
  %3334 = vmatprep.subr.mxu0 0.0
  %3335 = vmatpush1.msra.mxu0 0.0
  %3336 = vmatprep.subr.mxu0 0.0
  %3337 = vmatpush1.msra.mxu0 0.0
  %3338 = vmatprep.subr.mxu0 0.0
  %3339 = vmatpush1.msra.mxu0 0.0
  %3340 = vmatprep.mubr.f32.mxu0 0.0
  %3341 = vmatmul.mubr.f32.gmra.mrb[0].mxu0 %v2900
  %v3342 = vpop.f32.mrb[0].mxu0
  %v3343 = vadd.f32 %v3183, %v3342
  %v3344 = vpop.f32.mrb[0].mxu0
  %3345 = vmatprep.mubr.f32.mxu0 0.0
  %3346 = vmatmul.mubr.f32.gmra.mrb[0].mxu0 %v2903
  %v3347 = vpop.f32.mrb[0].mxu0
  %v3348 = vadd.f32 %v3188, %v3347
  %v3349 = vpop.f32.mrb[0].mxu0
  %3350 = vmatprep.mubr.f32.mxu0 0.0
  %3351 = vmatmul.mubr.f32.gmra.mrb[0].mxu0 %v2906
  %v3352 = vpop.f32.mrb[0].mxu0
  %v3353 = vadd.f32 %v3193, %v3352
  %v3354 = vpop.f32.mrb[0].mxu0
  %3355 = vmatprep.mubr.f32.mxu0 0.0
  %3356 = vmatmul.mubr.f32.gmra.mrb[0].mxu0 %v2909
  %v3357 = vpop.f32.mrb[0].mxu0
  %v3358 = vadd.f32 %v3198, %v3357
  %v3359 = vpop.f32.mrb[0].mxu0
  %3360 = vmatprep.mubr.f32.mxu0 0.0
  %3361 = vmatmul.mubr.f32.gmra.mrb[0].mxu0 %v2912
  %v3362 = vpop.f32.mrb[0].mxu0
  %v3363 = vadd.f32 %v3203, %v3362
  %v3364 = vpop.f32.mrb[0].mxu0
  %3365 = vmatprep.mubr.f32.mxu0 0.0
  %3366 = vmatmul.mubr.f32.gmra.mrb[0].mxu0 %v2915
  %v3367 = vpop.f32.mrb[0].mxu0
  %v3368 = vadd.f32 %v3208, %v3367
  %v3369 = vpop.f32.mrb[0].mxu0
  %3370 = vmatprep.mubr.f32.mxu0 0.0
  %3371 = vmatmul.mubr.f32.gmra.mrb[0].mxu0 %v2918
  %v3372 = vpop.f32.mrb[0].mxu0
  %v3373 = vadd.f32 %v3213, %v3372
  %v3374 = vpop.f32.mrb[0].mxu0
  %3375 = vmatprep.mubr.f32.mxu0 0.0
  %3376 = vmatmul.mubr.f32.gmra.mrb[0].mxu0 %v2921
  %v3377 = vpop.f32.mrb[0].mxu0
  %v3378 = vadd.f32 %v3218, %v3377
  %v3379 = vpop.f32.mrb[0].mxu0
  %3380 = vmatprep.mubr.f32.mxu0 0.0
  %3381 = vmatmul.mubr.f32.gmra.mrb[0].mxu0 %v2924
  %v3382 = vpop.f32.mrb[0].mxu0
  %v3383 = vadd.f32 %v3223, %v3382
  %v3384 = vpop.f32.mrb[0].mxu0
  %3385 = vmatprep.mubr.f32.mxu0 0.0
  %3386 = vmatmul.mubr.f32.gmra.mrb[0].mxu0 %v2927
  %v3387 = vpop.f32.mrb[0].mxu0
  %v3388 = vadd.f32 %v3228, %v3387
  %v3389 = vpop.f32.mrb[0].mxu0
  %3390 = vmatprep.mubr.f32.mxu0 0.0
  %3391 = vmatmul.mubr.f32.gmra.mrb[0].mxu0 %v2930
  %v3392 = vpop.f32.mrb[0].mxu0
  %v3393 = vadd.f32 %v3233, %v3392
  %v3394 = vpop.f32.mrb[0].mxu0
  %3395 = vmatprep.mubr.f32.mxu0 0.0
  %3396 = vmatmul.mubr.f32.gmra.mrb[0].mxu0 %v2933
  %v3397 = vpop.f32.mrb[0].mxu0
  %v3398 = vadd.f32 %v3238, %v3397
  %v3399 = vpop.f32.mrb[0].mxu0
  %3400 = vmatprep.mubr.f32.mxu0 0.0
  %3401 = vmatmul.mubr.f32.gmra.mrb[0].mxu0 %v2936
  %v3402 = vpop.f32.mrb[0].mxu0
  %v3403 = vadd.f32 %v3243, %v3402
  %v3404 = vpop.f32.mrb[0].mxu0
  %3405 = vmatprep.mubr.f32.mxu0 0.0
  %3406 = vmatmul.mubr.f32.gmra.mrb[0].mxu0 %v2939
  %v3407 = vpop.f32.mrb[0].mxu0
  %v3408 = vadd.f32 %v3248, %v3407
  %v3409 = vpop.f32.mrb[0].mxu0
  %3410 = vmatprep.mubr.f32.mxu0 0.0
  %3411 = vmatmul.mubr.f32.gmra.mrb[0].mxu0 %v2942
  %v3412 = vpop.f32.mrb[0].mxu0
  %v3413 = vadd.f32 %v3253, %v3412
  %v3414 = vpop.f32.mrb[0].mxu0
  %3415 = vmatprep.mubr.f32.mxu0 0.0
  %3416 = vmatmul.mubr.f32.gmra.mrb[0].mxu0 %v2945
  %v3417 = vpop.f32.mrb[0].mxu0
  %v3418 = vadd.f32 %v3258, %v3417
  %v3419 = vpop.f32.mrb[0].mxu0
  %3420 = vmatprep.mubr.f32.mxu0 0.0
  %3421 = vmatmul.mubr.f32.gmra.mrb[0].mxu0 %v2948
  %v3422 = vpop.f32.mrb[0].mxu0
  %v3423 = vadd.f32 %v3263, %v3422
  %v3424 = vpop.f32.mrb[0].mxu0
  %3425 = vmatprep.mubr.f32.mxu0 0.0
  %3426 = vmatmul.mubr.f32.gmra.mrb[0].mxu0 %v2951
  %v3427 = vpop.f32.mrb[0].mxu0
  %v3428 = vadd.f32 %v3268, %v3427
  %v3429 = vpop.f32.mrb[0].mxu0
  %3430 = vmatprep.mubr.f32.mxu0 0.0
  %3431 = vmatmul.mubr.f32.gmra.mrb[0].mxu0 %v2954
  %v3432 = vpop.f32.mrb[0].mxu0
  %v3433 = vadd.f32 %v3273, %v3432
  %v3434 = vpop.f32.mrb[0].mxu0
  %3435 = vdwg.mxu0
  %v3436 = vmax.f32 %v3343, 0.0
  %v3437 = vmax.f32 %v3348, 0.0
  %v3438 = vmax.f32 %v3353, 0.0
  %v3439 = vmax.f32 %v3358, 0.0
  %v3440 = vmax.f32 %v3363, 0.0
  %v3441 = vmax.f32 %v3368, 0.0
  %v3442 = vmax.f32 %v3373, 0.0
  %v3443 = vmax.f32 %v3378, 0.0
  %v3444 = vmax.f32 %v3383, 0.0
  %v3445 = vmax.f32 %v3388, 0.0
  %v3446 = vmax.f32 %v3393, 0.0
  %v3447 = vmax.f32 %v3398, 0.0
  %v3448 = vmax.f32 %v3403, 0.0
  %v3449 = vmax.f32 %v3408, 0.0
  %v3450 = vmax.f32 %v3413, 0.0
  %v3451 = vmax.f32 %v3418, 0.0
  %v3452 = vmax.f32 %v3423, 0.0
  %v3453 = vmax.f32 %v3428, 0.0
  %v3454 = vmax.f32 %v3433, 0.0
  %3455 = vst.msk [vmem:[#allocation2] sm:$0xff] %vm487, %v3436
  %3456 = vst.msk [vmem:[#allocation2 + $0x8] sm:$0xff] %vm487, %v3437
  %3457 = vst.msk [vmem:[#allocation2 + $0x10] sm:$0xff] %vm487, %v3438
  %3458 = vst.msk [vmem:[#allocation2 + $0x18] sm:$0xff] %vm487, %v3439
  %3459 = vst.msk [vmem:[#allocation2 + $0x20] sm:$0xff] %vm487, %v3440
  %3460 = vst.msk [vmem:[#allocation2 + $0x28] sm:$0xff] %vm487, %v3441
  %3461 = vst.msk [vmem:[#allocation2 + $0x30] sm:$0xff] %vm487, %v3442
  %3462 = vst.msk [vmem:[#allocation2 + $0x38] sm:$0xff] %vm487, %v3443
  %3463 = vst.msk [vmem:[#allocation2 + $0x40] sm:$0xff] %vm487, %v3444
  %3464 = vst.msk [vmem:[#allocation2 + $0x48] sm:$0xff] %vm487, %v3445
  %3465 = vst.msk [vmem:[#allocation2 + $0x50] sm:$0xff] %vm487, %v3446
  %3466 = vst.msk [vmem:[#allocation2 + $0x58] sm:$0xff] %vm487, %v3447
  %3467 = vst.msk [vmem:[#allocation2 + $0x60] sm:$0xff] %vm487, %v3448
  %3468 = vst.msk [vmem:[#allocation2 + $0x68] sm:$0xff] %vm487, %v3449
  %3469 = vst.msk [vmem:[#allocation2 + $0x70] sm:$0xff] %vm487, %v3450
  %3470 = vst.msk [vmem:[#allocation2 + $0x78] sm:$0xff] %vm487, %v3451
  %3471 = vst.msk [vmem:[#allocation2 + $0x80] sm:$0xff] %vm487, %v3452
  %3472 = vst.msk [vmem:[#allocation2 + $0x88] sm:$0xff] %vm487, %v3453
  %3473 = vst.msk [vmem:[#allocation2 + $0x90] sm:$0xff] %vm487, %v3454
  %v3474 = vld [vmem:[#allocation2] sm:$0xff]
  %v3475 = vld [vmem:[#allocation2 + $0x8] sm:$0xff]
  %v3476 = vld [vmem:[#allocation2 + $0x10] sm:$0xff]
  %v3477 = vld [vmem:[#allocation2 + $0x18] sm:$0xff]
  %v3478 = vld [vmem:[#allocation2 + $0x20] sm:$0xff]
  %v3479 = vld [vmem:[#allocation2 + $0x28] sm:$0xff]
  %v3480 = vld [vmem:[#allocation2 + $0x30] sm:$0xff]
  %v3481 = vld [vmem:[#allocation2 + $0x38] sm:$0xff]
  %v3482 = vld [vmem:[#allocation2 + $0x40] sm:$0xff]
  %v3483 = vld [vmem:[#allocation2 + $0x48] sm:$0xff]
  %v3484 = vld [vmem:[#allocation2 + $0x50] sm:$0xff]
  %v3485 = vld [vmem:[#allocation2 + $0x58] sm:$0xff]
  %v3486 = vld [vmem:[#allocation2 + $0x60] sm:$0xff]
  %v3487 = vld [vmem:[#allocation2 + $0x68] sm:$0xff]
  %v3488 = vld [vmem:[#allocation2 + $0x70] sm:$0xff]
  %v3489 = vld [vmem:[#allocation2 + $0x78] sm:$0xff]
  %3490 = vst.msk [vmem:[#allocation4] sm:$0xff] %vm487, %v3474
  %3491 = vst.msk [vmem:[#allocation4 + $0x28] sm:$0xff] %vm487, %v3475
  %3492 = vst.msk [vmem:[#allocation4 + $0x50] sm:$0xff] %vm487, %v3476
  %3493 = vst.msk [vmem:[#allocation4 + $0x78] sm:$0xff] %vm487, %v3477
  %3494 = vst.msk [vmem:[#allocation4 + $0xa0] sm:$0xff] %vm487, %v3478
  %3495 = vst.msk [vmem:[#allocation4 + $0xc8] sm:$0xff] %vm487, %v3479
  %3496 = vst.msk [vmem:[#allocation4 + $0xf0] sm:$0xff] %vm487, %v3480
  %3497 = vst.msk [vmem:[#allocation4 + $0x118] sm:$0xff] %vm487, %v3481
  %3498 = vst.msk [vmem:[#allocation4 + $0x140] sm:$0xff] %vm487, %v3482
  %3499 = vst.msk [vmem:[#allocation4 + $0x168] sm:$0xff] %vm487, %v3483
  %3500 = vst.msk [vmem:[#allocation4 + $0x190] sm:$0xff] %vm487, %v3484
  %3501 = vst.msk [vmem:[#allocation4 + $0x1b8] sm:$0xff] %vm487, %v3485
  %3502 = vst.msk [vmem:[#allocation4 + $0x1e0] sm:$0xff] %vm487, %v3486
  %3503 = vst.msk [vmem:[#allocation4 + $0x208] sm:$0xff] %vm487, %v3487
  %3504 = vst.msk [vmem:[#allocation4 + $0x230] sm:$0xff] %vm487, %v3488
  %3505 = vst.msk [vmem:[#allocation4 + $0x258] sm:$0xff] %vm487, %v3489
  %v3506 = vld [vmem:[#allocation2 + $0x1] sm:$0xff]
  %v3507 = vld [vmem:[#allocation2 + $0x9] sm:$0xff]
  %v3508 = vld [vmem:[#allocation2 + $0x11] sm:$0xff]
  %v3509 = vld [vmem:[#allocation2 + $0x19] sm:$0xff]
  %v3510 = vld [vmem:[#allocation2 + $0x21] sm:$0xff]
  %v3511 = vld [vmem:[#allocation2 + $0x29] sm:$0xff]
  %v3512 = vld [vmem:[#allocation2 + $0x31] sm:$0xff]
  %v3513 = vld [vmem:[#allocation2 + $0x39] sm:$0xff]
  %v3514 = vld [vmem:[#allocation2 + $0x41] sm:$0xff]
  %v3515 = vld [vmem:[#allocation2 + $0x49] sm:$0xff]
  %v3516 = vld [vmem:[#allocation2 + $0x51] sm:$0xff]
  %v3517 = vld [vmem:[#allocation2 + $0x59] sm:$0xff]
  %v3518 = vld [vmem:[#allocation2 + $0x61] sm:$0xff]
  %v3519 = vld [vmem:[#allocation2 + $0x69] sm:$0xff]
  %v3520 = vld [vmem:[#allocation2 + $0x71] sm:$0xff]
  %v3521 = vld [vmem:[#allocation2 + $0x79] sm:$0xff]
  %3538 = vrot.lane.b32.xlu0 %v3506, 64
  %v3539 = vpop.permute.xlu0 %3538
  %3540 = vrot.lane.b32.xlu0 %v3507, 64
  %v3541 = vpop.permute.xlu0 %3540
  %3542 = vrot.lane.b32.xlu0 %v3508, 64
  %v3543 = vpop.permute.xlu0 %3542
  %3544 = vrot.lane.b32.xlu0 %v3509, 64
  %v3545 = vpop.permute.xlu0 %3544
  %3546 = vrot.lane.b32.xlu0 %v3510, 64
  %v3547 = vpop.permute.xlu0 %3546
  %3548 = vrot.lane.b32.xlu0 %v3511, 64
  %v3549 = vpop.permute.xlu0 %3548
  %3550 = vrot.lane.b32.xlu0 %v3512, 64
  %v3551 = vpop.permute.xlu0 %3550
  %3552 = vrot.lane.b32.xlu0 %v3513, 64
  %v3553 = vpop.permute.xlu0 %3552
  %3554 = vrot.lane.b32.xlu0 %v3514, 64
  %v3555 = vpop.permute.xlu0 %3554
  %3556 = vrot.lane.b32.xlu0 %v3515, 64
  %v3557 = vpop.permute.xlu0 %3556
  %3558 = vrot.lane.b32.xlu0 %v3516, 64
  %v3559 = vpop.permute.xlu0 %3558
  %3560 = vrot.lane.b32.xlu0 %v3517, 64
  %v3561 = vpop.permute.xlu0 %3560
  %3562 = vrot.lane.b32.xlu0 %v3518, 64
  %v3563 = vpop.permute.xlu0 %3562
  %3564 = vrot.lane.b32.xlu0 %v3519, 64
  %v3565 = vpop.permute.xlu0 %3564
  %3566 = vrot.lane.b32.xlu0 %v3520, 64
  %v3567 = vpop.permute.xlu0 %3566
  %3568 = vrot.lane.b32.xlu0 %v3521, 64
  %v3569 = vpop.permute.xlu0 %3568
  %3586 = vst.msk [vmem:[#allocation4] sm:$0xff] %vm812, %v3539
  %3587 = vst.msk [vmem:[#allocation4 + $0x28] sm:$0xff] %vm812, %v3541
  %3588 = vst.msk [vmem:[#allocation4 + $0x50] sm:$0xff] %vm812, %v3543
  %3589 = vst.msk [vmem:[#allocation4 + $0x78] sm:$0xff] %vm812, %v3545
  %3590 = vst.msk [vmem:[#allocation4 + $0xa0] sm:$0xff] %vm812, %v3547
  %3591 = vst.msk [vmem:[#allocation4 + $0xc8] sm:$0xff] %vm812, %v3549
  %3592 = vst.msk [vmem:[#allocation4 + $0xf0] sm:$0xff] %vm812, %v3551
  %3593 = vst.msk [vmem:[#allocation4 + $0x118] sm:$0xff] %vm812, %v3553
  %3594 = vst.msk [vmem:[#allocation4 + $0x140] sm:$0xff] %vm812, %v3555
  %3595 = vst.msk [vmem:[#allocation4 + $0x168] sm:$0xff] %vm812, %v3557
  %3596 = vst.msk [vmem:[#allocation4 + $0x190] sm:$0xff] %vm812, %v3559
  %3597 = vst.msk [vmem:[#allocation4 + $0x1b8] sm:$0xff] %vm812, %v3561
  %3598 = vst.msk [vmem:[#allocation4 + $0x1e0] sm:$0xff] %vm812, %v3563
  %3599 = vst.msk [vmem:[#allocation4 + $0x208] sm:$0xff] %vm812, %v3565
  %3600 = vst.msk [vmem:[#allocation4 + $0x230] sm:$0xff] %vm812, %v3567
  %3601 = vst.msk [vmem:[#allocation4 + $0x258] sm:$0xff] %vm812, %v3569
  %v3602 = vld [vmem:[#allocation2 + $0x2] sm:$0xff]
  %v3603 = vld [vmem:[#allocation2 + $0xa] sm:$0xff]
  %v3604 = vld [vmem:[#allocation2 + $0x12] sm:$0xff]
  %v3605 = vld [vmem:[#allocation2 + $0x1a] sm:$0xff]
  %v3606 = vld [vmem:[#allocation2 + $0x22] sm:$0xff]
  %v3607 = vld [vmem:[#allocation2 + $0x2a] sm:$0xff]
  %v3608 = vld [vmem:[#allocation2 + $0x32] sm:$0xff]
  %v3609 = vld [vmem:[#allocation2 + $0x3a] sm:$0xff]
  %v3610 = vld [vmem:[#allocation2 + $0x42] sm:$0xff]
  %v3611 = vld [vmem:[#allocation2 + $0x4a] sm:$0xff]
  %v3612 = vld [vmem:[#allocation2 + $0x52] sm:$0xff]
  %v3613 = vld [vmem:[#allocation2 + $0x5a] sm:$0xff]
  %v3614 = vld [vmem:[#allocation2 + $0x62] sm:$0xff]
  %v3615 = vld [vmem:[#allocation2 + $0x6a] sm:$0xff]
  %v3616 = vld [vmem:[#allocation2 + $0x72] sm:$0xff]
  %v3617 = vld [vmem:[#allocation2 + $0x7a] sm:$0xff]
  %3618 = vst.msk [vmem:[#allocation4 + $0x8] sm:$0xff] %vm487, %v3602
  %3619 = vst.msk [vmem:[#allocation4 + $0x30] sm:$0xff] %vm487, %v3603
  %3620 = vst.msk [vmem:[#allocation4 + $0x58] sm:$0xff] %vm487, %v3604
  %3621 = vst.msk [vmem:[#allocation4 + $0x80] sm:$0xff] %vm487, %v3605
  %3622 = vst.msk [vmem:[#allocation4 + $0xa8] sm:$0xff] %vm487, %v3606
  %3623 = vst.msk [vmem:[#allocation4 + $0xd0] sm:$0xff] %vm487, %v3607
  %3624 = vst.msk [vmem:[#allocation4 + $0xf8] sm:$0xff] %vm487, %v3608
  %3625 = vst.msk [vmem:[#allocation4 + $0x120] sm:$0xff] %vm487, %v3609
  %3626 = vst.msk [vmem:[#allocation4 + $0x148] sm:$0xff] %vm487, %v3610
  %3627 = vst.msk [vmem:[#allocation4 + $0x170] sm:$0xff] %vm487, %v3611
  %3628 = vst.msk [vmem:[#allocation4 + $0x198] sm:$0xff] %vm487, %v3612
  %3629 = vst.msk [vmem:[#allocation4 + $0x1c0] sm:$0xff] %vm487, %v3613
  %3630 = vst.msk [vmem:[#allocation4 + $0x1e8] sm:$0xff] %vm487, %v3614
  %3631 = vst.msk [vmem:[#allocation4 + $0x210] sm:$0xff] %vm487, %v3615
  %3632 = vst.msk [vmem:[#allocation4 + $0x238] sm:$0xff] %vm487, %v3616
  %3633 = vst.msk [vmem:[#allocation4 + $0x260] sm:$0xff] %vm487, %v3617
  %v3634 = vld [vmem:[#allocation2 + $0xa] sm:$0xff]
  %v3635 = vld [vmem:[#allocation2 + $0x12] sm:$0xff]
  %v3636 = vld [vmem:[#allocation2 + $0x1a] sm:$0xff]
  %v3637 = vld [vmem:[#allocation2 + $0x22] sm:$0xff]
  %v3638 = vld [vmem:[#allocation2 + $0x2a] sm:$0xff]
  %v3639 = vld [vmem:[#allocation2 + $0x32] sm:$0xff]
  %v3640 = vld [vmem:[#allocation2 + $0x3a] sm:$0xff]
  %v3641 = vld [vmem:[#allocation2 + $0x42] sm:$0xff]
  %v3642 = vld [vmem:[#allocation2 + $0x4a] sm:$0xff]
  %v3643 = vld [vmem:[#allocation2 + $0x52] sm:$0xff]
  %v3644 = vld [vmem:[#allocation2 + $0x5a] sm:$0xff]
  %v3645 = vld [vmem:[#allocation2 + $0x62] sm:$0xff]
  %v3646 = vld [vmem:[#allocation2 + $0x6a] sm:$0xff]
  %v3647 = vld [vmem:[#allocation2 + $0x72] sm:$0xff]
  %v3648 = vld [vmem:[#allocation2 + $0x7a] sm:$0xff]
  %v3649 = vld [vmem:[#allocation2 + $0x82] sm:$0xff]
  %3666 = vrot.lane.b32.xlu0 %v3634, 64
  %v3667 = vpop.permute.xlu0 %3666
  %3668 = vrot.lane.b32.xlu0 %v3635, 64
  %v3669 = vpop.permute.xlu0 %3668
  %3670 = vrot.lane.b32.xlu0 %v3636, 64
  %v3671 = vpop.permute.xlu0 %3670
  %3672 = vrot.lane.b32.xlu0 %v3637, 64
  %v3673 = vpop.permute.xlu0 %3672
  %3674 = vrot.lane.b32.xlu0 %v3638, 64
  %v3675 = vpop.permute.xlu0 %3674
  %3676 = vrot.lane.b32.xlu0 %v3639, 64
  %v3677 = vpop.permute.xlu0 %3676
  %3678 = vrot.lane.b32.xlu0 %v3640, 64
  %v3679 = vpop.permute.xlu0 %3678
  %3680 = vrot.lane.b32.xlu0 %v3641, 64
  %v3681 = vpop.permute.xlu0 %3680
  %3682 = vrot.lane.b32.xlu0 %v3642, 64
  %v3683 = vpop.permute.xlu0 %3682
  %3684 = vrot.lane.b32.xlu0 %v3643, 64
  %v3685 = vpop.permute.xlu0 %3684
  %3686 = vrot.lane.b32.xlu0 %v3644, 64
  %v3687 = vpop.permute.xlu0 %3686
  %3688 = vrot.lane.b32.xlu0 %v3645, 64
  %v3689 = vpop.permute.xlu0 %3688
  %3690 = vrot.lane.b32.xlu0 %v3646, 64
  %v3691 = vpop.permute.xlu0 %3690
  %3692 = vrot.lane.b32.xlu0 %v3647, 64
  %v3693 = vpop.permute.xlu0 %3692
  %3694 = vrot.lane.b32.xlu0 %v3648, 64
  %v3695 = vpop.permute.xlu0 %3694
  %3696 = vrot.lane.b32.xlu0 %v3649, 64
  %v3697 = vpop.permute.xlu0 %3696
  %3714 = vst.msk [vmem:[#allocation4 + $0x8] sm:$0xff] %vm812, %v3667
  %3715 = vst.msk [vmem:[#allocation4 + $0x30] sm:$0xff] %vm812, %v3669
  %3716 = vst.msk [vmem:[#allocation4 + $0x58] sm:$0xff] %vm812, %v3671
  %3717 = vst.msk [vmem:[#allocation4 + $0x80] sm:$0xff] %vm812, %v3673
  %3718 = vst.msk [vmem:[#allocation4 + $0xa8] sm:$0xff] %vm812, %v3675
  %3719 = vst.msk [vmem:[#allocation4 + $0xd0] sm:$0xff] %vm812, %v3677
  %3720 = vst.msk [vmem:[#allocation4 + $0xf8] sm:$0xff] %vm812, %v3679
  %3721 = vst.msk [vmem:[#allocation4 + $0x120] sm:$0xff] %vm812, %v3681
  %3722 = vst.msk [vmem:[#allocation4 + $0x148] sm:$0xff] %vm812, %v3683
  %3723 = vst.msk [vmem:[#allocation4 + $0x170] sm:$0xff] %vm812, %v3685
  %3724 = vst.msk [vmem:[#allocation4 + $0x198] sm:$0xff] %vm812, %v3687
  %3725 = vst.msk [vmem:[#allocation4 + $0x1c0] sm:$0xff] %vm812, %v3689
  %3726 = vst.msk [vmem:[#allocation4 + $0x1e8] sm:$0xff] %vm812, %v3691
  %3727 = vst.msk [vmem:[#allocation4 + $0x210] sm:$0xff] %vm812, %v3693
  %3728 = vst.msk [vmem:[#allocation4 + $0x238] sm:$0xff] %vm812, %v3695
  %3729 = vst.msk [vmem:[#allocation4 + $0x260] sm:$0xff] %vm812, %v3697
  %v3730 = vld [vmem:[#allocation2 + $0xb] sm:$0xff]
  %v3731 = vld [vmem:[#allocation2 + $0x13] sm:$0xff]
  %v3732 = vld [vmem:[#allocation2 + $0x1b] sm:$0xff]
  %v3733 = vld [vmem:[#allocation2 + $0x23] sm:$0xff]
  %v3734 = vld [vmem:[#allocation2 + $0x2b] sm:$0xff]
  %v3735 = vld [vmem:[#allocation2 + $0x33] sm:$0xff]
  %v3736 = vld [vmem:[#allocation2 + $0x3b] sm:$0xff]
  %v3737 = vld [vmem:[#allocation2 + $0x43] sm:$0xff]
  %v3738 = vld [vmem:[#allocation2 + $0x4b] sm:$0xff]
  %v3739 = vld [vmem:[#allocation2 + $0x53] sm:$0xff]
  %v3740 = vld [vmem:[#allocation2 + $0x5b] sm:$0xff]
  %v3741 = vld [vmem:[#allocation2 + $0x63] sm:$0xff]
  %v3742 = vld [vmem:[#allocation2 + $0x6b] sm:$0xff]
  %v3743 = vld [vmem:[#allocation2 + $0x73] sm:$0xff]
  %v3744 = vld [vmem:[#allocation2 + $0x7b] sm:$0xff]
  %v3745 = vld [vmem:[#allocation2 + $0x83] sm:$0xff]
  %3746 = vst.msk [vmem:[#allocation4 + $0x10] sm:$0xff] %vm487, %v3730
  %3747 = vst.msk [vmem:[#allocation4 + $0x38] sm:$0xff] %vm487, %v3731
  %3748 = vst.msk [vmem:[#allocation4 + $0x60] sm:$0xff] %vm487, %v3732
  %3749 = vst.msk [vmem:[#allocation4 + $0x88] sm:$0xff] %vm487, %v3733
  %3750 = vst.msk [vmem:[#allocation4 + $0xb0] sm:$0xff] %vm487, %v3734
  %3751 = vst.msk [vmem:[#allocation4 + $0xd8] sm:$0xff] %vm487, %v3735
  %3752 = vst.msk [vmem:[#allocation4 + $0x100] sm:$0xff] %vm487, %v3736
  %3753 = vst.msk [vmem:[#allocation4 + $0x128] sm:$0xff] %vm487, %v3737
  %3754 = vst.msk [vmem:[#allocation4 + $0x150] sm:$0xff] %vm487, %v3738
  %3755 = vst.msk [vmem:[#allocation4 + $0x178] sm:$0xff] %vm487, %v3739
  %3756 = vst.msk [vmem:[#allocation4 + $0x1a0] sm:$0xff] %vm487, %v3740
  %3757 = vst.msk [vmem:[#allocation4 + $0x1c8] sm:$0xff] %vm487, %v3741
  %3758 = vst.msk [vmem:[#allocation4 + $0x1f0] sm:$0xff] %vm487, %v3742
  %3759 = vst.msk [vmem:[#allocation4 + $0x218] sm:$0xff] %vm487, %v3743
  %3760 = vst.msk [vmem:[#allocation4 + $0x240] sm:$0xff] %vm487, %v3744
  %3761 = vst.msk [vmem:[#allocation4 + $0x268] sm:$0xff] %vm487, %v3745
  %v3762 = vld [vmem:[#allocation2 + $0xc] sm:$0xff]
  %v3763 = vld [vmem:[#allocation2 + $0x14] sm:$0xff]
  %v3764 = vld [vmem:[#allocation2 + $0x1c] sm:$0xff]
  %v3765 = vld [vmem:[#allocation2 + $0x24] sm:$0xff]
  %v3766 = vld [vmem:[#allocation2 + $0x2c] sm:$0xff]
  %v3767 = vld [vmem:[#allocation2 + $0x34] sm:$0xff]
  %v3768 = vld [vmem:[#allocation2 + $0x3c] sm:$0xff]
  %v3769 = vld [vmem:[#allocation2 + $0x44] sm:$0xff]
  %v3770 = vld [vmem:[#allocation2 + $0x4c] sm:$0xff]
  %v3771 = vld [vmem:[#allocation2 + $0x54] sm:$0xff]
  %v3772 = vld [vmem:[#allocation2 + $0x5c] sm:$0xff]
  %v3773 = vld [vmem:[#allocation2 + $0x64] sm:$0xff]
  %v3774 = vld [vmem:[#allocation2 + $0x6c] sm:$0xff]
  %v3775 = vld [vmem:[#allocation2 + $0x74] sm:$0xff]
  %v3776 = vld [vmem:[#allocation2 + $0x7c] sm:$0xff]
  %v3777 = vld [vmem:[#allocation2 + $0x84] sm:$0xff]
  %3794 = vrot.lane.b32.xlu0 %v3762, 64
  %v3795 = vpop.permute.xlu0 %3794
  %3796 = vrot.lane.b32.xlu0 %v3763, 64
  %v3797 = vpop.permute.xlu0 %3796
  %3798 = vrot.lane.b32.xlu0 %v3764, 64
  %v3799 = vpop.permute.xlu0 %3798
  %3800 = vrot.lane.b32.xlu0 %v3765, 64
  %v3801 = vpop.permute.xlu0 %3800
  %3802 = vrot.lane.b32.xlu0 %v3766, 64
  %v3803 = vpop.permute.xlu0 %3802
  %3804 = vrot.lane.b32.xlu0 %v3767, 64
  %v3805 = vpop.permute.xlu0 %3804
  %3806 = vrot.lane.b32.xlu0 %v3768, 64
  %v3807 = vpop.permute.xlu0 %3806
  %3808 = vrot.lane.b32.xlu0 %v3769, 64
  %v3809 = vpop.permute.xlu0 %3808
  %3810 = vrot.lane.b32.xlu0 %v3770, 64
  %v3811 = vpop.permute.xlu0 %3810
  %3812 = vrot.lane.b32.xlu0 %v3771, 64
  %v3813 = vpop.permute.xlu0 %3812
  %3814 = vrot.lane.b32.xlu0 %v3772, 64
  %v3815 = vpop.permute.xlu0 %3814
  %3816 = vrot.lane.b32.xlu0 %v3773, 64
  %v3817 = vpop.permute.xlu0 %3816
  %3818 = vrot.lane.b32.xlu0 %v3774, 64
  %v3819 = vpop.permute.xlu0 %3818
  %3820 = vrot.lane.b32.xlu0 %v3775, 64
  %v3821 = vpop.permute.xlu0 %3820
  %3822 = vrot.lane.b32.xlu0 %v3776, 64
  %v3823 = vpop.permute.xlu0 %3822
  %3824 = vrot.lane.b32.xlu0 %v3777, 64
  %v3825 = vpop.permute.xlu0 %3824
  %3842 = vst.msk [vmem:[#allocation4 + $0x10] sm:$0xff] %vm812, %v3795
  %3843 = vst.msk [vmem:[#allocation4 + $0x38] sm:$0xff] %vm812, %v3797
  %3844 = vst.msk [vmem:[#allocation4 + $0x60] sm:$0xff] %vm812, %v3799
  %3845 = vst.msk [vmem:[#allocation4 + $0x88] sm:$0xff] %vm812, %v3801
  %3846 = vst.msk [vmem:[#allocation4 + $0xb0] sm:$0xff] %vm812, %v3803
  %3847 = vst.msk [vmem:[#allocation4 + $0xd8] sm:$0xff] %vm812, %v3805
  %3848 = vst.msk [vmem:[#allocation4 + $0x100] sm:$0xff] %vm812, %v3807
  %3849 = vst.msk [vmem:[#allocation4 + $0x128] sm:$0xff] %vm812, %v3809
  %3850 = vst.msk [vmem:[#allocation4 + $0x150] sm:$0xff] %vm812, %v3811
  %3851 = vst.msk [vmem:[#allocation4 + $0x178] sm:$0xff] %vm812, %v3813
  %3852 = vst.msk [vmem:[#allocation4 + $0x1a0] sm:$0xff] %vm812, %v3815
  %3853 = vst.msk [vmem:[#allocation4 + $0x1c8] sm:$0xff] %vm812, %v3817
  %3854 = vst.msk [vmem:[#allocation4 + $0x1f0] sm:$0xff] %vm812, %v3819
  %3855 = vst.msk [vmem:[#allocation4 + $0x218] sm:$0xff] %vm812, %v3821
  %3856 = vst.msk [vmem:[#allocation4 + $0x240] sm:$0xff] %vm812, %v3823
  %3857 = vst.msk [vmem:[#allocation4 + $0x268] sm:$0xff] %vm812, %v3825
  %v3858 = vld [vmem:[#allocation2 + $0x14] sm:$0xff]
  %v3859 = vld [vmem:[#allocation2 + $0x1c] sm:$0xff]
  %v3860 = vld [vmem:[#allocation2 + $0x24] sm:$0xff]
  %v3861 = vld [vmem:[#allocation2 + $0x2c] sm:$0xff]
  %v3862 = vld [vmem:[#allocation2 + $0x34] sm:$0xff]
  %v3863 = vld [vmem:[#allocation2 + $0x3c] sm:$0xff]
  %v3864 = vld [vmem:[#allocation2 + $0x44] sm:$0xff]
  %v3865 = vld [vmem:[#allocation2 + $0x4c] sm:$0xff]
  %v3866 = vld [vmem:[#allocation2 + $0x54] sm:$0xff]
  %v3867 = vld [vmem:[#allocation2 + $0x5c] sm:$0xff]
  %v3868 = vld [vmem:[#allocation2 + $0x64] sm:$0xff]
  %v3869 = vld [vmem:[#allocation2 + $0x6c] sm:$0xff]
  %v3870 = vld [vmem:[#allocation2 + $0x74] sm:$0xff]
  %v3871 = vld [vmem:[#allocation2 + $0x7c] sm:$0xff]
  %v3872 = vld [vmem:[#allocation2 + $0x84] sm:$0xff]
  %v3873 = vld [vmem:[#allocation2 + $0x8c] sm:$0xff]
  %3874 = vst.msk [vmem:[#allocation4 + $0x18] sm:$0xff] %vm487, %v3858
  %3875 = vst.msk [vmem:[#allocation4 + $0x40] sm:$0xff] %vm487, %v3859
  %3876 = vst.msk [vmem:[#allocation4 + $0x68] sm:$0xff] %vm487, %v3860
  %3877 = vst.msk [vmem:[#allocation4 + $0x90] sm:$0xff] %vm487, %v3861
  %3878 = vst.msk [vmem:[#allocation4 + $0xb8] sm:$0xff] %vm487, %v3862
  %3879 = vst.msk [vmem:[#allocation4 + $0xe0] sm:$0xff] %vm487, %v3863
  %3880 = vst.msk [vmem:[#allocation4 + $0x108] sm:$0xff] %vm487, %v3864
  %3881 = vst.msk [vmem:[#allocation4 + $0x130] sm:$0xff] %vm487, %v3865
  %3882 = vst.msk [vmem:[#allocation4 + $0x158] sm:$0xff] %vm487, %v3866
  %3883 = vst.msk [vmem:[#allocation4 + $0x180] sm:$0xff] %vm487, %v3867
  %3884 = vst.msk [vmem:[#allocation4 + $0x1a8] sm:$0xff] %vm487, %v3868
  %3885 = vst.msk [vmem:[#allocation4 + $0x1d0] sm:$0xff] %vm487, %v3869
  %3886 = vst.msk [vmem:[#allocation4 + $0x1f8] sm:$0xff] %vm487, %v3870
  %3887 = vst.msk [vmem:[#allocation4 + $0x220] sm:$0xff] %vm487, %v3871
  %3888 = vst.msk [vmem:[#allocation4 + $0x248] sm:$0xff] %vm487, %v3872
  %3889 = vst.msk [vmem:[#allocation4 + $0x270] sm:$0xff] %vm487, %v3873
  %v3890 = vld [vmem:[#allocation2 + $0x15] sm:$0xff]
  %v3891 = vld [vmem:[#allocation2 + $0x1d] sm:$0xff]
  %v3892 = vld [vmem:[#allocation2 + $0x25] sm:$0xff]
  %v3893 = vld [vmem:[#allocation2 + $0x2d] sm:$0xff]
  %v3894 = vld [vmem:[#allocation2 + $0x35] sm:$0xff]
  %v3895 = vld [vmem:[#allocation2 + $0x3d] sm:$0xff]
  %v3896 = vld [vmem:[#allocation2 + $0x45] sm:$0xff]
  %v3897 = vld [vmem:[#allocation2 + $0x4d] sm:$0xff]
  %v3898 = vld [vmem:[#allocation2 + $0x55] sm:$0xff]
  %v3899 = vld [vmem:[#allocation2 + $0x5d] sm:$0xff]
  %v3900 = vld [vmem:[#allocation2 + $0x65] sm:$0xff]
  %v3901 = vld [vmem:[#allocation2 + $0x6d] sm:$0xff]
  %v3902 = vld [vmem:[#allocation2 + $0x75] sm:$0xff]
  %v3903 = vld [vmem:[#allocation2 + $0x7d] sm:$0xff]
  %v3904 = vld [vmem:[#allocation2 + $0x85] sm:$0xff]
  %v3905 = vld [vmem:[#allocation2 + $0x8d] sm:$0xff]
  %3922 = vrot.lane.b32.xlu0 %v3890, 64
  %v3923 = vpop.permute.xlu0 %3922
  %3924 = vrot.lane.b32.xlu0 %v3891, 64
  %v3925 = vpop.permute.xlu0 %3924
  %3926 = vrot.lane.b32.xlu0 %v3892, 64
  %v3927 = vpop.permute.xlu0 %3926
  %3928 = vrot.lane.b32.xlu0 %v3893, 64
  %v3929 = vpop.permute.xlu0 %3928
  %3930 = vrot.lane.b32.xlu0 %v3894, 64
  %v3931 = vpop.permute.xlu0 %3930
  %3932 = vrot.lane.b32.xlu0 %v3895, 64
  %v3933 = vpop.permute.xlu0 %3932
  %3934 = vrot.lane.b32.xlu0 %v3896, 64
  %v3935 = vpop.permute.xlu0 %3934
  %3936 = vrot.lane.b32.xlu0 %v3897, 64
  %v3937 = vpop.permute.xlu0 %3936
  %3938 = vrot.lane.b32.xlu0 %v3898, 64
  %v3939 = vpop.permute.xlu0 %3938
  %3940 = vrot.lane.b32.xlu0 %v3899, 64
  %v3941 = vpop.permute.xlu0 %3940
  %3942 = vrot.lane.b32.xlu0 %v3900, 64
  %v3943 = vpop.permute.xlu0 %3942
  %3944 = vrot.lane.b32.xlu0 %v3901, 64
  %v3945 = vpop.permute.xlu0 %3944
  %3946 = vrot.lane.b32.xlu0 %v3902, 64
  %v3947 = vpop.permute.xlu0 %3946
  %3948 = vrot.lane.b32.xlu0 %v3903, 64
  %v3949 = vpop.permute.xlu0 %3948
  %3950 = vrot.lane.b32.xlu0 %v3904, 64
  %v3951 = vpop.permute.xlu0 %3950
  %3952 = vrot.lane.b32.xlu0 %v3905, 64
  %v3953 = vpop.permute.xlu0 %3952
  %3970 = vst.msk [vmem:[#allocation4 + $0x18] sm:$0xff] %vm812, %v3923
  %3971 = vst.msk [vmem:[#allocation4 + $0x40] sm:$0xff] %vm812, %v3925
  %3972 = vst.msk [vmem:[#allocation4 + $0x68] sm:$0xff] %vm812, %v3927
  %3973 = vst.msk [vmem:[#allocation4 + $0x90] sm:$0xff] %vm812, %v3929
  %3974 = vst.msk [vmem:[#allocation4 + $0xb8] sm:$0xff] %vm812, %v3931
  %3975 = vst.msk [vmem:[#allocation4 + $0xe0] sm:$0xff] %vm812, %v3933
  %3976 = vst.msk [vmem:[#allocation4 + $0x108] sm:$0xff] %vm812, %v3935
  %3977 = vst.msk [vmem:[#allocation4 + $0x130] sm:$0xff] %vm812, %v3937
  %3978 = vst.msk [vmem:[#allocation4 + $0x158] sm:$0xff] %vm812, %v3939
  %3979 = vst.msk [vmem:[#allocation4 + $0x180] sm:$0xff] %vm812, %v3941
  %3980 = vst.msk [vmem:[#allocation4 + $0x1a8] sm:$0xff] %vm812, %v3943
  %3981 = vst.msk [vmem:[#allocation4 + $0x1d0] sm:$0xff] %vm812, %v3945
  %3982 = vst.msk [vmem:[#allocation4 + $0x1f8] sm:$0xff] %vm812, %v3947
  %3983 = vst.msk [vmem:[#allocation4 + $0x220] sm:$0xff] %vm812, %v3949
  %3984 = vst.msk [vmem:[#allocation4 + $0x248] sm:$0xff] %vm812, %v3951
  %3985 = vst.msk [vmem:[#allocation4 + $0x270] sm:$0xff] %vm812, %v3953
  %v3986 = vld [vmem:[#allocation2 + $0x16] sm:$0xff]
  %v3987 = vld [vmem:[#allocation2 + $0x1e] sm:$0xff]
  %v3988 = vld [vmem:[#allocation2 + $0x26] sm:$0xff]
  %v3989 = vld [vmem:[#allocation2 + $0x2e] sm:$0xff]
  %v3990 = vld [vmem:[#allocation2 + $0x36] sm:$0xff]
  %v3991 = vld [vmem:[#allocation2 + $0x3e] sm:$0xff]
  %v3992 = vld [vmem:[#allocation2 + $0x46] sm:$0xff]
  %v3993 = vld [vmem:[#allocation2 + $0x4e] sm:$0xff]
  %v3994 = vld [vmem:[#allocation2 + $0x56] sm:$0xff]
  %v3995 = vld [vmem:[#allocation2 + $0x5e] sm:$0xff]
  %v3996 = vld [vmem:[#allocation2 + $0x66] sm:$0xff]
  %v3997 = vld [vmem:[#allocation2 + $0x6e] sm:$0xff]
  %v3998 = vld [vmem:[#allocation2 + $0x76] sm:$0xff]
  %v3999 = vld [vmem:[#allocation2 + $0x7e] sm:$0xff]
  %v4000 = vld [vmem:[#allocation2 + $0x86] sm:$0xff]
  %v4001 = vld [vmem:[#allocation2 + $0x8e] sm:$0xff]
  %4002 = vst.msk [vmem:[#allocation4 + $0x20] sm:$0xff] %vm487, %v3986
  %4003 = vst.msk [vmem:[#allocation4 + $0x48] sm:$0xff] %vm487, %v3987
  %4004 = vst.msk [vmem:[#allocation4 + $0x70] sm:$0xff] %vm487, %v3988
  %4005 = vst.msk [vmem:[#allocation4 + $0x98] sm:$0xff] %vm487, %v3989
  %4006 = vst.msk [vmem:[#allocation4 + $0xc0] sm:$0xff] %vm487, %v3990
  %4007 = vst.msk [vmem:[#allocation4 + $0xe8] sm:$0xff] %vm487, %v3991
  %4008 = vst.msk [vmem:[#allocation4 + $0x110] sm:$0xff] %vm487, %v3992
  %4009 = vst.msk [vmem:[#allocation4 + $0x138] sm:$0xff] %vm487, %v3993
  %4010 = vst.msk [vmem:[#allocation4 + $0x160] sm:$0xff] %vm487, %v3994
  %4011 = vst.msk [vmem:[#allocation4 + $0x188] sm:$0xff] %vm487, %v3995
  %4012 = vst.msk [vmem:[#allocation4 + $0x1b0] sm:$0xff] %vm487, %v3996
  %4013 = vst.msk [vmem:[#allocation4 + $0x1d8] sm:$0xff] %vm487, %v3997
  %4014 = vst.msk [vmem:[#allocation4 + $0x200] sm:$0xff] %vm487, %v3998
  %4015 = vst.msk [vmem:[#allocation4 + $0x228] sm:$0xff] %vm487, %v3999
  %4016 = vst.msk [vmem:[#allocation4 + $0x250] sm:$0xff] %vm487, %v4000
  %4017 = vst.msk [vmem:[#allocation4 + $0x278] sm:$0xff] %vm487, %v4001
  %v4018 = vld [vmem:[#allocation4] sm:$0xff]
  %v4019 = vld [vmem:[#allocation4 + $0x8] sm:$0xff]
  %v4020 = vld [vmem:[#allocation4 + $0x10] sm:$0xff]
  %v4021 = vld [vmem:[#allocation4 + $0x18] sm:$0xff]
  %v4022 = vld [vmem:[#allocation4 + $0x20] sm:$0xff]
  %v4023 = vld [vmem:[#allocation4 + $0x28] sm:$0xff]
  %v4024 = vld [vmem:[#allocation4 + $0x30] sm:$0xff]
  %v4025 = vld [vmem:[#allocation4 + $0x38] sm:$0xff]
  %v4026 = vld [vmem:[#allocation4 + $0x40] sm:$0xff]
  %v4027 = vld [vmem:[#allocation4 + $0x48] sm:$0xff]
  %v4028 = vld [vmem:[#allocation4 + $0x50] sm:$0xff]
  %v4029 = vld [vmem:[#allocation4 + $0x58] sm:$0xff]
  %v4030 = vld [vmem:[#allocation4 + $0x60] sm:$0xff]
  %v4031 = vld [vmem:[#allocation4 + $0x68] sm:$0xff]
  %v4032 = vld [vmem:[#allocation4 + $0x70] sm:$0xff]
  %v4033 = vld [vmem:[#allocation4 + $0x78] sm:$0xff]
  %v4034 = vld [vmem:[#allocation4 + $0x80] sm:$0xff]
  %v4035 = vld [vmem:[#allocation4 + $0x88] sm:$0xff]
  %v4036 = vld [vmem:[#allocation4 + $0x90] sm:$0xff]
  %v4037 = vld [vmem:[#allocation4 + $0x98] sm:$0xff]
  %v4038 = vld [vmem:[#allocation4 + $0xa0] sm:$0xff]
  %v4039 = vld [vmem:[#allocation4 + $0xa8] sm:$0xff]
  %v4040 = vld [vmem:[#allocation4 + $0xb0] sm:$0xff]
  %v4041 = vld [vmem:[#allocation4 + $0xb8] sm:$0xff]
  %v4042 = vld [vmem:[#allocation4 + $0xc0] sm:$0xff]
  %v4043 = vld [vmem:[#allocation4 + $0xc8] sm:$0xff]
  %v4044 = vld [vmem:[#allocation4 + $0xd0] sm:$0xff]
  %v4045 = vld [vmem:[#allocation4 + $0xd8] sm:$0xff]
  %v4046 = vld [vmem:[#allocation4 + $0xe0] sm:$0xff]
  %v4047 = vld [vmem:[#allocation4 + $0xe8] sm:$0xff]
  %v4048 = vld [vmem:[#allocation4 + $0xf0] sm:$0xff]
  %v4049 = vld [vmem:[#allocation4 + $0xf8] sm:$0xff]
  %v4050 = vld [vmem:[#allocation4 + $0x100] sm:$0xff]
  %v4051 = vld [vmem:[#allocation4 + $0x108] sm:$0xff]
  %v4052 = vld [vmem:[#allocation4 + $0x110] sm:$0xff]
  %v4053 = vld [vmem:[#allocation4 + $0x118] sm:$0xff]
  %v4054 = vld [vmem:[#allocation4 + $0x120] sm:$0xff]
  %v4055 = vld [vmem:[#allocation4 + $0x128] sm:$0xff]
  %v4056 = vld [vmem:[#allocation4 + $0x130] sm:$0xff]
  %v4057 = vld [vmem:[#allocation4 + $0x138] sm:$0xff]
  %v4058 = vld [vmem:[#allocation4 + $0x140] sm:$0xff]
  %v4059 = vld [vmem:[#allocation4 + $0x148] sm:$0xff]
  %v4060 = vld [vmem:[#allocation4 + $0x150] sm:$0xff]
  %v4061 = vld [vmem:[#allocation4 + $0x158] sm:$0xff]
  %v4062 = vld [vmem:[#allocation4 + $0x160] sm:$0xff]
  %v4063 = vld [vmem:[#allocation4 + $0x168] sm:$0xff]
  %v4064 = vld [vmem:[#allocation4 + $0x170] sm:$0xff]
  %v4065 = vld [vmem:[#allocation4 + $0x178] sm:$0xff]
  %v4066 = vld [vmem:[#allocation4 + $0x180] sm:$0xff]
  %v4067 = vld [vmem:[#allocation4 + $0x188] sm:$0xff]
  %v4068 = vld [vmem:[#allocation4 + $0x190] sm:$0xff]
  %v4069 = vld [vmem:[#allocation4 + $0x198] sm:$0xff]
  %v4070 = vld [vmem:[#allocation4 + $0x1a0] sm:$0xff]
  %v4071 = vld [vmem:[#allocation4 + $0x1a8] sm:$0xff]
  %v4072 = vld [vmem:[#allocation4 + $0x1b0] sm:$0xff]
  %v4073 = vld [vmem:[#allocation4 + $0x1b8] sm:$0xff]
  %v4074 = vld [vmem:[#allocation4 + $0x1c0] sm:$0xff]
  %v4075 = vld [vmem:[#allocation4 + $0x1c8] sm:$0xff]
  %v4076 = vld [vmem:[#allocation4 + $0x1d0] sm:$0xff]
  %v4077 = vld [vmem:[#allocation4 + $0x1d8] sm:$0xff]
  %v4078 = vld [vmem:[#allocation4 + $0x1e0] sm:$0xff]
  %v4079 = vld [vmem:[#allocation4 + $0x1e8] sm:$0xff]
  %v4080 = vld [vmem:[#allocation4 + $0x1f0] sm:$0xff]
  %v4081 = vld [vmem:[#allocation4 + $0x1f8] sm:$0xff]
  %v4082 = vld [vmem:[#allocation4 + $0x200] sm:$0xff]
  %v4083 = vld [vmem:[#allocation4 + $0x208] sm:$0xff]
  %v4084 = vld [vmem:[#allocation4 + $0x210] sm:$0xff]
  %v4085 = vld [vmem:[#allocation4 + $0x218] sm:$0xff]
  %v4086 = vld [vmem:[#allocation4 + $0x220] sm:$0xff]
  %v4087 = vld [vmem:[#allocation4 + $0x228] sm:$0xff]
  %v4088 = vld [vmem:[#allocation4 + $0x230] sm:$0xff]
  %v4089 = vld [vmem:[#allocation4 + $0x238] sm:$0xff]
  %v4090 = vld [vmem:[#allocation4 + $0x240] sm:$0xff]
  %v4091 = vld [vmem:[#allocation4 + $0x248] sm:$0xff]
  %v4092 = vld [vmem:[#allocation4 + $0x250] sm:$0xff]
  %v4093 = vld [vmem:[#allocation4 + $0x258] sm:$0xff]
  %v4094 = vld [vmem:[#allocation4 + $0x260] sm:$0xff]
  %v4095 = vld [vmem:[#allocation4 + $0x268] sm:$0xff]
  %v4096 = vld [vmem:[#allocation4 + $0x270] sm:$0xff]
  %v4097 = vld [vmem:[#allocation4 + $0x278] sm:$0xff]
  %v4099 = vsel %vm487, %v4022, 0
  %v4102 = vsel %vm487, %v4027, 0
  %v4105 = vsel %vm487, %v4032, 0
  %v4108 = vsel %vm487, %v4037, 0
  %v4111 = vsel %vm487, %v4042, 0
  %v4114 = vsel %vm487, %v4047, 0
  %v4117 = vsel %vm487, %v4052, 0
  %v4120 = vsel %vm487, %v4057, 0
  %v4123 = vsel %vm487, %v4062, 0
  %v4126 = vsel %vm487, %v4067, 0
  %v4129 = vsel %vm487, %v4072, 0
  %v4132 = vsel %vm487, %v4077, 0
  %v4135 = vsel %vm487, %v4082, 0
  %v4138 = vsel %vm487, %v4087, 0
  %v4141 = vsel %vm487, %v4092, 0
  %v4144 = vsel %vm487, %v4097, 0
  %4146 = vmatprep.subr.mxu0 0.0
  %4147 = vmatpush1.msra.mxu0 %v585
  %4148 = vmatprep.subr.mxu0 0.0
  %4149 = vmatpush1.msra.mxu0 %v586
  %4150 = vmatprep.subr.mxu0 0.0
  %4151 = vmatpush1.msra.mxu0 %v587
  %4152 = vmatprep.subr.mxu0 0.0
  %4153 = vmatpush1.msra.mxu0 %v588
  %4154 = vmatprep.subr.mxu0 0.0
  %4155 = vmatpush1.msra.mxu0 %v589
  %4156 = vmatprep.subr.mxu0 0.0
  %4157 = vmatpush1.msra.mxu0 %v590
  %4158 = vmatprep.subr.mxu0 0.0
  %4159 = vmatpush1.msra.mxu0 %v591
  %4160 = vmatprep.subr.mxu0 0.0
  %4161 = vmatpush1.msra.mxu0 %v592
  %4162 = vmatprep.subr.mxu0 0.0
  %4163 = vmatpush1.msra.mxu0 %v593
  %4164 = vmatprep.subr.mxu0 0.0
  %4165 = vmatpush1.msra.mxu0 %v594
  %4166 = vmatprep.subr.mxu0 0.0
  %4167 = vmatpush1.msra.mxu0 %v595
  %4168 = vmatprep.subr.mxu0 0.0
  %4169 = vmatpush1.msra.mxu0 %v596
  %4170 = vmatprep.subr.mxu0 0.0
  %4171 = vmatpush1.msra.mxu0 %v597
  %4172 = vmatprep.subr.mxu0 0.0
  %4173 = vmatpush1.msra.mxu0 %v598
  %4174 = vmatprep.subr.mxu0 0.0
  %4175 = vmatpush1.msra.mxu0 %v599
  %4176 = vmatprep.subr.mxu0 0.0
  %4177 = vmatpush1.msra.mxu0 %v600
  %4178 = vmatprep.subr.mxu0 0.0
  %4179 = vmatpush1.msra.mxu0 %v601
  %4180 = vmatprep.subr.mxu0 0.0
  %4181 = vmatpush1.msra.mxu0 %v602
  %4182 = vmatprep.subr.mxu0 0.0
  %4183 = vmatpush1.msra.mxu0 %v603
  %4184 = vmatprep.subr.mxu0 0.0
  %4185 = vmatpush1.msra.mxu0 %v604
  %4186 = vmatprep.subr.mxu0 0.0
  %4187 = vmatpush1.msra.mxu0 %v605
  %4188 = vmatprep.subr.mxu0 0.0
  %4189 = vmatpush1.msra.mxu0 %v606
  %4190 = vmatprep.subr.mxu0 0.0
  %4191 = vmatpush1.msra.mxu0 %v607
  %4192 = vmatprep.subr.mxu0 0.0
  %4193 = vmatpush1.msra.mxu0 %v608
  %4194 = vmatprep.subr.mxu0 0.0
  %4195 = vmatpush1.msra.mxu0 %v609
  %4196 = vmatprep.subr.mxu0 0.0
  %4197 = vmatpush1.msra.mxu0 %v610
  %4198 = vmatprep.subr.mxu0 0.0
  %4199 = vmatpush1.msra.mxu0 %v611
  %4200 = vmatprep.subr.mxu0 0.0
  %4201 = vmatpush1.msra.mxu0 %v612
  %4202 = vmatprep.subr.mxu0 0.0
  %4203 = vmatpush1.msra.mxu0 %v613
  %4204 = vmatprep.subr.mxu0 0.0
  %4205 = vmatpush1.msra.mxu0 %v614
  %4206 = vmatprep.subr.mxu0 0.0
  %4207 = vmatpush1.msra.mxu0 %v615
  %4208 = vmatprep.subr.mxu0 0.0
  %4209 = vmatpush1.msra.mxu0 %v616
  %4210 = vmatprep.mubr.f32.mxu0 %v4019
  %4211 = vmatmul.mubr.f32.gmra.mrb[0].mxu0 %v4018
  %v4212 = vpop.f32.mrb[0].mxu0
  %v4213 = vadd.f32 %v1521, %v4212
  %v4214 = vpop.f32.mrb[0].mxu0
  %4215 = vmatprep.mubr.f32.mxu0 %v4024
  %4216 = vmatmul.mubr.f32.gmra.mrb[0].mxu0 %v4023
  %v4217 = vpop.f32.mrb[0].mxu0
  %v4218 = vadd.f32 %v1521, %v4217
  %v4219 = vpop.f32.mrb[0].mxu0
  %4220 = vmatprep.mubr.f32.mxu0 %v4029
  %4221 = vmatmul.mubr.f32.gmra.mrb[0].mxu0 %v4028
  %v4222 = vpop.f32.mrb[0].mxu0
  %v4223 = vadd.f32 %v1521, %v4222
  %v4224 = vpop.f32.mrb[0].mxu0
  %4225 = vmatprep.mubr.f32.mxu0 %v4034
  %4226 = vmatmul.mubr.f32.gmra.mrb[0].mxu0 %v4033
  %v4227 = vpop.f32.mrb[0].mxu0
  %v4228 = vadd.f32 %v1521, %v4227
  %v4229 = vpop.f32.mrb[0].mxu0
  %4230 = vmatprep.mubr.f32.mxu0 %v4039
  %4231 = vmatmul.mubr.f32.gmra.mrb[0].mxu0 %v4038
  %v4232 = vpop.f32.mrb[0].mxu0
  %v4233 = vadd.f32 %v1521, %v4232
  %v4234 = vpop.f32.mrb[0].mxu0
  %4235 = vmatprep.mubr.f32.mxu0 %v4044
  %4236 = vmatmul.mubr.f32.gmra.mrb[0].mxu0 %v4043
  %v4237 = vpop.f32.mrb[0].mxu0
  %v4238 = vadd.f32 %v1521, %v4237
  %v4239 = vpop.f32.mrb[0].mxu0
  %4240 = vmatprep.mubr.f32.mxu0 %v4049
  %4241 = vmatmul.mubr.f32.gmra.mrb[0].mxu0 %v4048
  %v4242 = vpop.f32.mrb[0].mxu0
  %v4243 = vadd.f32 %v1521, %v4242
  %v4244 = vpop.f32.mrb[0].mxu0
  %4245 = vmatprep.mubr.f32.mxu0 %v4054
  %4246 = vmatmul.mubr.f32.gmra.mrb[0].mxu0 %v4053
  %v4247 = vpop.f32.mrb[0].mxu0
  %v4248 = vadd.f32 %v1521, %v4247
  %v4249 = vpop.f32.mrb[0].mxu0
  %4250 = vmatprep.mubr.f32.mxu0 %v4059
  %4251 = vmatmul.mubr.f32.gmra.mrb[0].mxu0 %v4058
  %v4252 = vpop.f32.mrb[0].mxu0
  %v4253 = vadd.f32 %v1521, %v4252
  %v4254 = vpop.f32.mrb[0].mxu0
  %4255 = vmatprep.mubr.f32.mxu0 %v4064
  %4256 = vmatmul.mubr.f32.gmra.mrb[0].mxu0 %v4063
  %v4257 = vpop.f32.mrb[0].mxu0
  %v4258 = vadd.f32 %v1521, %v4257
  %v4259 = vpop.f32.mrb[0].mxu0
  %4260 = vmatprep.mubr.f32.mxu0 %v4069
  %4261 = vmatmul.mubr.f32.gmra.mrb[0].mxu0 %v4068
  %v4262 = vpop.f32.mrb[0].mxu0
  %v4263 = vadd.f32 %v1521, %v4262
  %v4264 = vpop.f32.mrb[0].mxu0
  %4265 = vmatprep.mubr.f32.mxu0 %v4074
  %4266 = vmatmul.mubr.f32.gmra.mrb[0].mxu0 %v4073
  %v4267 = vpop.f32.mrb[0].mxu0
  %v4268 = vadd.f32 %v1521, %v4267
  %v4269 = vpop.f32.mrb[0].mxu0
  %4270 = vmatprep.mubr.f32.mxu0 %v4079
  %4271 = vmatmul.mubr.f32.gmra.mrb[0].mxu0 %v4078
  %v4272 = vpop.f32.mrb[0].mxu0
  %v4273 = vadd.f32 %v1521, %v4272
  %v4274 = vpop.f32.mrb[0].mxu0
  %4275 = vmatprep.mubr.f32.mxu0 %v4084
  %4276 = vmatmul.mubr.f32.gmra.mrb[0].mxu0 %v4083
  %v4277 = vpop.f32.mrb[0].mxu0
  %v4278 = vadd.f32 %v1521, %v4277
  %v4279 = vpop.f32.mrb[0].mxu0
  %4280 = vmatprep.mubr.f32.mxu0 %v4089
  %4281 = vmatmul.mubr.f32.gmra.mrb[0].mxu0 %v4088
  %v4282 = vpop.f32.mrb[0].mxu0
  %v4283 = vadd.f32 %v1521, %v4282
  %v4284 = vpop.f32.mrb[0].mxu0
  %4285 = vmatprep.mubr.f32.mxu0 %v4094
  %4286 = vmatmul.mubr.f32.gmra.mrb[0].mxu0 %v4093
  %v4287 = vpop.f32.mrb[0].mxu0
  %v4288 = vadd.f32 %v1521, %v4287
  %v4289 = vpop.f32.mrb[0].mxu0
  %4290 = vdwg.mxu0
  %4291 = vmatprep.subr.mxu0 0.0
  %4292 = vmatpush1.msra.mxu0 %v617
  %4293 = vmatprep.subr.mxu0 0.0
  %4294 = vmatpush1.msra.mxu0 %v618
  %4295 = vmatprep.subr.mxu0 0.0
  %4296 = vmatpush1.msra.mxu0 %v619
  %4297 = vmatprep.subr.mxu0 0.0
  %4298 = vmatpush1.msra.mxu0 %v620
  %4299 = vmatprep.subr.mxu0 0.0
  %4300 = vmatpush1.msra.mxu0 %v621
  %4301 = vmatprep.subr.mxu0 0.0
  %4302 = vmatpush1.msra.mxu0 %v622
  %4303 = vmatprep.subr.mxu0 0.0
  %4304 = vmatpush1.msra.mxu0 %v623
  %4305 = vmatprep.subr.mxu0 0.0
  %4306 = vmatpush1.msra.mxu0 %v624
  %4307 = vmatprep.subr.mxu0 0.0
  %4308 = vmatpush1.msra.mxu0 %v625
  %4309 = vmatprep.subr.mxu0 0.0
  %4310 = vmatpush1.msra.mxu0 %v626
  %4311 = vmatprep.subr.mxu0 0.0
  %4312 = vmatpush1.msra.mxu0 %v627
  %4313 = vmatprep.subr.mxu0 0.0
  %4314 = vmatpush1.msra.mxu0 %v628
  %4315 = vmatprep.subr.mxu0 0.0
  %4316 = vmatpush1.msra.mxu0 %v629
  %4317 = vmatprep.subr.mxu0 0.0
  %4318 = vmatpush1.msra.mxu0 %v630
  %4319 = vmatprep.subr.mxu0 0.0
  %4320 = vmatpush1.msra.mxu0 %v631
  %4321 = vmatprep.subr.mxu0 0.0
  %4322 = vmatpush1.msra.mxu0 %v632
  %4323 = vmatprep.subr.mxu0 0.0
  %4324 = vmatpush1.msra.mxu0 %v633
  %4325 = vmatprep.subr.mxu0 0.0
  %4326 = vmatpush1.msra.mxu0 %v634
  %4327 = vmatprep.subr.mxu0 0.0
  %4328 = vmatpush1.msra.mxu0 %v635
  %4329 = vmatprep.subr.mxu0 0.0
  %4330 = vmatpush1.msra.mxu0 %v636
  %4331 = vmatprep.subr.mxu0 0.0
  %4332 = vmatpush1.msra.mxu0 %v637
  %4333 = vmatprep.subr.mxu0 0.0
  %4334 = vmatpush1.msra.mxu0 %v638
  %4335 = vmatprep.subr.mxu0 0.0
  %4336 = vmatpush1.msra.mxu0 %v639
  %4337 = vmatprep.subr.mxu0 0.0
  %4338 = vmatpush1.msra.mxu0 %v640
  %4339 = vmatprep.subr.mxu0 0.0
  %4340 = vmatpush1.msra.mxu0 %v641
  %4341 = vmatprep.subr.mxu0 0.0
  %4342 = vmatpush1.msra.mxu0 %v642
  %4343 = vmatprep.subr.mxu0 0.0
  %4344 = vmatpush1.msra.mxu0 %v643
  %4345 = vmatprep.subr.mxu0 0.0
  %4346 = vmatpush1.msra.mxu0 %v644
  %4347 = vmatprep.subr.mxu0 0.0
  %4348 = vmatpush1.msra.mxu0 %v645
  %4349 = vmatprep.subr.mxu0 0.0
  %4350 = vmatpush1.msra.mxu0 %v646
  %4351 = vmatprep.subr.mxu0 0.0
  %4352 = vmatpush1.msra.mxu0 %v647
  %4353 = vmatprep.subr.mxu0 0.0
  %4354 = vmatpush1.msra.mxu0 %v648
  %4355 = vmatprep.mubr.f32.mxu0 %v4021
  %4356 = vmatmul.mubr.f32.gmra.mrb[0].mxu0 %v4020
  %v4357 = vpop.f32.mrb[0].mxu0
  %v4358 = vadd.f32 %v4213, %v4357
  %v4359 = vpop.f32.mrb[0].mxu0
  %4360 = vmatprep.mubr.f32.mxu0 %v4026
  %4361 = vmatmul.mubr.f32.gmra.mrb[0].mxu0 %v4025
  %v4362 = vpop.f32.mrb[0].mxu0
  %v4363 = vadd.f32 %v4218, %v4362
  %v4364 = vpop.f32.mrb[0].mxu0
  %4365 = vmatprep.mubr.f32.mxu0 %v4031
  %4366 = vmatmul.mubr.f32.gmra.mrb[0].mxu0 %v4030
  %v4367 = vpop.f32.mrb[0].mxu0
  %v4368 = vadd.f32 %v4223, %v4367
  %v4369 = vpop.f32.mrb[0].mxu0
  %4370 = vmatprep.mubr.f32.mxu0 %v4036
  %4371 = vmatmul.mubr.f32.gmra.mrb[0].mxu0 %v4035
  %v4372 = vpop.f32.mrb[0].mxu0
  %v4373 = vadd.f32 %v4228, %v4372
  %v4374 = vpop.f32.mrb[0].mxu0
  %4375 = vmatprep.mubr.f32.mxu0 %v4041
  %4376 = vmatmul.mubr.f32.gmra.mrb[0].mxu0 %v4040
  %v4377 = vpop.f32.mrb[0].mxu0
  %v4378 = vadd.f32 %v4233, %v4377
  %v4379 = vpop.f32.mrb[0].mxu0
  %4380 = vmatprep.mubr.f32.mxu0 %v4046
  %4381 = vmatmul.mubr.f32.gmra.mrb[0].mxu0 %v4045
  %v4382 = vpop.f32.mrb[0].mxu0
  %v4383 = vadd.f32 %v4238, %v4382
  %v4384 = vpop.f32.mrb[0].mxu0
  %4385 = vmatprep.mubr.f32.mxu0 %v4051
  %4386 = vmatmul.mubr.f32.gmra.mrb[0].mxu0 %v4050
  %v4387 = vpop.f32.mrb[0].mxu0
  %v4388 = vadd.f32 %v4243, %v4387
  %v4389 = vpop.f32.mrb[0].mxu0
  %4390 = vmatprep.mubr.f32.mxu0 %v4056
  %4391 = vmatmul.mubr.f32.gmra.mrb[0].mxu0 %v4055
  %v4392 = vpop.f32.mrb[0].mxu0
  %v4393 = vadd.f32 %v4248, %v4392
  %v4394 = vpop.f32.mrb[0].mxu0
  %4395 = vmatprep.mubr.f32.mxu0 %v4061
  %4396 = vmatmul.mubr.f32.gmra.mrb[0].mxu0 %v4060
  %v4397 = vpop.f32.mrb[0].mxu0
  %v4398 = vadd.f32 %v4253, %v4397
  %v4399 = vpop.f32.mrb[0].mxu0
  %4400 = vmatprep.mubr.f32.mxu0 %v4066
  %4401 = vmatmul.mubr.f32.gmra.mrb[0].mxu0 %v4065
  %v4402 = vpop.f32.mrb[0].mxu0
  %v4403 = vadd.f32 %v4258, %v4402
  %v4404 = vpop.f32.mrb[0].mxu0
  %4405 = vmatprep.mubr.f32.mxu0 %v4071
  %4406 = vmatmul.mubr.f32.gmra.mrb[0].mxu0 %v4070
  %v4407 = vpop.f32.mrb[0].mxu0
  %v4408 = vadd.f32 %v4263, %v4407
  %v4409 = vpop.f32.mrb[0].mxu0
  %4410 = vmatprep.mubr.f32.mxu0 %v4076
  %4411 = vmatmul.mubr.f32.gmra.mrb[0].mxu0 %v4075
  %v4412 = vpop.f32.mrb[0].mxu0
  %v4413 = vadd.f32 %v4268, %v4412
  %v4414 = vpop.f32.mrb[0].mxu0
  %4415 = vmatprep.mubr.f32.mxu0 %v4081
  %4416 = vmatmul.mubr.f32.gmra.mrb[0].mxu0 %v4080
  %v4417 = vpop.f32.mrb[0].mxu0
  %v4418 = vadd.f32 %v4273, %v4417
  %v4419 = vpop.f32.mrb[0].mxu0
  %4420 = vmatprep.mubr.f32.mxu0 %v4086
  %4421 = vmatmul.mubr.f32.gmra.mrb[0].mxu0 %v4085
  %v4422 = vpop.f32.mrb[0].mxu0
  %v4423 = vadd.f32 %v4278, %v4422
  %v4424 = vpop.f32.mrb[0].mxu0
  %4425 = vmatprep.mubr.f32.mxu0 %v4091
  %4426 = vmatmul.mubr.f32.gmra.mrb[0].mxu0 %v4090
  %v4427 = vpop.f32.mrb[0].mxu0
  %v4428 = vadd.f32 %v4283, %v4427
  %v4429 = vpop.f32.mrb[0].mxu0
  %4430 = vmatprep.mubr.f32.mxu0 %v4096
  %4431 = vmatmul.mubr.f32.gmra.mrb[0].mxu0 %v4095
  %v4432 = vpop.f32.mrb[0].mxu0
  %v4433 = vadd.f32 %v4288, %v4432
  %v4434 = vpop.f32.mrb[0].mxu0
  %4435 = vdwg.mxu0
  %4436 = vmatprep.subr.mxu0 0.0
  %4437 = vmatpush1.msra.mxu0 %v649
  %4438 = vmatprep.subr.mxu0 0.0
  %4439 = vmatpush1.msra.mxu0 %v650
  %4440 = vmatprep.subr.mxu0 0.0
  %4441 = vmatpush1.msra.mxu0 %v651
  %4442 = vmatprep.subr.mxu0 0.0
  %4443 = vmatpush1.msra.mxu0 %v652
  %4444 = vmatprep.subr.mxu0 0.0
  %4445 = vmatpush1.msra.mxu0 %v653
  %4446 = vmatprep.subr.mxu0 0.0
  %4447 = vmatpush1.msra.mxu0 %v654
  %4448 = vmatprep.subr.mxu0 0.0
  %4449 = vmatpush1.msra.mxu0 %v655
  %4450 = vmatprep.subr.mxu0 0.0
  %4451 = vmatpush1.msra.mxu0 %v656
  %4452 = vmatprep.subr.mxu0 0.0
  %4453 = vmatpush1.msra.mxu0 0.0
  %4454 = vmatprep.subr.mxu0 0.0
  %4455 = vmatpush1.msra.mxu0 0.0
  %4456 = vmatprep.subr.mxu0 0.0
  %4457 = vmatpush1.msra.mxu0 0.0
  %4458 = vmatprep.subr.mxu0 0.0
  %4459 = vmatpush1.msra.mxu0 0.0
  %4460 = vmatprep.subr.mxu0 0.0
  %4461 = vmatpush1.msra.mxu0 0.0
  %4462 = vmatprep.subr.mxu0 0.0
  %4463 = vmatpush1.msra.mxu0 0.0
  %4464 = vmatprep.subr.mxu0 0.0
  %4465 = vmatpush1.msra.mxu0 0.0
  %4466 = vmatprep.subr.mxu0 0.0
  %4467 = vmatpush1.msra.mxu0 0.0
  %4468 = vmatprep.subr.mxu0 0.0
  %4469 = vmatpush1.msra.mxu0 0.0
  %4470 = vmatprep.subr.mxu0 0.0
  %4471 = vmatpush1.msra.mxu0 0.0
  %4472 = vmatprep.subr.mxu0 0.0
  %4473 = vmatpush1.msra.mxu0 0.0
  %4474 = vmatprep.subr.mxu0 0.0
  %4475 = vmatpush1.msra.mxu0 0.0
  %4476 = vmatprep.subr.mxu0 0.0
  %4477 = vmatpush1.msra.mxu0 0.0
  %4478 = vmatprep.subr.mxu0 0.0
  %4479 = vmatpush1.msra.mxu0 0.0
  %4480 = vmatprep.subr.mxu0 0.0
  %4481 = vmatpush1.msra.mxu0 0.0
  %4482 = vmatprep.subr.mxu0 0.0
  %4483 = vmatpush1.msra.mxu0 0.0
  %4484 = vmatprep.subr.mxu0 0.0
  %4485 = vmatpush1.msra.mxu0 0.0
  %4486 = vmatprep.subr.mxu0 0.0
  %4487 = vmatpush1.msra.mxu0 0.0
  %4488 = vmatprep.subr.mxu0 0.0
  %4489 = vmatpush1.msra.mxu0 0.0
  %4490 = vmatprep.subr.mxu0 0.0
  %4491 = vmatpush1.msra.mxu0 0.0
  %4492 = vmatprep.subr.mxu0 0.0
  %4493 = vmatpush1.msra.mxu0 0.0
  %4494 = vmatprep.subr.mxu0 0.0
  %4495 = vmatpush1.msra.mxu0 0.0
  %4496 = vmatprep.subr.mxu0 0.0
  %4497 = vmatpush1.msra.mxu0 0.0
  %4498 = vmatprep.subr.mxu0 0.0
  %4499 = vmatpush1.msra.mxu0 0.0
  %4500 = vmatprep.mubr.f32.mxu0 0.0
  %4501 = vmatmul.mubr.f32.gmra.mrb[0].mxu0 %v4099
  %v4502 = vpop.f32.mrb[0].mxu0
  %v4503 = vadd.f32 %v4358, %v4502
  %v4504 = vpop.f32.mrb[0].mxu0
  %4505 = vmatprep.mubr.f32.mxu0 0.0
  %4506 = vmatmul.mubr.f32.gmra.mrb[0].mxu0 %v4102
  %v4507 = vpop.f32.mrb[0].mxu0
  %v4508 = vadd.f32 %v4363, %v4507
  %v4509 = vpop.f32.mrb[0].mxu0
  %4510 = vmatprep.mubr.f32.mxu0 0.0
  %4511 = vmatmul.mubr.f32.gmra.mrb[0].mxu0 %v4105
  %v4512 = vpop.f32.mrb[0].mxu0
  %v4513 = vadd.f32 %v4368, %v4512
  %v4514 = vpop.f32.mrb[0].mxu0
  %4515 = vmatprep.mubr.f32.mxu0 0.0
  %4516 = vmatmul.mubr.f32.gmra.mrb[0].mxu0 %v4108
  %v4517 = vpop.f32.mrb[0].mxu0
  %v4518 = vadd.f32 %v4373, %v4517
  %v4519 = vpop.f32.mrb[0].mxu0
  %4520 = vmatprep.mubr.f32.mxu0 0.0
  %4521 = vmatmul.mubr.f32.gmra.mrb[0].mxu0 %v4111
  %v4522 = vpop.f32.mrb[0].mxu0
  %v4523 = vadd.f32 %v4378, %v4522
  %v4524 = vpop.f32.mrb[0].mxu0
  %4525 = vmatprep.mubr.f32.mxu0 0.0
  %4526 = vmatmul.mubr.f32.gmra.mrb[0].mxu0 %v4114
  %v4527 = vpop.f32.mrb[0].mxu0
  %v4528 = vadd.f32 %v4383, %v4527
  %v4529 = vpop.f32.mrb[0].mxu0
  %4530 = vmatprep.mubr.f32.mxu0 0.0
  %4531 = vmatmul.mubr.f32.gmra.mrb[0].mxu0 %v4117
  %v4532 = vpop.f32.mrb[0].mxu0
  %v4533 = vadd.f32 %v4388, %v4532
  %v4534 = vpop.f32.mrb[0].mxu0
  %4535 = vmatprep.mubr.f32.mxu0 0.0
  %4536 = vmatmul.mubr.f32.gmra.mrb[0].mxu0 %v4120
  %v4537 = vpop.f32.mrb[0].mxu0
  %v4538 = vadd.f32 %v4393, %v4537
  %v4539 = vpop.f32.mrb[0].mxu0
  %4540 = vmatprep.mubr.f32.mxu0 0.0
  %4541 = vmatmul.mubr.f32.gmra.mrb[0].mxu0 %v4123
  %v4542 = vpop.f32.mrb[0].mxu0
  %v4543 = vadd.f32 %v4398, %v4542
  %v4544 = vpop.f32.mrb[0].mxu0
  %4545 = vmatprep.mubr.f32.mxu0 0.0
  %4546 = vmatmul.mubr.f32.gmra.mrb[0].mxu0 %v4126
  %v4547 = vpop.f32.mrb[0].mxu0
  %v4548 = vadd.f32 %v4403, %v4547
  %v4549 = vpop.f32.mrb[0].mxu0
  %4550 = vmatprep.mubr.f32.mxu0 0.0
  %4551 = vmatmul.mubr.f32.gmra.mrb[0].mxu0 %v4129
  %v4552 = vpop.f32.mrb[0].mxu0
  %v4553 = vadd.f32 %v4408, %v4552
  %v4554 = vpop.f32.mrb[0].mxu0
  %4555 = vmatprep.mubr.f32.mxu0 0.0
  %4556 = vmatmul.mubr.f32.gmra.mrb[0].mxu0 %v4132
  %v4557 = vpop.f32.mrb[0].mxu0
  %v4558 = vadd.f32 %v4413, %v4557
  %v4559 = vpop.f32.mrb[0].mxu0
  %4560 = vmatprep.mubr.f32.mxu0 0.0
  %4561 = vmatmul.mubr.f32.gmra.mrb[0].mxu0 %v4135
  %v4562 = vpop.f32.mrb[0].mxu0
  %v4563 = vadd.f32 %v4418, %v4562
  %v4564 = vpop.f32.mrb[0].mxu0
  %4565 = vmatprep.mubr.f32.mxu0 0.0
  %4566 = vmatmul.mubr.f32.gmra.mrb[0].mxu0 %v4138
  %v4567 = vpop.f32.mrb[0].mxu0
  %v4568 = vadd.f32 %v4423, %v4567
  %v4569 = vpop.f32.mrb[0].mxu0
  %4570 = vmatprep.mubr.f32.mxu0 0.0
  %4571 = vmatmul.mubr.f32.gmra.mrb[0].mxu0 %v4141
  %v4572 = vpop.f32.mrb[0].mxu0
  %v4573 = vadd.f32 %v4428, %v4572
  %v4574 = vpop.f32.mrb[0].mxu0
  %4575 = vmatprep.mubr.f32.mxu0 0.0
  %4576 = vmatmul.mubr.f32.gmra.mrb[0].mxu0 %v4144
  %v4577 = vpop.f32.mrb[0].mxu0
  %v4578 = vadd.f32 %v4433, %v4577
  %v4579 = vpop.f32.mrb[0].mxu0
  %4580 = vdwg.mxu0
  %v4581 = vmax.f32 %v4503, 0.0
  %v4582 = vmax.f32 %v4508, 0.0
  %v4583 = vmax.f32 %v4513, 0.0
  %v4584 = vmax.f32 %v4518, 0.0
  %v4585 = vmax.f32 %v4523, 0.0
  %v4586 = vmax.f32 %v4528, 0.0
  %v4587 = vmax.f32 %v4533, 0.0
  %v4588 = vmax.f32 %v4538, 0.0
  %v4589 = vmax.f32 %v4543, 0.0
  %v4590 = vmax.f32 %v4548, 0.0
  %v4591 = vmax.f32 %v4553, 0.0
  %v4592 = vmax.f32 %v4558, 0.0
  %v4593 = vmax.f32 %v4563, 0.0
  %v4594 = vmax.f32 %v4568, 0.0
  %v4595 = vmax.f32 %v4573, 0.0
  %v4596 = vmax.f32 %v4578, 0.0
  %4597 = vst.msk [vmem:[#allocation3] sm:$0xff] %vm487, %v4581
  %4598 = vst.msk [vmem:[#allocation3 + $0x8] sm:$0xff] %vm487, %v4582
  %4599 = vst.msk [vmem:[#allocation3 + $0x10] sm:$0xff] %vm487, %v4583
  %4600 = vst.msk [vmem:[#allocation3 + $0x18] sm:$0xff] %vm487, %v4584
  %4601 = vst.msk [vmem:[#allocation3 + $0x20] sm:$0xff] %vm487, %v4585
  %4602 = vst.msk [vmem:[#allocation3 + $0x28] sm:$0xff] %vm487, %v4586
  %4603 = vst.msk [vmem:[#allocation3 + $0x30] sm:$0xff] %vm487, %v4587
  %4604 = vst.msk [vmem:[#allocation3 + $0x38] sm:$0xff] %vm487, %v4588
  %4605 = vst.msk [vmem:[#allocation3 + $0x40] sm:$0xff] %vm487, %v4589
  %4606 = vst.msk [vmem:[#allocation3 + $0x48] sm:$0xff] %vm487, %v4590
  %4607 = vst.msk [vmem:[#allocation3 + $0x50] sm:$0xff] %vm487, %v4591
  %4608 = vst.msk [vmem:[#allocation3 + $0x58] sm:$0xff] %vm487, %v4592
  %4609 = vst.msk [vmem:[#allocation3 + $0x60] sm:$0xff] %vm487, %v4593
  %4610 = vst.msk [vmem:[#allocation3 + $0x68] sm:$0xff] %vm487, %v4594
  %4611 = vst.msk [vmem:[#allocation3 + $0x70] sm:$0xff] %vm487, %v4595
  %4612 = vst.msk [vmem:[#allocation3 + $0x78] sm:$0xff] %vm487, %v4596
  %s4613 = smul.u32 4, 32
  %s4614 = smul.u32 %s4613, 1
  %s4615 = sshll.u32 %s4614, 4
  %4616 = dma.done [#allocation7], %s4615
  %s4617 = smul.u32 4, 16
  %s4618 = smul.u32 %s4617, 1
  %s4619 = sshll.u32 %s4618, 4
  %4620 = dma.done %s100, %s4619
  %v4621 = vld [vmem:[#allocation3] sm:$0xff]
  %v4622 = vld [vmem:[#allocation3 + $0x68] sm:$0xff]
  %v4623 = vld [vmem:[#allocation3 + $0x1] sm:$0xff]
  %v4624 = vld [vmem:[#allocation3 + $0x69] sm:$0xff]
  %v4625 = vld [vmem:[#allocation3 + $0xa] sm:$0xff]
  %v4626 = vld [vmem:[#allocation3 + $0x72] sm:$0xff]
  %v4627 = vld [vmem:[#allocation3 + $0xb] sm:$0xff]
  %v4628 = vld [vmem:[#allocation3 + $0x73] sm:$0xff]
  %4631 = vrot.lane.b32.xlu0 %v4623, 64
  %v4632 = vpop.permute.xlu0 %4631
  %4633 = vrot.lane.b32.xlu0 %v4624, 64
  %v4634 = vpop.permute.xlu0 %4633
  %4639 = vrot.lane.b32.xlu0 %v4627, 64
  %v4640 = vpop.permute.xlu0 %4639
  %4641 = vrot.lane.b32.xlu0 %v4628, 64
  %v4642 = vpop.permute.xlu0 %4641
  %v4645 = vsel %vm487, %v4621, %v4632
  %v4646 = vsel %vm487, %v4622, %v4634
  %v4647 = vsel %vm487, %v4625, %v4640
  %v4648 = vsel %vm487, %v4626, %v4642
  %v4649 = vld [vmem:[#allocation5] sm:$0xff]
  %v4650 = vld [vmem:[#allocation5 + $0x8] sm:$0xff]
  %v4651 = vld [vmem:[#allocation5 + $0x10] sm:$0xff]
  %v4652 = vld [vmem:[#allocation5 + $0x18] sm:$0xff]
  %v4653 = vld [vmem:[#allocation5 + $0x20] sm:$0xff]
  %v4654 = vld [vmem:[#allocation5 + $0x28] sm:$0xff]
  %v4655 = vld [vmem:[#allocation5 + $0x30] sm:$0xff]
  %v4656 = vld [vmem:[#allocation5 + $0x38] sm:$0xff]
  %v4657 = vld [vmem:[#allocation5 + $0x40] sm:$0xff]
  %v4658 = vld [vmem:[#allocation5 + $0x48] sm:$0xff]
  %v4659 = vld [vmem:[#allocation5 + $0x50] sm:$0xff]
  %v4660 = vld [vmem:[#allocation5 + $0x58] sm:$0xff]
  %v4661 = vld [vmem:[#allocation5 + $0x60] sm:$0xff]
  %v4662 = vld [vmem:[#allocation5 + $0x68] sm:$0xff]
  %v4663 = vld [vmem:[#allocation5 + $0x70] sm:$0xff]
  %v4664 = vld [vmem:[#allocation5 + $0x78] sm:$0xff]
  %v4665 = vunpack.c.l.bf16 %v4649
  %v4666 = vunpack.c.h.bf16 %v4649
  %v4667 = vunpack.c.l.bf16 %v4650
  %v4668 = vunpack.c.h.bf16 %v4650
  %v4669 = vunpack.c.l.bf16 %v4651
  %v4670 = vunpack.c.h.bf16 %v4651
  %v4671 = vunpack.c.l.bf16 %v4652
  %v4672 = vunpack.c.h.bf16 %v4652
  %v4673 = vunpack.c.l.bf16 %v4653
  %v4674 = vunpack.c.h.bf16 %v4653
  %v4675 = vunpack.c.l.bf16 %v4654
  %v4676 = vunpack.c.h.bf16 %v4654
  %v4677 = vunpack.c.l.bf16 %v4655
  %v4678 = vunpack.c.h.bf16 %v4655
  %v4679 = vunpack.c.l.bf16 %v4656
  %v4680 = vunpack.c.h.bf16 %v4656
  %v4681 = vunpack.c.l.bf16 %v4657
  %v4682 = vunpack.c.h.bf16 %v4657
  %v4683 = vunpack.c.l.bf16 %v4658
  %v4684 = vunpack.c.h.bf16 %v4658
  %v4685 = vunpack.c.l.bf16 %v4659
  %v4686 = vunpack.c.h.bf16 %v4659
  %v4687 = vunpack.c.l.bf16 %v4660
  %v4688 = vunpack.c.h.bf16 %v4660
  %v4689 = vunpack.c.l.bf16 %v4661
  %v4690 = vunpack.c.h.bf16 %v4661
  %v4691 = vunpack.c.l.bf16 %v4662
  %v4692 = vunpack.c.h.bf16 %v4662
  %v4693 = vunpack.c.l.bf16 %v4663
  %v4694 = vunpack.c.h.bf16 %v4663
  %v4695 = vunpack.c.l.bf16 %v4664
  %v4696 = vunpack.c.h.bf16 %v4664
  %v4697 = vld [vmem:[%s5] sm:$0x1]
  %v4699 = vlaneseq
  %v4700 = vshrl.u32 %v4699, 7
  %v4701 = vsub.s32 0, %v4700
  %v4702 = vrot.slane %v4697, %v4701
  %4704 = vmatprep.subr.mxu0 0.0
  %4705 = vmatpush1.msra.mxu0 %v4665
  %4706 = vmatprep.subr.mxu0 0.0
  %4707 = vmatpush1.msra.mxu0 %v4666
  %4708 = vmatprep.subr.mxu0 0.0
  %4709 = vmatpush1.msra.mxu0 %v4667
  %4710 = vmatprep.subr.mxu0 0.0
  %4711 = vmatpush1.msra.mxu0 %v4668
  %4712 = vmatprep.subr.mxu0 0.0
  %4713 = vmatpush1.msra.mxu0 %v4669
  %4714 = vmatprep.subr.mxu0 0.0
  %4715 = vmatpush1.msra.mxu0 %v4670
  %4716 = vmatprep.subr.mxu0 0.0
  %4717 = vmatpush1.msra.mxu0 %v4671
  %4718 = vmatprep.subr.mxu0 0.0
  %4719 = vmatpush1.msra.mxu0 %v4672
  %4720 = vmatprep.subr.mxu0 0.0
  %4721 = vmatpush1.msra.mxu0 %v4673
  %4722 = vmatprep.subr.mxu0 0.0
  %4723 = vmatpush1.msra.mxu0 %v4674
  %4724 = vmatprep.subr.mxu0 0.0
  %4725 = vmatpush1.msra.mxu0 %v4675
  %4726 = vmatprep.subr.mxu0 0.0
  %4727 = vmatpush1.msra.mxu0 %v4676
  %4728 = vmatprep.subr.mxu0 0.0
  %4729 = vmatpush1.msra.mxu0 %v4677
  %4730 = vmatprep.subr.mxu0 0.0
  %4731 = vmatpush1.msra.mxu0 %v4678
  %4732 = vmatprep.subr.mxu0 0.0
  %4733 = vmatpush1.msra.mxu0 %v4679
  %4734 = vmatprep.subr.mxu0 0.0
  %4735 = vmatpush1.msra.mxu0 %v4680
  %4736 = vmatprep.subr.mxu0 0.0
  %4737 = vmatpush1.msra.mxu0 %v4681
  %4738 = vmatprep.subr.mxu0 0.0
  %4739 = vmatpush1.msra.mxu0 %v4682
  %4740 = vmatprep.subr.mxu0 0.0
  %4741 = vmatpush1.msra.mxu0 %v4683
  %4742 = vmatprep.subr.mxu0 0.0
  %4743 = vmatpush1.msra.mxu0 %v4684
  %4744 = vmatprep.subr.mxu0 0.0
  %4745 = vmatpush1.msra.mxu0 %v4685
  %4746 = vmatprep.subr.mxu0 0.0
  %4747 = vmatpush1.msra.mxu0 %v4686
  %4748 = vmatprep.subr.mxu0 0.0
  %4749 = vmatpush1.msra.mxu0 %v4687
  %4750 = vmatprep.subr.mxu0 0.0
  %4751 = vmatpush1.msra.mxu0 %v4688
  %4752 = vmatprep.subr.mxu0 0.0
  %4753 = vmatpush1.msra.mxu0 %v4689
  %4754 = vmatprep.subr.mxu0 0.0
  %4755 = vmatpush1.msra.mxu0 %v4690
  %4756 = vmatprep.subr.mxu0 0.0
  %4757 = vmatpush1.msra.mxu0 %v4691
  %4758 = vmatprep.subr.mxu0 0.0
  %4759 = vmatpush1.msra.mxu0 %v4692
  %4760 = vmatprep.subr.mxu0 0.0
  %4761 = vmatpush1.msra.mxu0 %v4693
  %4762 = vmatprep.subr.mxu0 0.0
  %4763 = vmatpush1.msra.mxu0 %v4694
  %4764 = vmatprep.subr.mxu0 0.0
  %4765 = vmatpush1.msra.mxu0 %v4695
  %4766 = vmatprep.subr.mxu0 0.0
  %4767 = vmatpush1.msra.mxu0 %v4696
  %4768 = vmatprep.mubr.f32.mxu0 %v4647
  %4769 = vmatmul.mubr.f32.gmra.mrb[0].mxu0 %v4645
  %v4770 = vpop.f32.mrb[0].mxu0
  %v4771 = vadd.f32 %v4702, %v4770
  %v4772 = vpop.f32.mrb[0].mxu0
  %4773 = vmatprep.mubr.f32.mxu0 %v4648
  %4774 = vmatmul.mubr.f32.gmra.mrb[0].mxu0 %v4646
  %v4775 = vpop.f32.mrb[0].mxu0
  %v4776 = vadd.f32 %v4702, %v4775
  %v4777 = vpop.f32.mrb[0].mxu0
  %4778 = vdwg.mxu0
  %v4779 = vmax.f32 %v4771, 0.0
  %v4780 = vmax.f32 %v4776, 0.0
  %v4781 = vld [vmem:[#allocation6] sm:$0xff]
  %v4782 = vld [vmem:[#allocation6 + $0x8] sm:$0xff]
  %v4783 = vld [vmem:[#allocation6 + $0x10] sm:$0xff]
  %v4784 = vld [vmem:[#allocation6 + $0x18] sm:$0xff]
  %v4785 = vld [vmem:[#allocation6 + $0x20] sm:$0xff]
  %v4786 = vld [vmem:[#allocation6 + $0x28] sm:$0xff]
  %v4787 = vld [vmem:[#allocation6 + $0x30] sm:$0xff]
  %v4788 = vld [vmem:[#allocation6 + $0x38] sm:$0xff]
  %v4789 = vunpack.c.l.bf16 %v4781
  %v4790 = vunpack.c.h.bf16 %v4781
  %v4791 = vunpack.c.l.bf16 %v4782
  %v4792 = vunpack.c.h.bf16 %v4782
  %v4793 = vunpack.c.l.bf16 %v4783
  %v4794 = vunpack.c.h.bf16 %v4783
  %v4795 = vunpack.c.l.bf16 %v4784
  %v4796 = vunpack.c.h.bf16 %v4784
  %v4797 = vunpack.c.l.bf16 %v4785
  %v4798 = vunpack.c.h.bf16 %v4785
  %v4799 = vunpack.c.l.bf16 %v4786
  %v4800 = vunpack.c.h.bf16 %v4786
  %v4801 = vunpack.c.l.bf16 %v4787
  %v4802 = vunpack.c.h.bf16 %v4787
  %v4803 = vunpack.c.l.bf16 %v4788
  %v4804 = vunpack.c.h.bf16 %v4788
  %v4805 = vld [vmem:[%s6] sm:$0x1]
  %v4807 = vlaneseq
  %v4808 = vshrl.u32 %v4807, 7
  %v4809 = vsub.s32 0, %v4808
  %v4810 = vrot.slane %v4805, %v4809
  %4812 = vmatprep.subr.mxu0 0.0
  %4813 = vmatpush1.msra.mxu0 %v4789
  %4814 = vmatprep.subr.mxu0 0.0
  %4815 = vmatpush1.msra.mxu0 %v4790
  %4816 = vmatprep.subr.mxu0 0.0
  %4817 = vmatpush1.msra.mxu0 %v4791
  %4818 = vmatprep.subr.mxu0 0.0
  %4819 = vmatpush1.msra.mxu0 %v4792
  %4820 = vmatprep.subr.mxu0 0.0
  %4821 = vmatpush1.msra.mxu0 %v4793
  %4822 = vmatprep.subr.mxu0 0.0
  %4823 = vmatpush1.msra.mxu0 %v4794
  %4824 = vmatprep.subr.mxu0 0.0
  %4825 = vmatpush1.msra.mxu0 %v4795
  %4826 = vmatprep.subr.mxu0 0.0
  %4827 = vmatpush1.msra.mxu0 %v4796
  %4828 = vmatprep.subr.mxu0 0.0
  %4829 = vmatpush1.msra.mxu0 %v4797
  %4830 = vmatprep.subr.mxu0 0.0
  %4831 = vmatpush1.msra.mxu0 %v4798
  %4832 = vmatprep.subr.mxu0 0.0
  %4833 = vmatpush1.msra.mxu0 %v4799
  %4834 = vmatprep.subr.mxu0 0.0
  %4835 = vmatpush1.msra.mxu0 %v4800
  %4836 = vmatprep.subr.mxu0 0.0
  %4837 = vmatpush1.msra.mxu0 %v4801
  %4838 = vmatprep.subr.mxu0 0.0
  %4839 = vmatpush1.msra.mxu0 %v4802
  %4840 = vmatprep.subr.mxu0 0.0
  %4841 = vmatpush1.msra.mxu0 %v4803
  %4842 = vmatprep.subr.mxu0 0.0
  %4843 = vmatpush1.msra.mxu0 %v4804
  %4844 = vmatprep.subr.mxu0 0.0
  %4845 = vmatpush1.msra.mxu0 0.0
  %4846 = vmatprep.subr.mxu0 0.0
  %4847 = vmatpush1.msra.mxu0 0.0
  %4848 = vmatprep.subr.mxu0 0.0
  %4849 = vmatpush1.msra.mxu0 0.0
  %4850 = vmatprep.subr.mxu0 0.0
  %4851 = vmatpush1.msra.mxu0 0.0
  %4852 = vmatprep.subr.mxu0 0.0
  %4853 = vmatpush1.msra.mxu0 0.0
  %4854 = vmatprep.subr.mxu0 0.0
  %4855 = vmatpush1.msra.mxu0 0.0
  %4856 = vmatprep.subr.mxu0 0.0
  %4857 = vmatpush1.msra.mxu0 0.0
  %4858 = vmatprep.subr.mxu0 0.0
  %4859 = vmatpush1.msra.mxu0 0.0
  %4860 = vmatprep.subr.mxu0 0.0
  %4861 = vmatpush1.msra.mxu0 0.0
  %4862 = vmatprep.subr.mxu0 0.0
  %4863 = vmatpush1.msra.mxu0 0.0
  %4864 = vmatprep.subr.mxu0 0.0
  %4865 = vmatpush1.msra.mxu0 0.0
  %4866 = vmatprep.subr.mxu0 0.0
  %4867 = vmatpush1.msra.mxu0 0.0
  %4868 = vmatprep.subr.mxu0 0.0
  %4869 = vmatpush1.msra.mxu0 0.0
  %4870 = vmatprep.subr.mxu0 0.0
  %4871 = vmatpush1.msra.mxu0 0.0
  %4872 = vmatprep.subr.mxu0 0.0
  %4873 = vmatpush1.msra.mxu0 0.0
  %4874 = vmatprep.subr.mxu0 0.0
  %4875 = vmatpush1.msra.mxu0 0.0
  %4876 = vmatprep.mubr.f32.mxu0 0.0
  %4877 = vmatmul.mubr.f32.gmra.mrb[0].mxu0 %v4779
  %v4878 = vpop.f32.mrb[0].mxu0
  %v4879 = vadd.f32 %v4810, %v4878
  %v4880 = vpop.f32.mrb[0].mxu0
  %4881 = vmatprep.mubr.f32.mxu0 0.0
  %4882 = vmatmul.mubr.f32.gmra.mrb[0].mxu0 %v4780
  %v4883 = vpop.f32.mrb[0].mxu0
  %v4884 = vadd.f32 %v4810, %v4883
  %v4885 = vpop.f32.mrb[0].mxu0
  %4886 = vdwg.mxu0
  %v4887 = vtanh.pop %v4879
  %v4888 = vtanh.pop %v4884
  %4889 = vst [vmem:[%s9] sm:$0xff] %v4887
  %4890 = vst [vmem:[%s9 + $0x8] sm:$0xff] %v4888
  // Predicated region
  $region98: #{lenet_forward.1} parent=0 // pred_check
    _
  $region99: #{lenet_forward.1} parent=0 // pred_check_branch
    %4892 = sbr.rel (0) target = $region101
  $region100: #{lenet_forward.1} parent=0 // pred_region
    _
  $region101: #{lenet_forward.1} parent=0 // pred_fallthru
    _
  // Predicated region
  $region102: #{lenet_forward.1} parent=0 // pred_check
    _
  $region103: #{lenet_forward.1} parent=0 // pred_check_branch
    %4894 = sbr.rel (0) target = $region105
  $region104: #{lenet_forward.1} parent=0 // pred_region
    _
  $region105: #{lenet_forward.1} parent=0 // pred_fallthru
    _
  %4895 = vsyncmov [#allocation7]
  %s4896 = vpop.sfrf %4895
  %p4897 = scmp.eq.s32.totalorder %s4896, 0
  %p4898 = pneg %p4897
  %4900 = shalt.err (%p4898)
  %s4901 = scalar_lea.sflag [#allocation7], 1
  %4902 = vsyncmov %s4901
  %s4903 = vpop.sfrf %4902
  %p4904 = scmp.eq.s32.totalorder %s4903, 0
  %p4905 = pneg %p4904
  %4907 = shalt.err (%p4905)

</llo_original>
